<compile_context>
chip_gen: v7x
topology: tpu7x:2x2x1
jax: 0.10.0
libtpu: 0.0.40
codegen_flags: <defaults>
</compile_context>

<pallas_src>
import math

import numpy as np
import jax
import jax.numpy as jnp
from jax.experimental import pallas as pl
from jax.experimental.pallas import tpu as pltpu


def _res_conv_block_kernel(x_ref, wb1_ref, wbr1_ref, wbr2_ref, fold_ref,
                           pvec_ref, alpha_ref, out_ref, px_ref, pa_ref):
    N, Ci, H, W = x_ref.shape
    KH = 3
    NH = N * H
    WCo = out_ref.shape[-1]
    Co = WCo // W

    def conv3x3(pieces, w_ref, bias_l):
        # pieces: lane-concatenated row-wise im2col of the padded activation.
        # w_ref:  (K, W*Co) bf16 banded weight (see _banded_conv_weight).
        k = w_ref.shape[0]
        r = jnp.concatenate(pieces, axis=-1).reshape(NH, k)
        y = jnp.dot(r.astype(jnp.bfloat16), w_ref[...],
                    preferred_element_type=jnp.float32)          # (NH, W*Co)
        return y + bias_l

    def batchnorm(x2d, gamma_l, beta_l):
        # Training-mode BatchNorm2d (biased batch stats over N*H*W, eps=1e-5).
        s = jnp.sum(x2d, axis=0, keepdims=True)                  # (1, WCo)
        s2 = jnp.sum(x2d * x2d, axis=0, keepdims=True)           # (1, WCo)
        # Fold the W lane groups into per-channel stats and broadcast them
        # back to every lane with one tiny matmul (fold matrix is pre-scaled
        # by 1/(N*H*W)).  HIGHEST here is negligible work (2x128x128) and
        # keeps the statistics in f32.
        folded = jnp.dot(jnp.concatenate([s, s2], axis=0), fold_ref[...],
                         preferred_element_type=jnp.float32,
                         precision=jax.lax.Precision.HIGHEST)    # (2, WCo)
        mean_l = folded[0:1, :]
        var_l = folded[1:2, :] - mean_l * mean_l
        scale = jax.lax.rsqrt(var_l + 1e-5) * gamma_l
        shift = beta_l - mean_l * scale
        return x2d * scale + shift

    def prelu(v, a):
        return jnp.where(v >= 0.0, v, a * v)

    # Zero both padded scratch buffers once (this is what makes the 1-pixel
    # border zero; interiors are fully overwritten below).
    px_ref[...] = jnp.zeros_like(px_ref)
    pa_ref[...] = jnp.zeros_like(pa_ref)

    # In-kernel zero padding of the NCHW input (no wrapper transpose / pad).
    px_ref[:, :, 1:1 + H, 1:1 + W] = x_ref[...]

    # residual = self.conv(x): channel-plane row-wise im2col -> one matmul.
    r1 = [px_ref[:, ci, dy:dy + H, :] for ci in range(Ci) for dy in range(KH)]
    residual = conv3x3(r1, wb1_ref, pvec_ref[0:1, :])            # (NH, WCo)

    # self.resconv: conv -> BN -> PReLU -> conv -> BN (lane-dense layout).
    pa_ref[:, 1:1 + H, Co:Co + WCo] = residual.reshape(N, H, WCo)
    r2 = [pa_ref[:, dy:dy + H, :] for dy in range(KH)]
    t = conv3x3(r2, wbr1_ref, pvec_ref[1:2, :])
    t = prelu(batchnorm(t, pvec_ref[2:3, :], pvec_ref[3:4, :]), alpha_ref[0, 0])

    pa_ref[:, 1:1 + H, Co:Co + WCo] = t.reshape(N, H, WCo)
    r3 = [pa_ref[:, dy:dy + H, :] for dy in range(KH)]
    t = conv3x3(r3, wbr2_ref, pvec_ref[4:5, :])
    t = batchnorm(t, pvec_ref[5:6, :], pvec_ref[6:7, :])

    # x = resconv(temp) + residual; x = self.relu(x)   (lane-dense store)
    out_ref[...] = prelu(t + residual, alpha_ref[0, 1])


def _banded_conv_weight(w_hwio, w_out, row_order):
    """Banded matrix turning a 3x3 same-pad conv into one matmul over rows.

    Rows index the lane-concatenated padded activation of one output row:
      row_order='dwc': rows ordered (dy, w1, cin)  -> lane-dense NHWC rows
      row_order='cdw': rows ordered (cin, dy, w1)  -> NCHW channel planes
    Columns are (w, cout), i.e. the lane-dense output layout.
    """
    kh, kw, cin, cout = w_hwio.shape
    wp = w_out + kw - 1
    dx = np.arange(wp)[:, None] - np.arange(w_out)[None, :]          # (wp, w)
    valid = jnp.asarray((dx >= 0) & (dx < kw))
    dx_c = np.clip(dx, 0, kw - 1)
    g = w_hwio[:, dx_c, :, :]                            # (kh, wp, w, cin, cout)
    g = jnp.where(valid[None, :, :, None, None], g, 0.0)
    t = jnp.transpose(g, (0, 1, 3, 2, 4))                # (kh, wp, cin, w, cout)
    if row_order == 'cdw':
        t = jnp.transpose(t, (2, 0, 1, 3, 4))            # (cin, kh, wp, w, cout)
    return t.reshape(-1, w_out * cout).astype(jnp.bfloat16)


def _vmem_limit_bytes():
    # Per-generation scoped-VMEM budget (v5e/v6e: 128 MiB, v7x: 64 MiB).
    try:
        cap = pltpu.get_tpu_info().vmem_capacity_bytes
        return int(min(cap * 3 // 4, 100 * 1024 * 1024))
    except Exception:
        return 48 * 1024 * 1024      # conservative: fits every generation


def res_conv_block(x_nchw, p):
    """x_nchw: (N, Cin, H, W) float32 -> (N, Cout, H, W) float32."""
    N, Ci, H, W = x_nchw.shape
    Co = p['w1'].shape[-1]
    Hp, Wp = H + 2, W + 2
    WCo = W * Co

    # Banded conv weights (one per conv), bf16 operands for the MXU.
    wb1 = _banded_conv_weight(p['w1'], W, 'cdw')      # (Ci*3*Wp, W*Co)
    wbr1 = _banded_conv_weight(p['wr1'], W, 'dwc')    # (3*Wp*Co, W*Co)
    wbr2 = _banded_conv_weight(p['wr2'], W, 'dwc')    # (3*Wp*Co, W*Co)

    # BN fold matrix: fold[i, j] = 1/(N*H*W) iff lanes i and j carry the same
    # channel; (k, WCo) @ fold = per-channel means broadcast back to lanes.
    lane_ch = np.arange(WCo) % Co
    fold = jnp.asarray(
        (lane_ch[:, None] == lane_ch[None, :]).astype(np.float32)
        / float(N * H * W))

    # Per-channel params packed as lane vectors:
    # rows = b1, br1, g1, be1, br2, g2, be2.
    def lane_vec(v):
        return jnp.tile(v.astype(jnp.float32), W)
    pvec = jnp.stack(
        [lane_vec(p['b1']), lane_vec(p['br1']), lane_vec(p['g1']),
         lane_vec(p['be1']), lane_vec(p['br2']), lane_vec(p['g2']),
         lane_vec(p['be2'])], axis=0)                              # (7, W*Co)
    alphas = jnp.stack([jnp.asarray(p['a1'], jnp.float32),
                        jnp.asarray(p['a2'], jnp.float32)]).reshape(1, 2)

    vmem = pl.BlockSpec(memory_space=pltpu.MemorySpace.VMEM)
    smem = pl.BlockSpec(memory_space=pltpu.MemorySpace.SMEM)

    out2d = pl.pallas_call(
        _res_conv_block_kernel,
        out_shape=jax.ShapeDtypeStruct((N * H, WCo), jnp.float32),
        in_specs=[vmem] * 6 + [smem],
        out_specs=vmem,
        scratch_shapes=[
            # zero-padded input, NCHW channel planes
            pltpu.VMEM((N, Ci, Hp, Wp), jnp.float32),
            # zero-padded intermediates, lane-dense rows (Wp*Co lanes)
            pltpu.VMEM((N, Hp, Wp * Co), jnp.float32),
        ],
        compiler_params=pltpu.CompilerParams(
            vmem_limit_bytes=_vmem_limit_bytes()),
    )(x_nchw.astype(jnp.float32), wb1, wbr1, wbr2, fold, pvec, alphas)

    # TODO(synk): in an NHWC end-to-end pipeline the (N*H, W*Co) slab is
    # directly consumable and this transpose pass disappears.
    return jnp.transpose(out2d.reshape(N, H, W, Co), (0, 3, 1, 2))


def init_params(key, inplane, outplane):
    ks = jax.random.split(key, 12)

    def conv_w(k, ci, co):
        return jax.random.normal(k, (3, 3, ci, co), jnp.float32) / math.sqrt(9.0 * ci)

    return dict(
        w1=conv_w(ks[0], inplane, outplane),
        b1=0.05 * jax.random.normal(ks[1], (outplane,), jnp.float32),
        wr1=conv_w(ks[2], outplane, outplane),
        br1=0.05 * jax.random.normal(ks[3], (outplane,), jnp.float32),
        g1=1.0 + 0.1 * jax.random.normal(ks[4], (outplane,), jnp.float32),
        be1=0.1 * jax.random.normal(ks[5], (outplane,), jnp.float32),
        wr2=conv_w(ks[6], outplane, outplane),
        br2=0.05 * jax.random.normal(ks[7], (outplane,), jnp.float32),
        g2=1.0 + 0.1 * jax.random.normal(ks[8], (outplane,), jnp.float32),
        be2=0.1 * jax.random.normal(ks[9], (outplane,), jnp.float32),
        a1=0.25,   # PReLU init (PyTorch default)
        a2=0.25,
    )


def reference(x_nchw, p):
    """Pure-JAX reference with identical semantics (f32 HIGHEST convs)."""
    x = jnp.transpose(x_nchw, (0, 2, 3, 1)).astype(jnp.float32)

    def conv(v, w, b):
        y = jax.lax.conv_general_dilated(
            v, w, (1, 1), ((1, 1), (1, 1)),
            dimension_numbers=('NHWC', 'HWIO', 'NHWC'),
            precision=jax.lax.Precision.HIGHEST)
        return y + b.reshape(1, 1, 1, -1)

    def bn(v, g, b):
        m = jnp.mean(v, axis=(0, 1, 2), keepdims=True)
        var = jnp.mean((v - m) ** 2, axis=(0, 1, 2), keepdims=True)
        return (v - m) * jax.lax.rsqrt(var + 1e-5) * g.reshape(1, 1, 1, -1) \
            + b.reshape(1, 1, 1, -1)

    def prelu(v, a):
        return jnp.where(v >= 0, v, a * v)

    residual = conv(x, p['w1'], p['b1'])
    t = conv(residual, p['wr1'], p['br1'])
    t = prelu(bn(t, p['g1'], p['be1']), p['a1'])
    t = bn(conv(t, p['wr2'], p['br2']), p['g2'], p['be2'])
    y = prelu(t + residual, p['a2'])
    return jnp.transpose(y, (0, 3, 1, 2))


if __name__ == "__main__":
    key = jax.random.PRNGKey(0)
    k_x, k_p = jax.random.split(key)

    N, Ci, Co, H, W = 2, 4, 8, 16, 16
    x = jax.random.normal(k_x, (N, Ci, H, W), jnp.float32)
    params = init_params(k_p, Ci, Co)

    out = jax.block_until_ready(jax.jit(res_conv_block)(x, params))
    ref = jax.block_until_ready(reference(x, params))

    # Tolerance accounts for the bf16 conv-matmul operands (single MXU pass,
    # f32 accumulation) vs the f32 HIGHEST-precision reference.
    np.testing.assert_allclose(np.asarray(out), np.asarray(ref),
                               rtol=2e-2, atol=3e-2)

    print("KERNEL_OK")
</pallas_src>

<mosaic_0001>
module attributes {stable_mosaic.version = 11 : i64} {
  func.func @_res_conv_block_kernel(%arg0: memref<2x4x16x16xf32, #tpu.memory_space<vmem>>, %arg1: memref<216x128xbf16, #tpu.memory_space<vmem>>, %arg2: memref<432x128xbf16, #tpu.memory_space<vmem>>, %arg3: memref<432x128xbf16, #tpu.memory_space<vmem>>, %arg4: memref<128x128xf32, #tpu.memory_space<vmem>>, %arg5: memref<7x128xf32, #tpu.memory_space<vmem>>, %arg6: memref<1x2xf32, #tpu.memory_space<smem>>, %arg7: memref<32x128xf32, #tpu.memory_space<vmem>>, %arg8: memref<2x4x18x18xf32, #tpu.memory_space<vmem>>, %arg9: memref<2x18x144xf32, #tpu.memory_space<vmem>>) attributes {dimension_semantics = [], scalar_prefetch = 0 : i64, scratch_operands = 2 : i64, tpu.core_type = #tpu.core_type<tc>} {
    %cst = arith.constant 0.000000e+00 : f32
    %0 = vector.broadcast %cst : f32 to vector<2x4x18x18xf32>
    %c0 = arith.constant 0 : index
    %c0_0 = arith.constant 0 : index
    %c0_1 = arith.constant 0 : index
    %c0_2 = arith.constant 0 : index
    %1 = vector.load %arg8[%c0, %c0_0, %c0_1, %c0_2] : memref<2x4x18x18xf32, #tpu.memory_space<vmem>>, vector<2x4x18x18xf32>
    tpu.vector_store %arg8[%c0, %c0_0, %c0_1, %c0_2], %0 {strides = array<i32>} : memref<2x4x18x18xf32, #tpu.memory_space<vmem>>, vector<2x4x18x18xf32>,
    %cst_3 = arith.constant 0.000000e+00 : f32
    %2 = vector.broadcast %cst_3 : f32 to vector<2x18x144xf32>
    %c0_4 = arith.constant 0 : index
    %c0_5 = arith.constant 0 : index
    %c0_6 = arith.constant 0 : index
    %3 = vector.load %arg9[%c0_4, %c0_5, %c0_6] : memref<2x18x144xf32, #tpu.memory_space<vmem>>, vector<2x18x144xf32>
    tpu.vector_store %arg9[%c0_4, %c0_5, %c0_6], %2 {strides = array<i32>} : memref<2x18x144xf32, #tpu.memory_space<vmem>>, vector<2x18x144xf32>,
    %c0_7 = arith.constant 0 : index
    %c0_8 = arith.constant 0 : index
    %c0_9 = arith.constant 0 : index
    %c0_10 = arith.constant 0 : index
    %4 = vector.load %arg0[%c0_7, %c0_8, %c0_9, %c0_10] : memref<2x4x16x16xf32, #tpu.memory_space<vmem>>, vector<2x4x16x16xf32>
    %c0_11 = arith.constant 0 : index
    %c0_12 = arith.constant 0 : index
    %c1 = arith.constant 1 : index
    %c1_13 = arith.constant 1 : index
    %5 = vector.load %arg8[%c0_11, %c0_12, %c1, %c1_13] : memref<2x4x18x18xf32, #tpu.memory_space<vmem>>, vector<2x4x16x16xf32>
    tpu.vector_store %arg8[%c0_11, %c0_12, %c1, %c1_13], %4 {strides = array<i32>} : memref<2x4x18x18xf32, #tpu.memory_space<vmem>>, vector<2x4x16x16xf32>,
    %c0_14 = arith.constant 0 : index
    %c0_15 = arith.constant 0 : index
    %c0_16 = arith.constant 0 : index
    %c0_17 = arith.constant 0 : index
    %6 = vector.load %arg8[%c0_14, %c0_15, %c0_16, %c0_17] : memref<2x4x18x18xf32, #tpu.memory_space<vmem>>, vector<2x1x16x18xf32>
    %7 = vector.shape_cast %6 : vector<2x1x16x18xf32> to vector<2x16x18xf32>
    %c0_18 = arith.constant 0 : index
    %c0_19 = arith.constant 0 : index
    %c1_20 = arith.constant 1 : index
    %c0_21 = arith.constant 0 : index
    %8 = vector.load %arg8[%c0_18, %c0_19, %c1_20, %c0_21] : memref<2x4x18x18xf32, #tpu.memory_space<vmem>>, vector<2x1x16x18xf32>
    %9 = vector.shape_cast %8 : vector<2x1x16x18xf32> to vector<2x16x18xf32>
    %c0_22 = arith.constant 0 : index
    %c0_23 = arith.constant 0 : index
    %c2 = arith.constant 2 : index
    %c0_24 = arith.constant 0 : index
    %10 = vector.load %arg8[%c0_22, %c0_23, %c2, %c0_24] : memref<2x4x18x18xf32, #tpu.memory_space<vmem>>, vector<2x1x16x18xf32>
    %11 = vector.shape_cast %10 : vector<2x1x16x18xf32> to vector<2x16x18xf32>
    %c0_25 = arith.constant 0 : index
    %c1_26 = arith.constant 1 : index
    %c0_27 = arith.constant 0 : index
    %c0_28 = arith.constant 0 : index
    %12 = vector.load %arg8[%c0_25, %c1_26, %c0_27, %c0_28] : memref<2x4x18x18xf32, #tpu.memory_space<vmem>>, vector<2x1x16x18xf32>
    %13 = vector.shape_cast %12 : vector<2x1x16x18xf32> to vector<2x16x18xf32>
    %c0_29 = arith.constant 0 : index
    %c1_30 = arith.constant 1 : index
    %c1_31 = arith.constant 1 : index
    %c0_32 = arith.constant 0 : index
    %14 = vector.load %arg8[%c0_29, %c1_30, %c1_31, %c0_32] : memref<2x4x18x18xf32, #tpu.memory_space<vmem>>, vector<2x1x16x18xf32>
    %15 = vector.shape_cast %14 : vector<2x1x16x18xf32> to vector<2x16x18xf32>
    %c0_33 = arith.constant 0 : index
    %c1_34 = arith.constant 1 : index
    %c2_35 = arith.constant 2 : index
    %c0_36 = arith.constant 0 : index
    %16 = vector.load %arg8[%c0_33, %c1_34, %c2_35, %c0_36] : memref<2x4x18x18xf32, #tpu.memory_space<vmem>>, vector<2x1x16x18xf32>
    %17 = vector.shape_cast %16 : vector<2x1x16x18xf32> to vector<2x16x18xf32>
    %c0_37 = arith.constant 0 : index
    %c2_38 = arith.constant 2 : index
    %c0_39 = arith.constant 0 : index
    %c0_40 = arith.constant 0 : index
    %18 = vector.load %arg8[%c0_37, %c2_38, %c0_39, %c0_40] : memref<2x4x18x18xf32, #tpu.memory_space<vmem>>, vector<2x1x16x18xf32>
    %19 = vector.shape_cast %18 : vector<2x1x16x18xf32> to vector<2x16x18xf32>
    %c0_41 = arith.constant 0 : index
    %c2_42 = arith.constant 2 : index
    %c1_43 = arith.constant 1 : index
    %c0_44 = arith.constant 0 : index
    %20 = vector.load %arg8[%c0_41, %c2_42, %c1_43, %c0_44] : memref<2x4x18x18xf32, #tpu.memory_space<vmem>>, vector<2x1x16x18xf32>
    %21 = vector.shape_cast %20 : vector<2x1x16x18xf32> to vector<2x16x18xf32>
    %c0_45 = arith.constant 0 : index
    %c2_46 = arith.constant 2 : index
    %c2_47 = arith.constant 2 : index
    %c0_48 = arith.constant 0 : index
    %22 = vector.load %arg8[%c0_45, %c2_46, %c2_47, %c0_48] : memref<2x4x18x18xf32, #tpu.memory_space<vmem>>, vector<2x1x16x18xf32>
    %23 = vector.shape_cast %22 : vector<2x1x16x18xf32> to vector<2x16x18xf32>
    %c0_49 = arith.constant 0 : index
    %c3 = arith.constant 3 : index
    %c0_50 = arith.constant 0 : index
    %c0_51 = arith.constant 0 : index
    %24 = vector.load %arg8[%c0_49, %c3, %c0_50, %c0_51] : memref<2x4x18x18xf32, #tpu.memory_space<vmem>>, vector<2x1x16x18xf32>
    %25 = vector.shape_cast %24 : vector<2x1x16x18xf32> to vector<2x16x18xf32>
    %c0_52 = arith.constant 0 : index
    %c3_53 = arith.constant 3 : index
    %c1_54 = arith.constant 1 : index
    %c0_55 = arith.constant 0 : index
    %26 = vector.load %arg8[%c0_52, %c3_53, %c1_54, %c0_55] : memref<2x4x18x18xf32, #tpu.memory_space<vmem>>, vector<2x1x16x18xf32>
    %27 = vector.shape_cast %26 : vector<2x1x16x18xf32> to vector<2x16x18xf32>
    %c0_56 = arith.constant 0 : index
    %c3_57 = arith.constant 3 : index
    %c2_58 = arith.constant 2 : index
    %c0_59 = arith.constant 0 : index
    %28 = vector.load %arg8[%c0_56, %c3_57, %c2_58, %c0_59] : memref<2x4x18x18xf32, #tpu.memory_space<vmem>>, vector<2x1x16x18xf32>
    %29 = vector.shape_cast %28 : vector<2x1x16x18xf32> to vector<2x16x18xf32>
    %c0_60 = arith.constant 0 : index
    %c0_61 = arith.constant 0 : index
    %30 = vector.load %arg5[%c0_60, %c0_61] : memref<7x128xf32, #tpu.memory_space<vmem>>, vector<1x128xf32>
    %31 = tpu.concatenate %7, %9, %11, %13, %15, %17, %19, %21, %23, %25, %27, %29 in 2 : vector<2x16x18xf32>, vector<2x16x18xf32>, vector<2x16x18xf32>, vector<2x16x18xf32>, vector<2x16x18xf32>, vector<2x16x18xf32>, vector<2x16x18xf32>, vector<2x16x18xf32>, vector<2x16x18xf32>, vector<2x16x18xf32>, vector<2x16x18xf32>, vector<2x16x18xf32> -> vector<2x16x216xf32>
    %32 = vector.shape_cast %31 : vector<2x16x216xf32> to vector<32x216xf32>
    %33 = arith.truncf %32 : vector<32x216xf32> to vector<32x216xbf16>
    %c0_62 = arith.constant 0 : index
    %c0_63 = arith.constant 0 : index
    %34 = vector.load %arg1[%c0_62, %c0_63] : memref<216x128xbf16, #tpu.memory_space<vmem>>, vector<216x128xbf16>
    %cst_64 = arith.constant dense<0.000000e+00> : vector<32x128xf32>
    %35 = tpu.matmul %33, %34, %cst_64 {dimension_numbers = #tpu.dot_dimension_numbers<[1], [0], [0], [1], [0, 0, 1, 1], [], []>} : vector<32x216xbf16>, vector<216x128xbf16>, vector<32x128xf32> -> vector<32x128xf32>
    %36 = vector.broadcast %30 : vector<1x128xf32> to vector<32x128xf32>
    %37 = arith.addf %35, %36 : vector<32x128xf32>
    %38 = vector.shape_cast %37 : vector<32x128xf32> to vector<2x16x128xf32>
    %c0_65 = arith.constant 0 : index
    %c1_66 = arith.constant 1 : index
    %c8 = arith.constant 8 : index
    %39 = vector.load %arg9[%c0_65, %c1_66, %c8] : memref<2x18x144xf32, #tpu.memory_space<vmem>>, vector<2x16x128xf32>
    tpu.vector_store %arg9[%c0_65, %c1_66, %c8], %38 {strides = array<i32>} : memref<2x18x144xf32, #tpu.memory_space<vmem>>, vector<2x16x128xf32>,
    %c0_67 = arith.constant 0 : index
    %c0_68 = arith.constant 0 : index
    %c0_69 = arith.constant 0 : index
    %40 = vector.load %arg9[%c0_67, %c0_68, %c0_69] : memref<2x18x144xf32, #tpu.memory_space<vmem>>, vector<2x16x144xf32>
    %c0_70 = arith.constant 0 : index
    %c1_71 = arith.constant 1 : index
    %c0_72 = arith.constant 0 : index
    %41 = vector.load %arg9[%c0_70, %c1_71, %c0_72] : memref<2x18x144xf32, #tpu.memory_space<vmem>>, vector<2x16x144xf32>
    %c0_73 = arith.constant 0 : index
    %c2_74 = arith.constant 2 : index
    %c0_75 = arith.constant 0 : index
    %42 = vector.load %arg9[%c0_73, %c2_74, %c0_75] : memref<2x18x144xf32, #tpu.memory_space<vmem>>, vector<2x16x144xf32>
    %c1_76 = arith.constant 1 : index
    %c0_77 = arith.constant 0 : index
    %43 = vector.load %arg5[%c1_76, %c0_77] : memref<7x128xf32, #tpu.memory_space<vmem>>, vector<1x128xf32>
    %44 = tpu.concatenate %40, %41, %42 in 2 : vector<2x16x144xf32>, vector<2x16x144xf32>, vector<2x16x144xf32> -> vector<2x16x432xf32>
    %45 = vector.shape_cast %44 : vector<2x16x432xf32> to vector<32x432xf32>
    %46 = arith.truncf %45 : vector<32x432xf32> to vector<32x432xbf16>
    %c0_78 = arith.constant 0 : index
    %c0_79 = arith.constant 0 : index
    %47 = vector.load %arg2[%c0_78, %c0_79] : memref<432x128xbf16, #tpu.memory_space<vmem>>, vector<432x128xbf16>
    %cst_80 = arith.constant dense<0.000000e+00> : vector<32x128xf32>
    %48 = tpu.matmul %46, %47, %cst_80 {dimension_numbers = #tpu.dot_dimension_numbers<[1], [0], [0], [1], [0, 0, 1, 1], [], []>} : vector<32x432xbf16>, vector<432x128xbf16>, vector<32x128xf32> -> vector<32x128xf32>
    %49 = vector.broadcast %43 : vector<1x128xf32> to vector<32x128xf32>
    %50 = arith.addf %48, %49 : vector<32x128xf32>
    %c2_81 = arith.constant 2 : index
    %c0_82 = arith.constant 0 : index
    %51 = vector.load %arg5[%c2_81, %c0_82] : memref<7x128xf32, #tpu.memory_space<vmem>>, vector<1x128xf32>
    %c3_83 = arith.constant 3 : index
    %c0_84 = arith.constant 0 : index
    %52 = vector.load %arg5[%c3_83, %c0_84] : memref<7x128xf32, #tpu.memory_space<vmem>>, vector<1x128xf32>
    %cst_85 = arith.constant dense<0.000000e+00> : vector<128xf32>
    %53 = vector.multi_reduction <add>, %50, %cst_85 [0] : vector<32x128xf32> to vector<128xf32>
    %54 = vector.shape_cast %53 : vector<128xf32> to vector<1x128xf32>
    %55 = arith.mulf %50, %50 : vector<32x128xf32>
    %cst_86 = arith.constant dense<0.000000e+00> : vector<128xf32>
    %56 = vector.multi_reduction <add>, %55, %cst_86 [0] : vector<32x128xf32> to vector<128xf32>
    %57 = vector.shape_cast %56 : vector<128xf32> to vector<1x128xf32>
    %58 = tpu.concatenate %54, %57 in 0 : vector<1x128xf32>, vector<1x128xf32> -> vector<2x128xf32>
    %c0_87 = arith.constant 0 : index
    %c0_88 = arith.constant 0 : index
    %59 = vector.load %arg4[%c0_87, %c0_88] : memref<128x128xf32, #tpu.memory_space<vmem>>, vector<128x128xf32>
    %cst_89 = arith.constant dense<0.000000e+00> : vector<2x128xf32>
    %60 = tpu.matmul %58, %59, %cst_89 {dimension_numbers = #tpu.dot_dimension_numbers<[1], [0], [0], [1], [0, 0, 1, 1], [], []>, precision = #tpu.contract_precision<fp32>} : vector<2x128xf32>, vector<128x128xf32>, vector<2x128xf32> -> vector<2x128xf32>
    %61 = vector.extract_strided_slice %60 {offsets = [0, 0], sizes = [1, 128], strides = [1, 1]} : vector<2x128xf32> to vector<1x128xf32>
    %62 = vector.extract_strided_slice %60 {offsets = [1, 0], sizes = [1, 128], strides = [1, 1]} : vector<2x128xf32> to vector<1x128xf32>
    %63 = arith.mulf %61, %61 : vector<1x128xf32>
    %64 = arith.subf %62, %63 : vector<1x128xf32>
    %cst_90 = arith.constant 9.99999974E-6 : f32
    %65 = vector.broadcast %cst_90 : f32 to vector<1x128xf32>
    %66 = arith.addf %64, %65 : vector<1x128xf32>
    %67 = math.rsqrt %66 : vector<1x128xf32>
    %68 = arith.mulf %67, %51 : vector<1x128xf32>
    %69 = arith.mulf %61, %68 : vector<1x128xf32>
    %70 = arith.subf %52, %69 : vector<1x128xf32>
    %71 = vector.broadcast %68 : vector<1x128xf32> to vector<32x128xf32>
    %72 = arith.mulf %50, %71 : vector<32x128xf32>
    %73 = vector.broadcast %70 : vector<1x128xf32> to vector<32x128xf32>
    %74 = arith.addf %72, %73 : vector<32x128xf32>
    %c0_91 = arith.constant 0 : index
    %c0_92 = arith.constant 0 : index
    %75 = memref.load %arg6[%c0_91, %c0_92] : memref<1x2xf32, #tpu.memory_space<smem>>
    %cst_93 = arith.constant 0.000000e+00 : f32
    %76 = vector.broadcast %cst_93 : f32 to vector<32x128xf32>
    %77 = arith.cmpf oge, %74, %76 : vector<32x128xf32>
    %78 = vector.broadcast %75 : f32 to vector<32x128xf32>
    %79 = arith.mulf %78, %74 : vector<32x128xf32>
    %80 = arith.select %77, %74, %79 : vector<32x128xi1>, vector<32x128xf32>
    %81 = vector.shape_cast %80 : vector<32x128xf32> to vector<2x16x128xf32>
    %c0_94 = arith.constant 0 : index
    %c1_95 = arith.constant 1 : index
    %c8_96 = arith.constant 8 : index
    %82 = vector.load %arg9[%c0_94, %c1_95, %c8_96] : memref<2x18x144xf32, #tpu.memory_space<vmem>>, vector<2x16x128xf32>
    tpu.vector_store %arg9[%c0_94, %c1_95, %c8_96], %81 {strides = array<i32>} : memref<2x18x144xf32, #tpu.memory_space<vmem>>, vector<2x16x128xf32>,
    %c0_97 = arith.constant 0 : index
    %c0_98 = arith.constant 0 : index
    %c0_99 = arith.constant 0 : index
    %83 = vector.load %arg9[%c0_97, %c0_98, %c0_99] : memref<2x18x144xf32, #tpu.memory_space<vmem>>, vector<2x16x144xf32>
    %c0_100 = arith.constant 0 : index
    %c1_101 = arith.constant 1 : index
    %c0_102 = arith.constant 0 : index
    %84 = vector.load %arg9[%c0_100, %c1_101, %c0_102] : memref<2x18x144xf32, #tpu.memory_space<vmem>>, vector<2x16x144xf32>
    %c0_103 = arith.constant 0 : index
    %c2_104 = arith.constant 2 : index
    %c0_105 = arith.constant 0 : index
    %85 = vector.load %arg9[%c0_103, %c2_104, %c0_105] : memref<2x18x144xf32, #tpu.memory_space<vmem>>, vector<2x16x144xf32>
    %c4 = arith.constant 4 : index
    %c0_106 = arith.constant 0 : index
    %86 = vector.load %arg5[%c4, %c0_106] : memref<7x128xf32, #tpu.memory_space<vmem>>, vector<1x128xf32>
    %87 = tpu.concatenate %83, %84, %85 in 2 : vector<2x16x144xf32>, vector<2x16x144xf32>, vector<2x16x144xf32> -> vector<2x16x432xf32>
    %88 = vector.shape_cast %87 : vector<2x16x432xf32> to vector<32x432xf32>
    %89 = arith.truncf %88 : vector<32x432xf32> to vector<32x432xbf16>
    %c0_107 = arith.constant 0 : index
    %c0_108 = arith.constant 0 : index
    %90 = vector.load %arg3[%c0_107, %c0_108] : memref<432x128xbf16, #tpu.memory_space<vmem>>, vector<432x128xbf16>
    %cst_109 = arith.constant dense<0.000000e+00> : vector<32x128xf32>
    %91 = tpu.matmul %89, %90, %cst_109 {dimension_numbers = #tpu.dot_dimension_numbers<[1], [0], [0], [1], [0, 0, 1, 1], [], []>} : vector<32x432xbf16>, vector<432x128xbf16>, vector<32x128xf32> -> vector<32x128xf32>
    %92 = vector.broadcast %86 : vector<1x128xf32> to vector<32x128xf32>
    %93 = arith.addf %91, %92 : vector<32x128xf32>
    %c5 = arith.constant 5 : index
    %c0_110 = arith.constant 0 : index
    %94 = vector.load %arg5[%c5, %c0_110] : memref<7x128xf32, #tpu.memory_space<vmem>>, vector<1x128xf32>
    %c6 = arith.constant 6 : index
    %c0_111 = arith.constant 0 : index
    %95 = vector.load %arg5[%c6, %c0_111] : memref<7x128xf32, #tpu.memory_space<vmem>>, vector<1x128xf32>
    %cst_112 = arith.constant dense<0.000000e+00> : vector<128xf32>
    %96 = vector.multi_reduction <add>, %93, %cst_112 [0] : vector<32x128xf32> to vector<128xf32>
    %97 = vector.shape_cast %96 : vector<128xf32> to vector<1x128xf32>
    %98 = arith.mulf %93, %93 : vector<32x128xf32>
    %cst_113 = arith.constant dense<0.000000e+00> : vector<128xf32>
    %99 = vector.multi_reduction <add>, %98, %cst_113 [0] : vector<32x128xf32> to vector<128xf32>
    %100 = vector.shape_cast %99 : vector<128xf32> to vector<1x128xf32>
    %101 = tpu.concatenate %97, %100 in 0 : vector<1x128xf32>, vector<1x128xf32> -> vector<2x128xf32>
    %c0_114 = arith.constant 0 : index
    %c0_115 = arith.constant 0 : index
    %102 = vector.load %arg4[%c0_114, %c0_115] : memref<128x128xf32, #tpu.memory_space<vmem>>, vector<128x128xf32>
    %cst_116 = arith.constant dense<0.000000e+00> : vector<2x128xf32>
    %103 = tpu.matmul %101, %102, %cst_116 {dimension_numbers = #tpu.dot_dimension_numbers<[1], [0], [0], [1], [0, 0, 1, 1], [], []>, precision = #tpu.contract_precision<fp32>} : vector<2x128xf32>, vector<128x128xf32>, vector<2x128xf32> -> vector<2x128xf32>
    %104 = vector.extract_strided_slice %103 {offsets = [0, 0], sizes = [1, 128], strides = [1, 1]} : vector<2x128xf32> to vector<1x128xf32>
    %105 = vector.extract_strided_slice %103 {offsets = [1, 0], sizes = [1, 128], strides = [1, 1]} : vector<2x128xf32> to vector<1x128xf32>
    %106 = arith.mulf %104, %104 : vector<1x128xf32>
    %107 = arith.subf %105, %106 : vector<1x128xf32>
    %cst_117 = arith.constant 9.99999974E-6 : f32
    %108 = vector.broadcast %cst_117 : f32 to vector<1x128xf32>
    %109 = arith.addf %107, %108 : vector<1x128xf32>
    %110 = math.rsqrt %109 : vector<1x128xf32>
    %111 = arith.mulf %110, %94 : vector<1x128xf32>
    %112 = arith.mulf %104, %111 : vector<1x128xf32>
    %113 = arith.subf %95, %112 : vector<1x128xf32>
    %114 = vector.broadcast %111 : vector<1x128xf32> to vector<32x128xf32>
    %115 = arith.mulf %93, %114 : vector<32x128xf32>
    %116 = vector.broadcast %113 : vector<1x128xf32> to vector<32x128xf32>
    %117 = arith.addf %115, %116 : vector<32x128xf32>
    %118 = arith.addf %117, %37 : vector<32x128xf32>
    %c0_118 = arith.constant 0 : index
    %c1_119 = arith.constant 1 : index
    %119 = memref.load %arg6[%c0_118, %c1_119] : memref<1x2xf32, #tpu.memory_space<smem>>
    %cst_120 = arith.constant 0.000000e+00 : f32
    %120 = vector.broadcast %cst_120 : f32 to vector<32x128xf32>
    %121 = arith.cmpf oge, %118, %120 : vector<32x128xf32>
    %122 = vector.broadcast %119 : f32 to vector<32x128xf32>
    %123 = arith.mulf %122, %118 : vector<32x128xf32>
    %124 = arith.select %121, %118, %123 : vector<32x128xi1>, vector<32x128xf32>
    %c0_121 = arith.constant 0 : index
    %c0_122 = arith.constant 0 : index
    %125 = vector.load %arg7[%c0_121, %c0_122] : memref<32x128xf32, #tpu.memory_space<vmem>>, vector<32x128xf32>
    tpu.vector_store %arg7[%c0_121, %c0_122], %124 {strides = array<i32>} : memref<32x128xf32, #tpu.memory_space<vmem>>, vector<32x128xf32>,
    return
  }
}

</mosaic_0001>

<llo_original>
// kernel: tile.38
$region0: #{tile.38}
  #allocation0 [shape = 's32[1]{0}', space=sflag, size = 0x4, scoped, tag = 'scoped memory for tile.38']
  %s0 = inlined_call_operand.vmem [shape: f32[8], index: 0, kind: input, shape index: {}]
  %s1 = inlined_call_operand.vmem [shape: f32[16,8], index: 1, kind: output, shape index: {}]
  // Predicated region
  $region2: #{tile.38} parent=0 // pred_check
    _
  $region3: #{tile.38} parent=0 // pred_check_branch
    %3 = sbr.rel (0) target = $region5
  $region4: #{tile.38} parent=0 // pred_region
    _
  $region5: #{tile.38} parent=0 // pred_fallthru
    _
  %v4 = vld [vmem:[%s0] ss:$0 sm:$0xff]
  %5 = vst [vmem:[%s1] sm:$0xff] %v4
  %s6 = scalar_lea.vmem %s1, 8
  %7 = vst [vmem:[%s6] sm:$0xff] %v4

// kernel: tile.63
$region0: #{tile.63}
  %s0 = inlined_call_operand.vmem [shape: f32[16,8], index: 0, kind: input, shape index: {}]
  %s1 = inlined_call_operand.vmem [shape: f32[1,128], index: 1, kind: output, shape index: {}]
  $region1: #{tile.63} parent=0
    #allocation0 [shape = 'u8[4096]{0}', space=vmem, size = 0x1000, scoped, tag = 'scoped mem for output reshape']
    %v2 = vld [vmem:[%s0] sm:$0x1]
    %vm3 = vcmask 64512
    %4 = vst.msk [vmem:[#allocation0] sm:$0x1] %vm3, %v2
    %s5 = scalar_lea.vmem %s0, 15
    %v6 = vld [vmem:[%s5] sm:$0x1]
    %7 = vrot.lane.b32.xlu0 %v6, 120
    %v8 = vpop.permute.xlu0 %7
    %vm9 = vcmask 1048512
    %10 = vst.msk [vmem:[#allocation0] sm:$0x1] %vm9, %v8
    %s11 = scalar_lea.vmem %s0, 14
    %v12 = vld [vmem:[%s11] sm:$0x1]
    %13 = vrot.lane.b32.xlu0 %v12, 112
    %v14 = vpop.permute.xlu0 %13
    %vm15 = vcmask 982912
    %16 = vst.msk [vmem:[#allocation0] sm:$0x1] %vm15, %v14
    %s17 = scalar_lea.vmem %s0, 13
    %v18 = vld [vmem:[%s17] sm:$0x1]
    %19 = vrot.lane.b32.xlu0 %v18, 104
    %v20 = vpop.permute.xlu0 %19
    %vm21 = vcmask 917312
    %22 = vst.msk [vmem:[#allocation0] sm:$0x1] %vm21, %v20
    %s23 = scalar_lea.vmem %s0, 12
    %v24 = vld [vmem:[%s23] sm:$0x1]
    %25 = vrot.lane.b32.xlu0 %v24, 96
    %v26 = vpop.permute.xlu0 %25
    %vm27 = vcmask 851712
    %28 = vst.msk [vmem:[#allocation0] sm:$0x1] %vm27, %v26
    %s29 = scalar_lea.vmem %s0, 11
    %v30 = vld [vmem:[%s29] sm:$0x1]
    %31 = vrot.lane.b32.xlu0 %v30, 88
    %v32 = vpop.permute.xlu0 %31
    %vm33 = vcmask 786112
    %34 = vst.msk [vmem:[#allocation0] sm:$0x1] %vm33, %v32
    %s35 = scalar_lea.vmem %s0, 10
    %v36 = vld [vmem:[%s35] sm:$0x1]
    %37 = vrot.lane.b32.xlu0 %v36, 80
    %v38 = vpop.permute.xlu0 %37
    %vm39 = vcmask 720512
    %40 = vst.msk [vmem:[#allocation0] sm:$0x1] %vm39, %v38
    %s41 = scalar_lea.vmem %s0, 9
    %v42 = vld [vmem:[%s41] sm:$0x1]
    %43 = vrot.lane.b32.xlu0 %v42, 72
    %v44 = vpop.permute.xlu0 %43
    %vm45 = vcmask 654912
    %46 = vst.msk [vmem:[#allocation0] sm:$0x1] %vm45, %v44
    %s47 = scalar_lea.vmem %s0, 8
    %v48 = vld [vmem:[%s47] sm:$0x1]
    %49 = vrot.lane.b32.xlu0 %v48, 64
    %v50 = vpop.permute.xlu0 %49
    %vm51 = vcmask 589312
    %52 = vst.msk [vmem:[#allocation0] sm:$0x1] %vm51, %v50
    %s53 = scalar_lea.vmem %s0, 7
    %v54 = vld [vmem:[%s53] sm:$0x1]
    %55 = vrot.lane.b32.xlu0 %v54, 56
    %v56 = vpop.permute.xlu0 %55
    %vm57 = vcmask 523712
    %58 = vst.msk [vmem:[#allocation0] sm:$0x1] %vm57, %v56
    %s59 = scalar_lea.vmem %s0, 6
    %v60 = vld [vmem:[%s59] sm:$0x1]
    %61 = vrot.lane.b32.xlu0 %v60, 48
    %v62 = vpop.permute.xlu0 %61
    %vm63 = vcmask 458112
    %64 = vst.msk [vmem:[#allocation0] sm:$0x1] %vm63, %v62
    %s65 = scalar_lea.vmem %s0, 5
    %v66 = vld [vmem:[%s65] sm:$0x1]
    %67 = vrot.lane.b32.xlu0 %v66, 40
    %v68 = vpop.permute.xlu0 %67
    %vm69 = vcmask 392512
    %70 = vst.msk [vmem:[#allocation0] sm:$0x1] %vm69, %v68
    %s71 = scalar_lea.vmem %s0, 4
    %v72 = vld [vmem:[%s71] sm:$0x1]
    %73 = vrot.lane.b32.xlu0 %v72, 32
    %v74 = vpop.permute.xlu0 %73
    %vm75 = vcmask 326912
    %76 = vst.msk [vmem:[#allocation0] sm:$0x1] %vm75, %v74
    %s77 = scalar_lea.vmem %s0, 3
    %v78 = vld [vmem:[%s77] sm:$0x1]
    %79 = vrot.lane.b32.xlu0 %v78, 24
    %v80 = vpop.permute.xlu0 %79
    %vm81 = vcmask 261312
    %82 = vst.msk [vmem:[#allocation0] sm:$0x1] %vm81, %v80
    %s83 = scalar_lea.vmem %s0, 2
    %v84 = vld [vmem:[%s83] sm:$0x1]
    %85 = vrot.lane.b32.xlu0 %v84, 16
    %v86 = vpop.permute.xlu0 %85
    %vm87 = vcmask 195712
    %88 = vst.msk [vmem:[#allocation0] sm:$0x1] %vm87, %v86
    %s89 = scalar_lea.vmem %s0, 1
    %v90 = vld [vmem:[%s89] sm:$0x1]
    %91 = vrot.lane.b32.xlu0 %v90, 8
    %v92 = vpop.permute.xlu0 %91
    %vm93 = vcmask 130112
    %94 = vst.msk [vmem:[#allocation0] sm:$0x1] %vm93, %v92
    %s96 = sshllo.u32 0, 1
    %v98 = vld [vmem:[#allocation0] sm:%s96]
    %s99 = sshllo.u32 0, 1
    %100 = vst [vmem:[%s1] sm:%s99] %v98

// kernel: res_conv_block.1
$region0: #{res_conv_block.1}
  #allocation0 [shape = 'u32[]', space=smem, size = 0x4, offset = 0x4, fixed_abs, tag = 'smem constant byte address 0x4 - core index']
  #allocation1 [shape = 'u32[144,128]{1,0:T(1,128)}', space=vmem, size = 0x12000, scoped, tag = 'internal scratch']
  #allocation2 [shape = 'f32[2,4,18,18]{3,2,1,0:T(8,128)}', space=vmem, size = 0x18000, scoped, tag = 'scratch operand']
  #allocation3 [shape = 'f32[2,18,144]{2,1,0:T(8,128)}', space=vmem, size = 0xc000, scoped, tag = 'scratch operand']
  %s0 = inlined_call_operand.vmem [shape: f32[2,4,16,16], index: 0, kind: input, shape index: {}]
  %s1 = inlined_call_operand.vmem [shape: bf16[216,128], index: 1, kind: input, shape index: {}]
  %s2 = inlined_call_operand.vmem [shape: bf16[432,128], index: 2, kind: input, shape index: {}]
  %s3 = inlined_call_operand.vmem [shape: bf16[432,128], index: 3, kind: input, shape index: {}]
  %s4 = inlined_call_operand.vmem [shape: f32[128,128], index: 4, kind: input, shape index: {}]
  %s5 = inlined_call_operand.vmem [shape: f32[7,128], index: 5, kind: input, shape index: {}]
  %s6 = inlined_call_operand.vmem [shape: f32[1,2], index: 6, kind: input, shape index: {}]
  %s7 = inlined_call_operand.vmem [shape: f32[32,128], index: 7, kind: output, shape index: {}]
  %s8 = sld [smem:[#allocation0]]
  $region42: #{res_conv_block.1} parent=0
    _
  %s10 = ssub.s32 1, %s8
  %s11 = scalar_select 0, %s10, %s8
  $region1: #{res_conv_block.1} parent=0
    #allocation4 [shape = 'u8[512]{0}', space=smem, size = 0x200, scoped, tag = 'input window, operand 6, single buffered']
    #allocation5 [shape = 's32[1]{0}', space=sflag, size = 0x4, scoped, tag = 'scoped memory for res_conv_block.1']
    %12 = vsyncpa [#allocation5], 0
    // Predicated region
    $region2: #{res_conv_block.1} parent=1 // pred_check
      _
    $region3: #{res_conv_block.1} parent=1 // pred_check_branch
      %14 = sbr.rel (0) target = $region5
    $region4: #{res_conv_block.1} parent=1 // pred_region
      _
    $region5: #{res_conv_block.1} parent=1 // pred_fallthru
      _
    // Predicated region
    $region6: #{res_conv_block.1} parent=1 // pred_check
      _
    $region7: #{res_conv_block.1} parent=1 // pred_check_branch
      %16 = sbr.rel (0) target = $region9
    $region8: #{res_conv_block.1} parent=1 // pred_region
      _
    $region9: #{res_conv_block.1} parent=1 // pred_fallthru
      _
    // Predicated region
    $region10: #{res_conv_block.1} parent=1 // pred_check
      _
    $region11: #{res_conv_block.1} parent=1 // pred_check_branch
      %18 = sbr.rel (0) target = $region13
    $region12: #{res_conv_block.1} parent=1 // pred_region
      _
    $region13: #{res_conv_block.1} parent=1 // pred_fallthru
      _
    // Predicated region
    $region14: #{res_conv_block.1} parent=1 // pred_check
      _
    $region15: #{res_conv_block.1} parent=1 // pred_check_branch
      %20 = sbr.rel (0) target = $region17
    $region16: #{res_conv_block.1} parent=1 // pred_region
      _
    $region17: #{res_conv_block.1} parent=1 // pred_fallthru
      _
    // Predicated region
    $region18: #{res_conv_block.1} parent=1 // pred_check
      _
    $region19: #{res_conv_block.1} parent=1 // pred_check_branch
      %22 = sbr.rel (0) target = $region21
    $region20: #{res_conv_block.1} parent=1 // pred_region
      _
    $region21: #{res_conv_block.1} parent=1 // pred_fallthru
      _
    // Predicated region
    $region22: #{res_conv_block.1} parent=1 // pred_check
      _
    $region23: #{res_conv_block.1} parent=1 // pred_check_branch
      %24 = sbr.rel (0) target = $region25
    $region24: #{res_conv_block.1} parent=1 // pred_region
      _
    $region25: #{res_conv_block.1} parent=1 // pred_fallthru
      _
    // Predicated region
    $region26: #{res_conv_block.1} parent=1 // pred_check
      _
    $region27: #{res_conv_block.1} parent=1 // pred_check_branch
      %26 = sbr.rel (0) target = $region29
    $region28: #{res_conv_block.1} parent=1 // pred_region
      %s28 = ssub.s32 16, 16
      %29 = vsyncadd [#allocation5], %s28
      %s31 = sshll.u32 %s6, 4
      %s32 = int_to_ptr.vmem [resolvable:$true] %s31
      %34 = dma.vmem_to_smem %s32, 16, [#allocation4], [#allocation5]
    $region29: #{res_conv_block.1} parent=1 // pred_fallthru
      _
    // Predicated region
    $region30: #{res_conv_block.1} parent=1 // pred_check
      _
    $region31: #{res_conv_block.1} parent=1 // pred_check_branch
      %36 = sbr.rel (0) target = $region33
    $region32: #{res_conv_block.1} parent=1 // pred_region
      %37 = dma.done [#allocation5], 16
    $region33: #{res_conv_block.1} parent=1 // pred_fallthru
      _
    %38 = sfence
    %vm40 = vcmask 146432
    %41 = vst.msk [vmem:[#allocation2] sm:$0xff] %vm40, 0.0
    %42 = vst.msk [vmem:[#allocation2 + $0x8] sm:$0xff] %vm40, 0.0
    %vm43 = vcmask 140288
    %44 = vst.msk [vmem:[#allocation2 + $0x10] sm:$0x3] %vm43, 0.0
    %45 = vst.msk [vmem:[#allocation2 + $0x18] sm:$0xff] %vm40, 0.0
    %46 = vst.msk [vmem:[#allocation2 + $0x20] sm:$0xff] %vm40, 0.0
    %47 = vst.msk [vmem:[#allocation2 + $0x28] sm:$0x3] %vm43, 0.0
    %48 = vst.msk [vmem:[#allocation2 + $0x30] sm:$0xff] %vm40, 0.0
    %49 = vst.msk [vmem:[#allocation2 + $0x38] sm:$0xff] %vm40, 0.0
    %50 = vst.msk [vmem:[#allocation2 + $0x40] sm:$0x3] %vm43, 0.0
    %51 = vst.msk [vmem:[#allocation2 + $0x48] sm:$0xff] %vm40, 0.0
    %52 = vst.msk [vmem:[#allocation2 + $0x50] sm:$0xff] %vm40, 0.0
    %53 = vst.msk [vmem:[#allocation2 + $0x58] sm:$0x3] %vm43, 0.0
    %54 = vst.msk [vmem:[#allocation2 + $0x60] sm:$0xff] %vm40, 0.0
    %55 = vst.msk [vmem:[#allocation2 + $0x68] sm:$0xff] %vm40, 0.0
    %56 = vst.msk [vmem:[#allocation2 + $0x70] sm:$0x3] %vm43, 0.0
    %57 = vst.msk [vmem:[#allocation2 + $0x78] sm:$0xff] %vm40, 0.0
    %58 = vst.msk [vmem:[#allocation2 + $0x80] sm:$0xff] %vm40, 0.0
    %59 = vst.msk [vmem:[#allocation2 + $0x88] sm:$0x3] %vm43, 0.0
    %60 = vst.msk [vmem:[#allocation2 + $0x90] sm:$0xff] %vm40, 0.0
    %61 = vst.msk [vmem:[#allocation2 + $0x98] sm:$0xff] %vm40, 0.0
    %62 = vst.msk [vmem:[#allocation2 + $0xa0] sm:$0x3] %vm43, 0.0
    %63 = vst.msk [vmem:[#allocation2 + $0xa8] sm:$0xff] %vm40, 0.0
    %64 = vst.msk [vmem:[#allocation2 + $0xb0] sm:$0xff] %vm40, 0.0
    %65 = vst.msk [vmem:[#allocation2 + $0xb8] sm:$0x3] %vm43, 0.0
    %66 = vst [vmem:[#allocation3] sm:$0xff] 0.0
    %vm67 = vcmask 130048
    %68 = vst.msk [vmem:[#allocation3 + $0x8] sm:$0xff] %vm67, 0.0
    %69 = vst [vmem:[#allocation3 + $0x10] sm:$0xff] 0.0
    %70 = vst.msk [vmem:[#allocation3 + $0x18] sm:$0xff] %vm67, 0.0
    %71 = vst [vmem:[#allocation3 + $0x20] sm:$0x3] 0.0
    %vm72 = vcmask 123904
    %73 = vst.msk [vmem:[#allocation3 + $0x28] sm:$0x3] %vm72, 0.0
    %74 = vst [vmem:[#allocation3 + $0x30] sm:$0xff] 0.0
    %75 = vst.msk [vmem:[#allocation3 + $0x38] sm:$0xff] %vm67, 0.0
    %76 = vst [vmem:[#allocation3 + $0x40] sm:$0xff] 0.0
    %77 = vst.msk [vmem:[#allocation3 + $0x48] sm:$0xff] %vm67, 0.0
    %78 = vst [vmem:[#allocation3 + $0x50] sm:$0x3] 0.0
    %79 = vst.msk [vmem:[#allocation3 + $0x58] sm:$0x3] %vm72, 0.0
    %v80 = vld [vmem:[%s0] sm:$0xff]
    %v81 = vld [vmem:[%s0 + $0x8] sm:$0xff]
    %v82 = vld [vmem:[%s0 + $0x10] sm:$0xff]
    %v83 = vld [vmem:[%s0 + $0x18] sm:$0xff]
    %v84 = vld [vmem:[%s0 + $0x20] sm:$0xff]
    %v85 = vld [vmem:[%s0 + $0x28] sm:$0xff]
    %v86 = vld [vmem:[%s0 + $0x30] sm:$0xff]
    %v87 = vld [vmem:[%s0 + $0x38] sm:$0xff]
    %v88 = vld [vmem:[%s0 + $0x40] sm:$0xff]
    %v89 = vld [vmem:[%s0 + $0x48] sm:$0xff]
    %v90 = vld [vmem:[%s0 + $0x50] sm:$0xff]
    %v91 = vld [vmem:[%s0 + $0x58] sm:$0xff]
    %v92 = vld [vmem:[%s0 + $0x60] sm:$0xff]
    %v93 = vld [vmem:[%s0 + $0x68] sm:$0xff]
    %v94 = vld [vmem:[%s0 + $0x70] sm:$0xff]
    %v95 = vld [vmem:[%s0 + $0x78] sm:$0xff]
    %112 = vrot.lane.b32.xlu0 %v80, 1
    %v113 = vpop.permute.xlu0 %112
    %114 = vrot.lane.b32.xlu0 %v81, 1
    %v115 = vpop.permute.xlu0 %114
    %116 = vrot.lane.b32.xlu0 %v82, 1
    %v117 = vpop.permute.xlu0 %116
    %118 = vrot.lane.b32.xlu0 %v83, 1
    %v119 = vpop.permute.xlu0 %118
    %120 = vrot.lane.b32.xlu0 %v84, 1
    %v121 = vpop.permute.xlu0 %120
    %122 = vrot.lane.b32.xlu0 %v85, 1
    %v123 = vpop.permute.xlu0 %122
    %124 = vrot.lane.b32.xlu0 %v86, 1
    %v125 = vpop.permute.xlu0 %124
    %126 = vrot.lane.b32.xlu0 %v87, 1
    %v127 = vpop.permute.xlu0 %126
    %128 = vrot.lane.b32.xlu0 %v88, 1
    %v129 = vpop.permute.xlu0 %128
    %130 = vrot.lane.b32.xlu0 %v89, 1
    %v131 = vpop.permute.xlu0 %130
    %132 = vrot.lane.b32.xlu0 %v90, 1
    %v133 = vpop.permute.xlu0 %132
    %134 = vrot.lane.b32.xlu0 %v91, 1
    %v135 = vpop.permute.xlu0 %134
    %136 = vrot.lane.b32.xlu0 %v92, 1
    %v137 = vpop.permute.xlu0 %136
    %138 = vrot.lane.b32.xlu0 %v93, 1
    %v139 = vpop.permute.xlu0 %138
    %140 = vrot.lane.b32.xlu0 %v94, 1
    %v141 = vpop.permute.xlu0 %140
    %142 = vrot.lane.b32.xlu0 %v95, 1
    %v143 = vpop.permute.xlu0 %142
    %vm160 = vcmask 138248
    %161 = vst.msk [vmem:[#allocation2 + $0x1] sm:$0xff] %vm160, %v113
    %162 = vst.msk [vmem:[#allocation2 + $0x9] sm:$0xff] %vm160, %v115
    %163 = vst.msk [vmem:[#allocation2 + $0x19] sm:$0xff] %vm160, %v117
    %164 = vst.msk [vmem:[#allocation2 + $0x21] sm:$0xff] %vm160, %v119
    %165 = vst.msk [vmem:[#allocation2 + $0x31] sm:$0xff] %vm160, %v121
    %166 = vst.msk [vmem:[#allocation2 + $0x39] sm:$0xff] %vm160, %v123
    %167 = vst.msk [vmem:[#allocation2 + $0x49] sm:$0xff] %vm160, %v125
    %168 = vst.msk [vmem:[#allocation2 + $0x51] sm:$0xff] %vm160, %v127
    %169 = vst.msk [vmem:[#allocation2 + $0x61] sm:$0xff] %vm160, %v129
    %170 = vst.msk [vmem:[#allocation2 + $0x69] sm:$0xff] %vm160, %v131
    %171 = vst.msk [vmem:[#allocation2 + $0x79] sm:$0xff] %vm160, %v133
    %172 = vst.msk [vmem:[#allocation2 + $0x81] sm:$0xff] %vm160, %v135
    %173 = vst.msk [vmem:[#allocation2 + $0x91] sm:$0xff] %vm160, %v137
    %174 = vst.msk [vmem:[#allocation2 + $0x99] sm:$0xff] %vm160, %v139
    %175 = vst.msk [vmem:[#allocation2 + $0xa9] sm:$0xff] %vm160, %v141
    %176 = vst.msk [vmem:[#allocation2 + $0xb1] sm:$0xff] %vm160, %v143
    %v177 = vld [vmem:[#allocation2] sm:$0xff]
    %v178 = vld [vmem:[#allocation2 + $0x8] sm:$0xff]
    %v179 = vld [vmem:[#allocation2 + $0x60] sm:$0xff]
    %v180 = vld [vmem:[#allocation2 + $0x68] sm:$0xff]
    %v181 = vld [vmem:[#allocation2 + $0x1] sm:$0xff]
    %v182 = vld [vmem:[#allocation2 + $0x9] sm:$0xff]
    %v183 = vld [vmem:[#allocation2 + $0x61] sm:$0xff]
    %v184 = vld [vmem:[#allocation2 + $0x69] sm:$0xff]
    %v185 = vld [vmem:[#allocation2 + $0x2] sm:$0xff]
    %v186 = vld [vmem:[#allocation2 + $0xa] sm:$0xff]
    %v187 = vld [vmem:[#allocation2 + $0x62] sm:$0xff]
    %v188 = vld [vmem:[#allocation2 + $0x6a] sm:$0xff]
    %s189 = scalar_lea.vmem [#allocation2], 24
    %v190 = vld [vmem:[%s189] sm:$0xff]
    %v191 = vld [vmem:[%s189 + $0x8] sm:$0xff]
    %v192 = vld [vmem:[%s189 + $0x60] sm:$0xff]
    %v193 = vld [vmem:[%s189 + $0x68] sm:$0xff]
    %v194 = vld [vmem:[%s189 + $0x1] sm:$0xff]
    %v195 = vld [vmem:[%s189 + $0x9] sm:$0xff]
    %v196 = vld [vmem:[%s189 + $0x61] sm:$0xff]
    %v197 = vld [vmem:[%s189 + $0x69] sm:$0xff]
    %v198 = vld [vmem:[%s189 + $0x2] sm:$0xff]
    %v199 = vld [vmem:[%s189 + $0xa] sm:$0xff]
    %v200 = vld [vmem:[%s189 + $0x62] sm:$0xff]
    %v201 = vld [vmem:[%s189 + $0x6a] sm:$0xff]
    %s202 = scalar_lea.vmem [#allocation2], 48
    %v203 = vld [vmem:[%s202] sm:$0xff]
    %v204 = vld [vmem:[%s202 + $0x8] sm:$0xff]
    %v205 = vld [vmem:[%s202 + $0x60] sm:$0xff]
    %v206 = vld [vmem:[%s202 + $0x68] sm:$0xff]
    %v207 = vld [vmem:[%s202 + $0x1] sm:$0xff]
    %v208 = vld [vmem:[%s202 + $0x9] sm:$0xff]
    %v209 = vld [vmem:[%s202 + $0x61] sm:$0xff]
    %v210 = vld [vmem:[%s202 + $0x69] sm:$0xff]
    %v211 = vld [vmem:[%s202 + $0x2] sm:$0xff]
    %v212 = vld [vmem:[%s202 + $0xa] sm:$0xff]
    %v213 = vld [vmem:[%s202 + $0x62] sm:$0xff]
    %v214 = vld [vmem:[%s202 + $0x6a] sm:$0xff]
    %s215 = scalar_lea.vmem [#allocation2], 72
    %v216 = vld [vmem:[%s215] sm:$0xff]
    %v217 = vld [vmem:[%s215 + $0x8] sm:$0xff]
    %v218 = vld [vmem:[%s215 + $0x60] sm:$0xff]
    %v219 = vld [vmem:[%s215 + $0x68] sm:$0xff]
    %v220 = vld [vmem:[%s215 + $0x1] sm:$0xff]
    %v221 = vld [vmem:[%s215 + $0x9] sm:$0xff]
    %v222 = vld [vmem:[%s215 + $0x61] sm:$0xff]
    %v223 = vld [vmem:[%s215 + $0x69] sm:$0xff]
    %v224 = vld [vmem:[%s215 + $0x2] sm:$0xff]
    %v225 = vld [vmem:[%s215 + $0xa] sm:$0xff]
    %v226 = vld [vmem:[%s215 + $0x62] sm:$0xff]
    %v227 = vld [vmem:[%s215 + $0x6a] sm:$0xff]
    %v228 = vld [vmem:[%s5] sm:$0x1]
    %233 = vrot.lane.b32.xlu0 %v181, 18
    %v234 = vpop.permute.xlu0 %233
    %235 = vrot.lane.b32.xlu0 %v182, 18
    %v236 = vpop.permute.xlu0 %235
    %237 = vrot.lane.b32.xlu0 %v183, 18
    %v238 = vpop.permute.xlu0 %237
    %239 = vrot.lane.b32.xlu0 %v184, 18
    %v240 = vpop.permute.xlu0 %239
    %249 = vrot.lane.b32.xlu0 %v185, 36
    %v250 = vpop.permute.xlu0 %249
    %251 = vrot.lane.b32.xlu0 %v186, 36
    %v252 = vpop.permute.xlu0 %251
    %253 = vrot.lane.b32.xlu0 %v187, 36
    %v254 = vpop.permute.xlu0 %253
    %255 = vrot.lane.b32.xlu0 %v188, 36
    %v256 = vpop.permute.xlu0 %255
    %265 = vrot.lane.b32.xlu0 %v190, 54
    %v266 = vpop.permute.xlu0 %265
    %267 = vrot.lane.b32.xlu0 %v191, 54
    %v268 = vpop.permute.xlu0 %267
    %269 = vrot.lane.b32.xlu0 %v192, 54
    %v270 = vpop.permute.xlu0 %269
    %271 = vrot.lane.b32.xlu0 %v193, 54
    %v272 = vpop.permute.xlu0 %271
    %281 = vrot.lane.b32.xlu0 %v194, 72
    %v282 = vpop.permute.xlu0 %281
    %283 = vrot.lane.b32.xlu0 %v195, 72
    %v284 = vpop.permute.xlu0 %283
    %285 = vrot.lane.b32.xlu0 %v196, 72
    %v286 = vpop.permute.xlu0 %285
    %287 = vrot.lane.b32.xlu0 %v197, 72
    %v288 = vpop.permute.xlu0 %287
    %297 = vrot.lane.b32.xlu0 %v198, 90
    %v298 = vpop.permute.xlu0 %297
    %299 = vrot.lane.b32.xlu0 %v199, 90
    %v300 = vpop.permute.xlu0 %299
    %301 = vrot.lane.b32.xlu0 %v200, 90
    %v302 = vpop.permute.xlu0 %301
    %303 = vrot.lane.b32.xlu0 %v201, 90
    %v304 = vpop.permute.xlu0 %303
    %313 = vrot.lane.b32.xlu0 %v203, 108
    %v314 = vpop.permute.xlu0 %313
    %315 = vrot.lane.b32.xlu0 %v204, 108
    %v316 = vpop.permute.xlu0 %315
    %317 = vrot.lane.b32.xlu0 %v205, 108
    %v318 = vpop.permute.xlu0 %317
    %319 = vrot.lane.b32.xlu0 %v206, 108
    %v320 = vpop.permute.xlu0 %319
    %329 = vrot.lane.b32.xlu0 %v207, 126
    %v330 = vpop.permute.xlu0 %329
    %331 = vrot.lane.b32.xlu0 %v208, 126
    %v332 = vpop.permute.xlu0 %331
    %333 = vrot.lane.b32.xlu0 %v209, 126
    %v334 = vpop.permute.xlu0 %333
    %335 = vrot.lane.b32.xlu0 %v210, 126
    %v336 = vpop.permute.xlu0 %335
    %345 = vrot.lane.b32.xlu0 %v211, 16
    %v346 = vpop.permute.xlu0 %345
    %347 = vrot.lane.b32.xlu0 %v212, 16
    %v348 = vpop.permute.xlu0 %347
    %349 = vrot.lane.b32.xlu0 %v213, 16
    %v350 = vpop.permute.xlu0 %349
    %351 = vrot.lane.b32.xlu0 %v214, 16
    %v352 = vpop.permute.xlu0 %351
    %361 = vrot.lane.b32.xlu0 %v216, 34
    %v362 = vpop.permute.xlu0 %361
    %363 = vrot.lane.b32.xlu0 %v217, 34
    %v364 = vpop.permute.xlu0 %363
    %365 = vrot.lane.b32.xlu0 %v218, 34
    %v366 = vpop.permute.xlu0 %365
    %367 = vrot.lane.b32.xlu0 %v219, 34
    %v368 = vpop.permute.xlu0 %367
    %377 = vrot.lane.b32.xlu0 %v220, 52
    %v378 = vpop.permute.xlu0 %377
    %379 = vrot.lane.b32.xlu0 %v221, 52
    %v380 = vpop.permute.xlu0 %379
    %381 = vrot.lane.b32.xlu0 %v222, 52
    %v382 = vpop.permute.xlu0 %381
    %383 = vrot.lane.b32.xlu0 %v223, 52
    %v384 = vpop.permute.xlu0 %383
    %393 = vrot.lane.b32.xlu0 %v224, 70
    %v394 = vpop.permute.xlu0 %393
    %395 = vrot.lane.b32.xlu0 %v225, 70
    %v396 = vpop.permute.xlu0 %395
    %397 = vrot.lane.b32.xlu0 %v226, 70
    %v398 = vpop.permute.xlu0 %397
    %399 = vrot.lane.b32.xlu0 %v227, 70
    %v400 = vpop.permute.xlu0 %399
    %v405 = vsel %vm40, %v177, %v234
    %v406 = vsel %vm40, %v178, %v236
    %v407 = vsel %vm40, %v179, %v238
    %v408 = vsel %vm40, %v180, %v240
    %vm409 = vcmask 293888
    %v410 = vsel %vm409, %v405, %v250
    %v411 = vsel %vm409, %v406, %v252
    %v412 = vsel %vm409, %v407, %v254
    %v413 = vsel %vm409, %v408, %v256
    %vm414 = vcmask 441344
    %v415 = vsel %vm414, %v410, %v266
    %v416 = vsel %vm414, %v411, %v268
    %v417 = vsel %vm414, %v412, %v270
    %v418 = vsel %vm414, %v413, %v272
    %vm419 = vcmask 588800
    %v420 = vsel %vm419, %v415, %v282
    %v421 = vsel %vm419, %v416, %v284
    %v422 = vsel %vm419, %v417, %v286
    %v423 = vsel %vm419, %v418, %v288
    %vm424 = vcmask 736256
    %v425 = vsel %vm424, %v420, %v298
    %v426 = vsel %vm424, %v421, %v300
    %v427 = vsel %vm424, %v422, %v302
    %v428 = vsel %vm424, %v423, %v304
    %vm429 = vcmask 883712
    %v430 = vsel %vm429, %v425, %v314
    %v431 = vsel %vm429, %v426, %v316
    %v432 = vsel %vm429, %v427, %v318
    %v433 = vsel %vm429, %v428, %v320
    %vm434 = vcmask 1031168
    %v435 = vsel %vm434, %v430, %v330
    %v436 = vsel %vm434, %v431, %v332
    %v437 = vsel %vm434, %v432, %v334
    %v438 = vsel %vm434, %v433, %v336
    %v439 = vsel %vm67, %v330, %v346
    %v440 = vsel %vm67, %v332, %v348
    %v441 = vsel %vm67, %v334, %v350
    %v442 = vsel %vm67, %v336, %v352
    %vm443 = vcmask 277504
    %v444 = vsel %vm443, %v439, %v362
    %v445 = vsel %vm443, %v440, %v364
    %v446 = vsel %vm443, %v441, %v366
    %v447 = vsel %vm443, %v442, %v368
    %vm448 = vcmask 424960
    %v449 = vsel %vm448, %v444, %v378
    %v450 = vsel %vm448, %v445, %v380
    %v451 = vsel %vm448, %v446, %v382
    %v452 = vsel %vm448, %v447, %v384
    %vm453 = vcmask 572416
    %v454 = vsel %vm453, %v449, %v394
    %v455 = vsel %vm453, %v450, %v396
    %v456 = vsel %vm453, %v451, %v398
    %v457 = vsel %vm453, %v452, %v400
    %v458 = vpack.c.bf16 %v436, %v435
    %v459 = vpack.c.bf16 %v455, %v454
    %v460 = vpack.c.bf16 %v438, %v437
    %v461 = vpack.c.bf16 %v457, %v456
    %v462 = vld [vmem:[%s1] sm:$0xf]
    %v463 = vld [vmem:[%s1 + $0x4] sm:$0xf]
    %v464 = vld [vmem:[%s1 + $0x8] sm:$0xf]
    %v465 = vld [vmem:[%s1 + $0xc] sm:$0xf]
    %v466 = vld [vmem:[%s1 + $0x10] sm:$0xf]
    %v467 = vld [vmem:[%s1 + $0x14] sm:$0xf]
    %v468 = vld [vmem:[%s1 + $0x18] sm:$0xf]
    %v469 = vld [vmem:[%s1 + $0x1c] sm:$0xf]
    %v470 = vld [vmem:[%s1 + $0x20] sm:$0xf]
    %v471 = vld [vmem:[%s1 + $0x24] sm:$0xf]
    %v472 = vld [vmem:[%s1 + $0x28] sm:$0xf]
    %v473 = vld [vmem:[%s1 + $0x2c] sm:$0xf]
    %v474 = vld [vmem:[%s1 + $0x30] sm:$0xf]
    %v475 = vld [vmem:[%s1 + $0x34] sm:$0xf]
    %v476 = vld [vmem:[%s1 + $0x38] sm:$0xf]
    %v477 = vld [vmem:[%s1 + $0x3c] sm:$0xf]
    %v478 = vld [vmem:[%s1 + $0x40] sm:$0xf]
    %v479 = vld [vmem:[%s1 + $0x44] sm:$0xf]
    %v480 = vld [vmem:[%s1 + $0x48] sm:$0xf]
    %v481 = vld [vmem:[%s1 + $0x4c] sm:$0xf]
    %v482 = vld [vmem:[%s1 + $0x50] sm:$0xf]
    %v483 = vld [vmem:[%s1 + $0x54] sm:$0xf]
    %v484 = vld [vmem:[%s1 + $0x58] sm:$0xf]
    %v485 = vld [vmem:[%s1 + $0x5c] sm:$0xf]
    %v486 = vld [vmem:[%s1 + $0x60] sm:$0xf]
    %v487 = vld [vmem:[%s1 + $0x64] sm:$0xf]
    %v488 = vld [vmem:[%s1 + $0x68] sm:$0xf]
    %v489 = vlaneseq
    %v490 = vshrl.u32 %v489, 7
    %v491 = vsub.s32 0, %v490
    %v492 = vrot.slane %v228, %v491
    %v520 = vunpack.c.l.b16 %v462
    %v521 = vunpack.c.l.b16 %v463
    %v522 = vunpack.c.l.b16 %v464
    %v523 = vunpack.c.l.b16 %v465
    %v524 = vunpack.c.l.b16 %v466
    %v525 = vunpack.c.l.b16 %v467
    %v526 = vunpack.c.l.b16 %v468
    %v527 = vunpack.c.l.b16 %v469
    %v528 = vunpack.c.l.b16 %v470
    %v529 = vunpack.c.l.b16 %v471
    %v530 = vunpack.c.l.b16 %v472
    %v531 = vunpack.c.l.b16 %v473
    %v532 = vunpack.c.l.b16 %v474
    %v533 = vunpack.c.l.b16 %v475
    %v534 = vunpack.c.l.b16 %v476
    %v535 = vunpack.c.l.b16 %v477
    %v536 = vunpack.c.l.b16 %v478
    %v537 = vunpack.c.l.b16 %v479
    %v538 = vunpack.c.l.b16 %v480
    %v539 = vunpack.c.l.b16 %v481
    %v540 = vunpack.c.l.b16 %v482
    %v541 = vunpack.c.l.b16 %v483
    %v542 = vunpack.c.l.b16 %v484
    %v543 = vunpack.c.l.b16 %v485
    %v544 = vunpack.c.l.b16 %v486
    %v545 = vunpack.c.l.b16 %v487
    %v546 = vunpack.c.l.b16 %v488
    %v547 = vpack.c.b16 %v521, %v520
    %v548 = vpack.c.b16 %v523, %v522
    %v549 = vpack.c.b16 %v525, %v524
    %v550 = vpack.c.b16 %v527, %v526
    %v551 = vpack.c.b16 %v529, %v528
    %v552 = vpack.c.b16 %v531, %v530
    %v553 = vpack.c.b16 %v533, %v532
    %v554 = vpack.c.b16 %v535, %v534
    %v555 = vpack.c.b16 %v537, %v536
    %v556 = vpack.c.b16 %v539, %v538
    %v557 = vpack.c.b16 %v541, %v540
    %v558 = vpack.c.b16 %v543, %v542
    %v559 = vpack.c.b16 %v545, %v544
    %v560 = vpack.c.b16 %v546, %v546
    %vm574 = vcmask 719872
    %v576 = vsel %vm574, %v459, 0
    %v579 = vsel %vm574, %v461, 0
    %vm581 = vcmask 1043456
    %v583 = vsel %vm581, %v560, 0
    %585 = vmatprep.subr.bf16.mxu0 0
    %586 = vmatpush1.bf16.msra.mxu0 %v547
    %587 = vmatprep.subr.bf16.mxu0 0
    %588 = vmatpush1.bf16.msra.mxu0 %v548
    %589 = vmatprep.subr.bf16.mxu0 0
    %590 = vmatpush1.bf16.msra.mxu0 %v549
    %591 = vmatprep.subr.bf16.mxu0 0
    %592 = vmatpush1.bf16.msra.mxu0 %v550
    %593 = vmatprep.subr.bf16.mxu0 0
    %594 = vmatpush1.bf16.msra.mxu0 %v551
    %595 = vmatprep.subr.bf16.mxu0 0
    %596 = vmatpush1.bf16.msra.mxu0 %v552
    %597 = vmatprep.subr.bf16.mxu0 0
    %598 = vmatpush1.bf16.msra.mxu0 %v553
    %599 = vmatprep.subr.bf16.mxu0 0
    %600 = vmatpush1.bf16.msra.mxu0 %v554
    %601 = vmatprep.subr.bf16.mxu0 0
    %602 = vmatpush1.bf16.msra.mxu0 %v555
    %603 = vmatprep.subr.bf16.mxu0 0
    %604 = vmatpush1.bf16.msra.mxu0 %v556
    %605 = vmatprep.subr.bf16.mxu0 0
    %606 = vmatpush1.bf16.msra.mxu0 %v557
    %607 = vmatprep.subr.bf16.mxu0 0
    %608 = vmatpush1.bf16.msra.mxu0 %v558
    %609 = vmatprep.subr.bf16.mxu0 0
    %610 = vmatpush1.bf16.msra.mxu0 %v559
    %611 = vmatprep.subr.bf16.mxu0 0
    %612 = vmatpush1.bf16.msra.mxu0 %v583
    %613 = vmatprep.subr.bf16.mxu0 0
    %614 = vmatpush1.bf16.msra.mxu0 0
    %615 = vmatprep.subr.bf16.mxu0 0
    %616 = vmatpush1.bf16.msra.mxu0 0
    %617 = vmatprep.mubr.bf16.mxu0 %v576
    %618 = vmatmul.mubr.bf16.gmra.mrb[0].mxu0 %v458
    %v619 = vpop.f32.mrb[0].mxu0
    %v620 = vadd.f32 %v492, %v619
    %v621 = vpop.f32.mrb[0].mxu0
    %v622 = vpop.f32.mrb[0].mxu0
    %v623 = vadd.f32 %v492, %v622
    %v624 = vpop.f32.mrb[0].mxu0
    %625 = vmatprep.mubr.bf16.mxu0 %v579
    %626 = vmatmul.mubr.bf16.gmra.mrb[0].mxu0 %v460
    %v627 = vpop.f32.mrb[0].mxu0
    %v628 = vadd.f32 %v492, %v627
    %v629 = vpop.f32.mrb[0].mxu0
    %v630 = vpop.f32.mrb[0].mxu0
    %v631 = vadd.f32 %v492, %v630
    %v632 = vpop.f32.mrb[0].mxu0
    %633 = vdwg.mxu0
    %vm638 = vcmask 1040384
    %v639 = vrot.slane %v620, 7
    %v640 = vrot.slane %v623, 7
    %v641 = vsel %vm638, %v639, %v640
    %v642 = vrot.slane %v628, 7
    %v643 = vrot.slane %v631, 7
    %v644 = vsel %vm638, %v642, %v643
    %645 = vrot.lane.b32.xlu0 %v639, 8
    %v646 = vpop.permute.xlu0 %645
    %647 = vrot.lane.b32.xlu0 %v641, 8
    %v648 = vpop.permute.xlu0 %647
    %649 = vrot.lane.b32.xlu0 %v640, 8
    %v650 = vpop.permute.xlu0 %649
    %651 = vrot.lane.b32.xlu0 %v642, 8
    %v652 = vpop.permute.xlu0 %651
    %653 = vrot.lane.b32.xlu0 %v644, 8
    %v654 = vpop.permute.xlu0 %653
    %655 = vrot.lane.b32.xlu0 %v643, 8
    %v656 = vpop.permute.xlu0 %655
    %vm663 = vcmask 1047617
    %664 = vst.msk [vmem:[#allocation3] sm:$0xfe] %vm663, %v646
    %vm665 = vcmask 64513
    %666 = vst.msk [vmem:[#allocation3 + $0x8] sm:$0xfe] %vm665, %v646
    %vm667 = vcmask 1047616
    %668 = vst.msk [vmem:[#allocation3 + $0x10] sm:$0xff] %vm667, %v648
    %vm669 = vcmask 64512
    %670 = vst.msk [vmem:[#allocation3 + $0x18] sm:$0xff] %vm669, %v648
    %vm671 = vcmask 1040448
    %672 = vst.msk [vmem:[#allocation3 + $0x20] sm:$0x1] %vm671, %v650
    %vm673 = vcmask 57344
    %674 = vst.msk [vmem:[#allocation3 + $0x28] sm:$0x1] %vm673, %v650
    %675 = vst.msk [vmem:[#allocation3 + $0x30] sm:$0xfe] %vm663, %v652
    %676 = vst.msk [vmem:[#allocation3 + $0x38] sm:$0xfe] %vm665, %v652
    %677 = vst.msk [vmem:[#allocation3 + $0x40] sm:$0xff] %vm667, %v654
    %678 = vst.msk [vmem:[#allocation3 + $0x48] sm:$0xff] %vm669, %v654
    %679 = vst.msk [vmem:[#allocation3 + $0x50] sm:$0x1] %vm671, %v656
    %680 = vst.msk [vmem:[#allocation3 + $0x58] sm:$0x1] %vm673, %v656
    %v681 = vld [vmem:[#allocation3] sm:$0xff]
    %v682 = vld [vmem:[#allocation3 + $0x8] sm:$0xff]
    %v683 = vld [vmem:[#allocation3 + $0x10] sm:$0xff]
    %v684 = vld [vmem:[#allocation3 + $0x18] sm:$0xff]
    %v685 = vld [vmem:[#allocation3 + $0x30] sm:$0xff]
    %v686 = vld [vmem:[#allocation3 + $0x38] sm:$0xff]
    %v687 = vld [vmem:[#allocation3 + $0x40] sm:$0xff]
    %v688 = vld [vmem:[#allocation3 + $0x48] sm:$0xff]
    %v689 = vld [vmem:[#allocation3] sm:$0xfe]
    %v690 = vld [vmem:[#allocation3 + $0x8] sm:$0xfe]
    %v691 = vld [vmem:[#allocation3 + $0x20] sm:$0x1]
    %v692 = vld [vmem:[#allocation3 + $0x28] sm:$0x1]
    %v693 = vld [vmem:[#allocation3 + $0x30] sm:$0xfe]
    %v694 = vld [vmem:[#allocation3 + $0x38] sm:$0xfe]
    %v695 = vld [vmem:[#allocation3 + $0x50] sm:$0x1]
    %v696 = vld [vmem:[#allocation3 + $0x58] sm:$0x1]
    %v697 = vld [vmem:[#allocation3] sm:$0xfc]
    %v698 = vld [vmem:[#allocation3 + $0x8] sm:$0xfc]
    %v699 = vld [vmem:[#allocation3 + $0x20] sm:$0x3]
    %v700 = vld [vmem:[#allocation3 + $0x28] sm:$0x3]
    %v701 = vld [vmem:[#allocation3 + $0x30] sm:$0xfc]
    %v702 = vld [vmem:[#allocation3 + $0x38] sm:$0xfc]
    %v703 = vld [vmem:[#allocation3 + $0x50] sm:$0x3]
    %v704 = vld [vmem:[#allocation3 + $0x58] sm:$0x3]
    %v705 = vld [vmem:[%s5 + $0x1] sm:$0x1]
    %vm718 = vcmask 1046528
    %v719 = vrot.slane %v689, 1
    %v720 = vrot.slane %v683, 1
    %v721 = vsel %vm718, %v719, %v720
    %v722 = vrot.slane %v690, 1
    %v723 = vrot.slane %v684, 1
    %v724 = vsel %vm718, %v722, %v723
    %v725 = vrot.slane %v691, 1
    %v726 = vsel %vm718, %v720, %v725
    %v727 = vrot.slane %v692, 1
    %v728 = vsel %vm718, %v723, %v727
    %v729 = vrot.slane %v693, 1
    %v730 = vrot.slane %v687, 1
    %v731 = vsel %vm718, %v729, %v730
    %v732 = vrot.slane %v694, 1
    %v733 = vrot.slane %v688, 1
    %v734 = vsel %vm718, %v732, %v733
    %v735 = vrot.slane %v695, 1
    %v736 = vsel %vm718, %v730, %v735
    %v737 = vrot.slane %v696, 1
    %v738 = vsel %vm718, %v733, %v737
    %739 = vrot.lane.b32.xlu0 %v721, 16
    %v740 = vpop.permute.xlu0 %739
    %741 = vrot.lane.b32.xlu0 %v724, 16
    %v742 = vpop.permute.xlu0 %741
    %743 = vrot.lane.b32.xlu0 %v726, 16
    %v744 = vpop.permute.xlu0 %743
    %745 = vrot.lane.b32.xlu0 %v728, 16
    %v746 = vpop.permute.xlu0 %745
    %747 = vrot.lane.b32.xlu0 %v731, 16
    %v748 = vpop.permute.xlu0 %747
    %749 = vrot.lane.b32.xlu0 %v734, 16
    %v750 = vpop.permute.xlu0 %749
    %751 = vrot.lane.b32.xlu0 %v736, 16
    %v752 = vpop.permute.xlu0 %751
    %753 = vrot.lane.b32.xlu0 %v738, 16
    %v754 = vpop.permute.xlu0 %753
    %v755 = vsel %vm67, %v740, %v742
    %v756 = vsel %vm67, %v744, %v746
    %v757 = vsel %vm67, %v748, %v750
    %v758 = vsel %vm67, %v752, %v754
    %vm775 = vcmask 1045504
    %v776 = vrot.slane %v697, 2
    %v777 = vrot.slane %v683, 2
    %v778 = vsel %vm775, %v776, %v777
    %v779 = vrot.slane %v698, 2
    %v780 = vrot.slane %v684, 2
    %v781 = vsel %vm775, %v779, %v780
    %v782 = vrot.slane %v699, 2
    %v783 = vsel %vm775, %v777, %v782
    %v784 = vrot.slane %v700, 2
    %v785 = vsel %vm775, %v780, %v784
    %v786 = vrot.slane %v701, 2
    %v787 = vrot.slane %v687, 2
    %v788 = vsel %vm775, %v786, %v787
    %v789 = vrot.slane %v702, 2
    %v790 = vrot.slane %v688, 2
    %v791 = vsel %vm775, %v789, %v790
    %v792 = vrot.slane %v703, 2
    %v793 = vsel %vm775, %v787, %v792
    %v794 = vrot.slane %v704, 2
    %v795 = vsel %vm775, %v790, %v794
    %796 = vrot.lane.b32.xlu0 %v778, 32
    %v797 = vpop.permute.xlu0 %796
    %798 = vrot.lane.b32.xlu0 %v781, 32
    %v799 = vpop.permute.xlu0 %798
    %800 = vrot.lane.b32.xlu0 %v783, 32
    %v801 = vpop.permute.xlu0 %800
    %802 = vrot.lane.b32.xlu0 %v785, 32
    %v803 = vpop.permute.xlu0 %802
    %804 = vrot.lane.b32.xlu0 %v788, 32
    %v805 = vpop.permute.xlu0 %804
    %806 = vrot.lane.b32.xlu0 %v791, 32
    %v807 = vpop.permute.xlu0 %806
    %808 = vrot.lane.b32.xlu0 %v793, 32
    %v809 = vpop.permute.xlu0 %808
    %810 = vrot.lane.b32.xlu0 %v795, 32
    %v811 = vpop.permute.xlu0 %810
    %vm812 = vcmask 261120
    %v813 = vsel %vm812, %v797, %v799
    %v814 = vsel %vm812, %v801, %v803
    %v815 = vsel %vm812, %v805, %v807
    %v816 = vsel %vm812, %v809, %v811
    %v825 = vsel %vm67, %v682, %v740
    %v826 = vsel %vm67, %v684, %v744
    %v827 = vsel %vm67, %v686, %v748
    %v828 = vsel %vm67, %v688, %v752
    %v829 = vsel %vm812, %v755, %v797
    %v830 = vsel %vm812, %v756, %v801
    %v831 = vsel %vm812, %v757, %v805
    %v832 = vsel %vm812, %v758, %v809
    %v833 = vpack.c.bf16 %v683, %v681
    %v834 = vpack.c.bf16 %v826, %v825
    %v835 = vpack.c.bf16 %v830, %v829
    %v836 = vpack.c.bf16 %v814, %v813
    %v837 = vpack.c.bf16 %v687, %v685
    %v838 = vpack.c.bf16 %v828, %v827
    %v839 = vpack.c.bf16 %v832, %v831
    %v840 = vpack.c.bf16 %v816, %v815
    %v841 = vld [vmem:[%s2] sm:$0xf]
    %v842 = vld [vmem:[%s2 + $0x4] sm:$0xf]
    %v843 = vld [vmem:[%s2 + $0x8] sm:$0xf]
    %v844 = vld [vmem:[%s2 + $0xc] sm:$0xf]
    %v845 = vld [vmem:[%s2 + $0x10] sm:$0xf]
    %v846 = vld [vmem:[%s2 + $0x14] sm:$0xf]
    %v847 = vld [vmem:[%s2 + $0x18] sm:$0xf]
    %v848 = vld [vmem:[%s2 + $0x1c] sm:$0xf]
    %v849 = vld [vmem:[%s2 + $0x20] sm:$0xf]
    %v850 = vld [vmem:[%s2 + $0x24] sm:$0xf]
    %v851 = vld [vmem:[%s2 + $0x28] sm:$0xf]
    %v852 = vld [vmem:[%s2 + $0x2c] sm:$0xf]
    %v853 = vld [vmem:[%s2 + $0x30] sm:$0xf]
    %v854 = vld [vmem:[%s2 + $0x34] sm:$0xf]
    %v855 = vld [vmem:[%s2 + $0x38] sm:$0xf]
    %v856 = vld [vmem:[%s2 + $0x3c] sm:$0xf]
    %v857 = vld [vmem:[%s2 + $0x40] sm:$0xf]
    %v858 = vld [vmem:[%s2 + $0x44] sm:$0xf]
    %v859 = vld [vmem:[%s2 + $0x48] sm:$0xf]
    %v860 = vld [vmem:[%s2 + $0x4c] sm:$0xf]
    %v861 = vld [vmem:[%s2 + $0x50] sm:$0xf]
    %v862 = vld [vmem:[%s2 + $0x54] sm:$0xf]
    %v863 = vld [vmem:[%s2 + $0x58] sm:$0xf]
    %v864 = vld [vmem:[%s2 + $0x5c] sm:$0xf]
    %v865 = vld [vmem:[%s2 + $0x60] sm:$0xf]
    %v866 = vld [vmem:[%s2 + $0x64] sm:$0xf]
    %v867 = vld [vmem:[%s2 + $0x68] sm:$0xf]
    %v868 = vld [vmem:[%s2 + $0x6c] sm:$0xf]
    %v869 = vld [vmem:[%s2 + $0x70] sm:$0xf]
    %v870 = vld [vmem:[%s2 + $0x74] sm:$0xf]
    %v871 = vld [vmem:[%s2 + $0x78] sm:$0xf]
    %v872 = vld [vmem:[%s2 + $0x7c] sm:$0xf]
    %v873 = vld [vmem:[%s2 + $0x80] sm:$0xf]
    %v874 = vld [vmem:[%s2 + $0x84] sm:$0xf]
    %v875 = vld [vmem:[%s2 + $0x88] sm:$0xf]
    %v876 = vld [vmem:[%s2 + $0x8c] sm:$0xf]
    %v877 = vld [vmem:[%s2 + $0x90] sm:$0xf]
    %v878 = vld [vmem:[%s2 + $0x94] sm:$0xf]
    %v879 = vld [vmem:[%s2 + $0x98] sm:$0xf]
    %v880 = vld [vmem:[%s2 + $0x9c] sm:$0xf]
    %v881 = vld [vmem:[%s2 + $0xa0] sm:$0xf]
    %v882 = vld [vmem:[%s2 + $0xa4] sm:$0xf]
    %v883 = vld [vmem:[%s2 + $0xa8] sm:$0xf]
    %v884 = vld [vmem:[%s2 + $0xac] sm:$0xf]
    %v885 = vld [vmem:[%s2 + $0xb0] sm:$0xf]
    %v886 = vld [vmem:[%s2 + $0xb4] sm:$0xf]
    %v887 = vld [vmem:[%s2 + $0xb8] sm:$0xf]
    %v888 = vld [vmem:[%s2 + $0xbc] sm:$0xf]
    %v889 = vld [vmem:[%s2 + $0xc0] sm:$0xf]
    %v890 = vld [vmem:[%s2 + $0xc4] sm:$0xf]
    %v891 = vld [vmem:[%s2 + $0xc8] sm:$0xf]
    %v892 = vld [vmem:[%s2 + $0xcc] sm:$0xf]
    %v893 = vld [vmem:[%s2 + $0xd0] sm:$0xf]
    %v894 = vld [vmem:[%s2 + $0xd4] sm:$0xf]
    %v895 = vlaneseq
    %v896 = vshrl.u32 %v895, 7
    %v897 = vsub.s32 0, %v896
    %v898 = vrot.slane %v705, %v897
    %v953 = vunpack.c.l.b16 %v841
    %v954 = vunpack.c.l.b16 %v842
    %v955 = vunpack.c.l.b16 %v843
    %v956 = vunpack.c.l.b16 %v844
    %v957 = vunpack.c.l.b16 %v845
    %v958 = vunpack.c.l.b16 %v846
    %v959 = vunpack.c.l.b16 %v847
    %v960 = vunpack.c.l.b16 %v848
    %v961 = vunpack.c.l.b16 %v849
    %v962 = vunpack.c.l.b16 %v850
    %v963 = vunpack.c.l.b16 %v851
    %v964 = vunpack.c.l.b16 %v852
    %v965 = vunpack.c.l.b16 %v853
    %v966 = vunpack.c.l.b16 %v854
    %v967 = vunpack.c.l.b16 %v855
    %v968 = vunpack.c.l.b16 %v856
    %v969 = vunpack.c.l.b16 %v857
    %v970 = vunpack.c.l.b16 %v858
    %v971 = vunpack.c.l.b16 %v859
    %v972 = vunpack.c.l.b16 %v860
    %v973 = vunpack.c.l.b16 %v861
    %v974 = vunpack.c.l.b16 %v862
    %v975 = vunpack.c.l.b16 %v863
    %v976 = vunpack.c.l.b16 %v864
    %v977 = vunpack.c.l.b16 %v865
    %v978 = vunpack.c.l.b16 %v866
    %v979 = vunpack.c.l.b16 %v867
    %v980 = vunpack.c.l.b16 %v868
    %v981 = vunpack.c.l.b16 %v869
    %v982 = vunpack.c.l.b16 %v870
    %v983 = vunpack.c.l.b16 %v871
    %v984 = vunpack.c.l.b16 %v872
    %v985 = vunpack.c.l.b16 %v873
    %v986 = vunpack.c.l.b16 %v874
    %v987 = vunpack.c.l.b16 %v875
    %v988 = vunpack.c.l.b16 %v876
    %v989 = vunpack.c.l.b16 %v877
    %v990 = vunpack.c.l.b16 %v878
    %v991 = vunpack.c.l.b16 %v879
    %v992 = vunpack.c.l.b16 %v880
    %v993 = vunpack.c.l.b16 %v881
    %v994 = vunpack.c.l.b16 %v882
    %v995 = vunpack.c.l.b16 %v883
    %v996 = vunpack.c.l.b16 %v884
    %v997 = vunpack.c.l.b16 %v885
    %v998 = vunpack.c.l.b16 %v886
    %v999 = vunpack.c.l.b16 %v887
    %v1000 = vunpack.c.l.b16 %v888
    %v1001 = vunpack.c.l.b16 %v889
    %v1002 = vunpack.c.l.b16 %v890
    %v1003 = vunpack.c.l.b16 %v891
    %v1004 = vunpack.c.l.b16 %v892
    %v1005 = vunpack.c.l.b16 %v893
    %v1006 = vunpack.c.l.b16 %v894
    %v1007 = vpack.c.b16 %v954, %v953
    %v1008 = vpack.c.b16 %v956, %v955
    %v1009 = vpack.c.b16 %v958, %v957
    %v1010 = vpack.c.b16 %v960, %v959
    %v1011 = vpack.c.b16 %v962, %v961
    %v1012 = vpack.c.b16 %v964, %v963
    %v1013 = vpack.c.b16 %v966, %v965
    %v1014 = vpack.c.b16 %v968, %v967
    %v1015 = vpack.c.b16 %v970, %v969
    %v1016 = vpack.c.b16 %v972, %v971
    %v1017 = vpack.c.b16 %v974, %v973
    %v1018 = vpack.c.b16 %v976, %v975
    %v1019 = vpack.c.b16 %v978, %v977
    %v1020 = vpack.c.b16 %v980, %v979
    %v1021 = vpack.c.b16 %v982, %v981
    %v1022 = vpack.c.b16 %v984, %v983
    %v1023 = vpack.c.b16 %v986, %v985
    %v1024 = vpack.c.b16 %v988, %v987
    %v1025 = vpack.c.b16 %v990, %v989
    %v1026 = vpack.c.b16 %v992, %v991
    %v1027 = vpack.c.b16 %v994, %v993
    %v1028 = vpack.c.b16 %v996, %v995
    %v1029 = vpack.c.b16 %v998, %v997
    %v1030 = vpack.c.b16 %v1000, %v999
    %v1031 = vpack.c.b16 %v1002, %v1001
    %v1032 = vpack.c.b16 %v1004, %v1003
    %v1033 = vpack.c.b16 %v1006, %v1005
    %vm1061 = vcmask 392192
    %v1063 = vsel %vm1061, %v836, 0
    %v1066 = vsel %vm1061, %v840, 0
    %1068 = vmatprep.subr.bf16.mxu0 0
    %1069 = vmatpush1.bf16.msra.mxu0 %v1007
    %1070 = vmatprep.subr.bf16.mxu0 0
    %1071 = vmatpush1.bf16.msra.mxu0 %v1008
    %1072 = vmatprep.subr.bf16.mxu0 0
    %1073 = vmatpush1.bf16.msra.mxu0 %v1009
    %1074 = vmatprep.subr.bf16.mxu0 0
    %1075 = vmatpush1.bf16.msra.mxu0 %v1010
    %1076 = vmatprep.subr.bf16.mxu0 0
    %1077 = vmatpush1.bf16.msra.mxu0 %v1011
    %1078 = vmatprep.subr.bf16.mxu0 0
    %1079 = vmatpush1.bf16.msra.mxu0 %v1012
    %1080 = vmatprep.subr.bf16.mxu0 0
    %1081 = vmatpush1.bf16.msra.mxu0 %v1013
    %1082 = vmatprep.subr.bf16.mxu0 0
    %1083 = vmatpush1.bf16.msra.mxu0 %v1014
    %1084 = vmatprep.subr.bf16.mxu0 0
    %1085 = vmatpush1.bf16.msra.mxu0 %v1015
    %1086 = vmatprep.subr.bf16.mxu0 0
    %1087 = vmatpush1.bf16.msra.mxu0 %v1016
    %1088 = vmatprep.subr.bf16.mxu0 0
    %1089 = vmatpush1.bf16.msra.mxu0 %v1017
    %1090 = vmatprep.subr.bf16.mxu0 0
    %1091 = vmatpush1.bf16.msra.mxu0 %v1018
    %1092 = vmatprep.subr.bf16.mxu0 0
    %1093 = vmatpush1.bf16.msra.mxu0 %v1019
    %1094 = vmatprep.subr.bf16.mxu0 0
    %1095 = vmatpush1.bf16.msra.mxu0 %v1020
    %1096 = vmatprep.subr.bf16.mxu0 0
    %1097 = vmatpush1.bf16.msra.mxu0 %v1021
    %1098 = vmatprep.subr.bf16.mxu0 0
    %1099 = vmatpush1.bf16.msra.mxu0 %v1022
    %1100 = vmatprep.mubr.bf16.mxu0 %v834
    %1101 = vmatmul.mubr.bf16.gmra.mrb[0].mxu0 %v833
    %v1102 = vpop.f32.mrb[0].mxu0
    %v1103 = vadd.f32 %v898, %v1102
    %v1104 = vpop.f32.mrb[0].mxu0
    %v1105 = vpop.f32.mrb[0].mxu0
    %v1106 = vadd.f32 %v898, %v1105
    %v1107 = vpop.f32.mrb[0].mxu0
    %1108 = vmatprep.mubr.bf16.mxu0 %v838
    %1109 = vmatmul.mubr.bf16.gmra.mrb[0].mxu0 %v837
    %v1110 = vpop.f32.mrb[0].mxu0
    %v1111 = vadd.f32 %v898, %v1110
    %v1112 = vpop.f32.mrb[0].mxu0
    %v1113 = vpop.f32.mrb[0].mxu0
    %v1114 = vadd.f32 %v898, %v1113
    %v1115 = vpop.f32.mrb[0].mxu0
    %1116 = vdwg.mxu0
    %1117 = vmatprep.subr.bf16.mxu0 0
    %1118 = vmatpush1.bf16.msra.mxu0 %v1023
    %1119 = vmatprep.subr.bf16.mxu0 0
    %1120 = vmatpush1.bf16.msra.mxu0 %v1024
    %1121 = vmatprep.subr.bf16.mxu0 0
    %1122 = vmatpush1.bf16.msra.mxu0 %v1025
    %1123 = vmatprep.subr.bf16.mxu0 0
    %1124 = vmatpush1.bf16.msra.mxu0 %v1026
    %1125 = vmatprep.subr.bf16.mxu0 0
    %1126 = vmatpush1.bf16.msra.mxu0 %v1027
    %1127 = vmatprep.subr.bf16.mxu0 0
    %1128 = vmatpush1.bf16.msra.mxu0 %v1028
    %1129 = vmatprep.subr.bf16.mxu0 0
    %1130 = vmatpush1.bf16.msra.mxu0 %v1029
    %1131 = vmatprep.subr.bf16.mxu0 0
    %1132 = vmatpush1.bf16.msra.mxu0 %v1030
    %1133 = vmatprep.subr.bf16.mxu0 0
    %1134 = vmatpush1.bf16.msra.mxu0 %v1031
    %1135 = vmatprep.subr.bf16.mxu0 0
    %1136 = vmatpush1.bf16.msra.mxu0 %v1032
    %1137 = vmatprep.subr.bf16.mxu0 0
    %1138 = vmatpush1.bf16.msra.mxu0 %v1033
    %1139 = vmatprep.subr.bf16.mxu0 0
    %1140 = vmatpush1.bf16.msra.mxu0 0
    %1141 = vmatprep.subr.bf16.mxu0 0
    %1142 = vmatpush1.bf16.msra.mxu0 0
    %1143 = vmatprep.subr.bf16.mxu0 0
    %1144 = vmatpush1.bf16.msra.mxu0 0
    %1145 = vmatprep.subr.bf16.mxu0 0
    %1146 = vmatpush1.bf16.msra.mxu0 0
    %1147 = vmatprep.subr.bf16.mxu0 0
    %1148 = vmatpush1.bf16.msra.mxu0 0
    %1149 = vmatprep.mubr.bf16.mxu0 %v1063
    %1150 = vmatmul.mubr.bf16.gmra.mrb[0].mxu0 %v835
    %v1151 = vpop.f32.mrb[0].mxu0
    %v1152 = vadd.f32 %v1103, %v1151
    %v1153 = vpop.f32.mrb[0].mxu0
    %v1154 = vpop.f32.mrb[0].mxu0
    %v1155 = vadd.f32 %v1106, %v1154
    %v1156 = vpop.f32.mrb[0].mxu0
    %1157 = vmatprep.mubr.bf16.mxu0 %v1066
    %1158 = vmatmul.mubr.bf16.gmra.mrb[0].mxu0 %v839
    %v1159 = vpop.f32.mrb[0].mxu0
    %v1160 = vadd.f32 %v1111, %v1159
    %v1161 = vpop.f32.mrb[0].mxu0
    %v1162 = vpop.f32.mrb[0].mxu0
    %v1163 = vadd.f32 %v1114, %v1162
    %v1164 = vpop.f32.mrb[0].mxu0
    %1165 = vdwg.mxu0
    %v1166 = vld [vmem:[%s5 + $0x2] sm:$0x1]
    %v1167 = vld [vmem:[%s5 + $0x3] sm:$0x1]
    %v1168 = vadd.f32 %v1152, %v1155
    %v1169 = vadd.f32 %v1168, %v1160
    %v1170 = vadd.f32 %v1169, %v1163
    %v1171 = vrot.slane %v1170, 4
    %v1172 = vadd.f32 %v1170, %v1171
    %v1173 = vrot.slane %v1172, 2
    %v1174 = vadd.f32 %v1172, %v1173
    %v1175 = vrot.slane %v1174, 1
    %v1176 = vadd.f32 %v1174, %v1175
    %v1177 = vmul.f32 %v1152, %v1152
    %v1178 = vmul.f32 %v1155, %v1155
    %v1179 = vmul.f32 %v1160, %v1160
    %v1180 = vmul.f32 %v1163, %v1163
    %v1181 = vadd.f32 %v1177, %v1178
    %v1182 = vadd.f32 %v1181, %v1179
    %v1183 = vadd.f32 %v1182, %v1180
    %v1184 = vrot.slane %v1183, 4
    %v1185 = vadd.f32 %v1183, %v1184
    %v1186 = vrot.slane %v1185, 2
    %v1187 = vadd.f32 %v1185, %v1186
    %v1188 = vrot.slane %v1187, 1
    %v1189 = vadd.f32 %v1187, %v1188
    %v1190 = vsel %vm638, %v1176, %v1189
    %v1191 = vld [vmem:[%s4] sm:$0xff]
    %v1192 = vld [vmem:[%s4 + $0x8] sm:$0xff]
    %v1193 = vld [vmem:[%s4 + $0x10] sm:$0xff]
    %v1194 = vld [vmem:[%s4 + $0x18] sm:$0xff]
    %v1195 = vld [vmem:[%s4 + $0x20] sm:$0xff]
    %v1196 = vld [vmem:[%s4 + $0x28] sm:$0xff]
    %v1197 = vld [vmem:[%s4 + $0x30] sm:$0xff]
    %v1198 = vld [vmem:[%s4 + $0x38] sm:$0xff]
    %v1199 = vld [vmem:[%s4 + $0x40] sm:$0xff]
    %v1200 = vld [vmem:[%s4 + $0x48] sm:$0xff]
    %v1201 = vld [vmem:[%s4 + $0x50] sm:$0xff]
    %v1202 = vld [vmem:[%s4 + $0x58] sm:$0xff]
    %v1203 = vld [vmem:[%s4 + $0x60] sm:$0xff]
    %v1204 = vld [vmem:[%s4 + $0x68] sm:$0xff]
    %v1205 = vld [vmem:[%s4 + $0x70] sm:$0xff]
    %v1206 = vld [vmem:[%s4 + $0x78] sm:$0xff]
    %1207 = vmatprep.subr.mxu0 0.0
    %v1208 = vand.u32 %v1191, 4294901760
    %1209 = vmatpush1.msra.mxu0 %v1208
    %1210 = vmatprep.subr.mxu0 0.0
    %v1211 = vand.u32 %v1192, 4294901760
    %1212 = vmatpush1.msra.mxu0 %v1211
    %1213 = vmatprep.subr.mxu0 0.0
    %v1214 = vand.u32 %v1193, 4294901760
    %1215 = vmatpush1.msra.mxu0 %v1214
    %1216 = vmatprep.subr.mxu0 0.0
    %v1217 = vand.u32 %v1194, 4294901760
    %1218 = vmatpush1.msra.mxu0 %v1217
    %1219 = vmatprep.subr.mxu0 0.0
    %v1220 = vand.u32 %v1195, 4294901760
    %1221 = vmatpush1.msra.mxu0 %v1220
    %1222 = vmatprep.subr.mxu0 0.0
    %v1223 = vand.u32 %v1196, 4294901760
    %1224 = vmatpush1.msra.mxu0 %v1223
    %1225 = vmatprep.subr.mxu0 0.0
    %v1226 = vand.u32 %v1197, 4294901760
    %1227 = vmatpush1.msra.mxu0 %v1226
    %1228 = vmatprep.subr.mxu0 0.0
    %v1229 = vand.u32 %v1198, 4294901760
    %1230 = vmatpush1.msra.mxu0 %v1229
    %1231 = vmatprep.subr.mxu0 0.0
    %v1232 = vand.u32 %v1199, 4294901760
    %1233 = vmatpush1.msra.mxu0 %v1232
    %1234 = vmatprep.subr.mxu0 0.0
    %v1235 = vand.u32 %v1200, 4294901760
    %1236 = vmatpush1.msra.mxu0 %v1235
    %1237 = vmatprep.subr.mxu0 0.0
    %v1238 = vand.u32 %v1201, 4294901760
    %1239 = vmatpush1.msra.mxu0 %v1238
    %1240 = vmatprep.subr.mxu0 0.0
    %v1241 = vand.u32 %v1202, 4294901760
    %1242 = vmatpush1.msra.mxu0 %v1241
    %1243 = vmatprep.subr.mxu0 0.0
    %v1244 = vand.u32 %v1203, 4294901760
    %1245 = vmatpush1.msra.mxu0 %v1244
    %1246 = vmatprep.subr.mxu0 0.0
    %v1247 = vand.u32 %v1204, 4294901760
    %1248 = vmatpush1.msra.mxu0 %v1247
    %1249 = vmatprep.subr.mxu0 0.0
    %v1250 = vand.u32 %v1205, 4294901760
    %1251 = vmatpush1.msra.mxu0 %v1250
    %1252 = vmatprep.subr.mxu0 0.0
    %v1253 = vand.u32 %v1206, 4294901760
    %1254 = vmatpush1.msra.mxu0 %v1253
    %1255 = vmatprep.subr.mxu0 0.0
    %1256 = vmatpush1.msra.mxu0 0.0
    %1257 = vmatprep.subr.mxu0 0.0
    %1258 = vmatpush1.msra.mxu0 0.0
    %1259 = vmatprep.subr.mxu0 0.0
    %1260 = vmatpush1.msra.mxu0 0.0
    %1261 = vmatprep.subr.mxu0 0.0
    %1262 = vmatpush1.msra.mxu0 0.0
    %1263 = vmatprep.subr.mxu0 0.0
    %1264 = vmatpush1.msra.mxu0 0.0
    %1265 = vmatprep.subr.mxu0 0.0
    %1266 = vmatpush1.msra.mxu0 0.0
    %1267 = vmatprep.subr.mxu0 0.0
    %1268 = vmatpush1.msra.mxu0 0.0
    %1269 = vmatprep.subr.mxu0 0.0
    %1270 = vmatpush1.msra.mxu0 0.0
    %1271 = vmatprep.subr.mxu0 0.0
    %1272 = vmatpush1.msra.mxu0 0.0
    %1273 = vmatprep.subr.mxu0 0.0
    %1274 = vmatpush1.msra.mxu0 0.0
    %1275 = vmatprep.subr.mxu0 0.0
    %1276 = vmatpush1.msra.mxu0 0.0
    %1277 = vmatprep.subr.mxu0 0.0
    %1278 = vmatpush1.msra.mxu0 0.0
    %1279 = vmatprep.subr.mxu0 0.0
    %1280 = vmatpush1.msra.mxu0 0.0
    %1281 = vmatprep.subr.mxu0 0.0
    %1282 = vmatpush1.msra.mxu0 0.0
    %1283 = vmatprep.subr.mxu0 0.0
    %1284 = vmatpush1.msra.mxu0 0.0
    %1285 = vmatprep.subr.mxu0 0.0
    %1286 = vmatpush1.msra.mxu0 0.0
    %1287 = vmatprep.mubr.f32.mxu0 0.0
    %v1288 = vand.u32 %v1190, 4294901760
    %v1289 = vsub.f32 %v1190, %v1288
    %v1290 = vand.u32 %v1289, 4294901760
    %v1291 = vsub.f32 %v1289, %v1290
    %v1292 = vand.u32 %v1291, 4294901760
    %1293 = vmatmul.mubr.f32.gmra.mrb[0].mxu0 %v1292
    %v1294 = vpop.f32.mrb[0].mxu0
    %v1295 = vadd.f32 0.0, %v1294
    %v1296 = vpop.f32.mrb[0].mxu0
    %1297 = vdwg.mxu0
    %1298 = vmatprep.subr.mxu0 0.0
    %v1299 = vand.u32 %v1191, 4294901760
    %v1300 = vsub.f32 %v1191, %v1299
    %v1301 = vand.u32 %v1300, 4294901760
    %v1302 = vsub.f32 %v1300, %v1301
    %v1303 = vand.u32 %v1302, 4294901760
    %1304 = vmatpush1.msra.mxu0 %v1303
    %1305 = vmatprep.subr.mxu0 0.0
    %v1306 = vand.u32 %v1192, 4294901760
    %v1307 = vsub.f32 %v1192, %v1306
    %v1308 = vand.u32 %v1307, 4294901760
    %v1309 = vsub.f32 %v1307, %v1308
    %v1310 = vand.u32 %v1309, 4294901760
    %1311 = vmatpush1.msra.mxu0 %v1310
    %1312 = vmatprep.subr.mxu0 0.0
    %v1313 = vand.u32 %v1193, 4294901760
    %v1314 = vsub.f32 %v1193, %v1313
    %v1315 = vand.u32 %v1314, 4294901760
    %v1316 = vsub.f32 %v1314, %v1315
    %v1317 = vand.u32 %v1316, 4294901760
    %1318 = vmatpush1.msra.mxu0 %v1317
    %1319 = vmatprep.subr.mxu0 0.0
    %v1320 = vand.u32 %v1194, 4294901760
    %v1321 = vsub.f32 %v1194, %v1320
    %v1322 = vand.u32 %v1321, 4294901760
    %v1323 = vsub.f32 %v1321, %v1322
    %v1324 = vand.u32 %v1323, 4294901760
    %1325 = vmatpush1.msra.mxu0 %v1324
    %1326 = vmatprep.subr.mxu0 0.0
    %v1327 = vand.u32 %v1195, 4294901760
    %v1328 = vsub.f32 %v1195, %v1327
    %v1329 = vand.u32 %v1328, 4294901760
    %v1330 = vsub.f32 %v1328, %v1329
    %v1331 = vand.u32 %v1330, 4294901760
    %1332 = vmatpush1.msra.mxu0 %v1331
    %1333 = vmatprep.subr.mxu0 0.0
    %v1334 = vand.u32 %v1196, 4294901760
    %v1335 = vsub.f32 %v1196, %v1334
    %v1336 = vand.u32 %v1335, 4294901760
    %v1337 = vsub.f32 %v1335, %v1336
    %v1338 = vand.u32 %v1337, 4294901760
    %1339 = vmatpush1.msra.mxu0 %v1338
    %1340 = vmatprep.subr.mxu0 0.0
    %v1341 = vand.u32 %v1197, 4294901760
    %v1342 = vsub.f32 %v1197, %v1341
    %v1343 = vand.u32 %v1342, 4294901760
    %v1344 = vsub.f32 %v1342, %v1343
    %v1345 = vand.u32 %v1344, 4294901760
    %1346 = vmatpush1.msra.mxu0 %v1345
    %1347 = vmatprep.subr.mxu0 0.0
    %v1348 = vand.u32 %v1198, 4294901760
    %v1349 = vsub.f32 %v1198, %v1348
    %v1350 = vand.u32 %v1349, 4294901760
    %v1351 = vsub.f32 %v1349, %v1350
    %v1352 = vand.u32 %v1351, 4294901760
    %1353 = vmatpush1.msra.mxu0 %v1352
    %1354 = vmatprep.subr.mxu0 0.0
    %v1355 = vand.u32 %v1199, 4294901760
    %v1356 = vsub.f32 %v1199, %v1355
    %v1357 = vand.u32 %v1356, 4294901760
    %v1358 = vsub.f32 %v1356, %v1357
    %v1359 = vand.u32 %v1358, 4294901760
    %1360 = vmatpush1.msra.mxu0 %v1359
    %1361 = vmatprep.subr.mxu0 0.0
    %v1362 = vand.u32 %v1200, 4294901760
    %v1363 = vsub.f32 %v1200, %v1362
    %v1364 = vand.u32 %v1363, 4294901760
    %v1365 = vsub.f32 %v1363, %v1364
    %v1366 = vand.u32 %v1365, 4294901760
    %1367 = vmatpush1.msra.mxu0 %v1366
    %1368 = vmatprep.subr.mxu0 0.0
    %v1369 = vand.u32 %v1201, 4294901760
    %v1370 = vsub.f32 %v1201, %v1369
    %v1371 = vand.u32 %v1370, 4294901760
    %v1372 = vsub.f32 %v1370, %v1371
    %v1373 = vand.u32 %v1372, 4294901760
    %1374 = vmatpush1.msra.mxu0 %v1373
    %1375 = vmatprep.subr.mxu0 0.0
    %v1376 = vand.u32 %v1202, 4294901760
    %v1377 = vsub.f32 %v1202, %v1376
    %v1378 = vand.u32 %v1377, 4294901760
    %v1379 = vsub.f32 %v1377, %v1378
    %v1380 = vand.u32 %v1379, 4294901760
    %1381 = vmatpush1.msra.mxu0 %v1380
    %1382 = vmatprep.subr.mxu0 0.0
    %v1383 = vand.u32 %v1203, 4294901760
    %v1384 = vsub.f32 %v1203, %v1383
    %v1385 = vand.u32 %v1384, 4294901760
    %v1386 = vsub.f32 %v1384, %v1385
    %v1387 = vand.u32 %v1386, 4294901760
    %1388 = vmatpush1.msra.mxu0 %v1387
    %1389 = vmatprep.subr.mxu0 0.0
    %v1390 = vand.u32 %v1204, 4294901760
    %v1391 = vsub.f32 %v1204, %v1390
    %v1392 = vand.u32 %v1391, 4294901760
    %v1393 = vsub.f32 %v1391, %v1392
    %v1394 = vand.u32 %v1393, 4294901760
    %1395 = vmatpush1.msra.mxu0 %v1394
    %1396 = vmatprep.subr.mxu0 0.0
    %v1397 = vand.u32 %v1205, 4294901760
    %v1398 = vsub.f32 %v1205, %v1397
    %v1399 = vand.u32 %v1398, 4294901760
    %v1400 = vsub.f32 %v1398, %v1399
    %v1401 = vand.u32 %v1400, 4294901760
    %1402 = vmatpush1.msra.mxu0 %v1401
    %1403 = vmatprep.subr.mxu0 0.0
    %v1404 = vand.u32 %v1206, 4294901760
    %v1405 = vsub.f32 %v1206, %v1404
    %v1406 = vand.u32 %v1405, 4294901760
    %v1407 = vsub.f32 %v1405, %v1406
    %v1408 = vand.u32 %v1407, 4294901760
    %1409 = vmatpush1.msra.mxu0 %v1408
    %1410 = vmatprep.subr.mxu0 0.0
    %1411 = vmatpush1.msra.mxu0 0.0
    %1412 = vmatprep.subr.mxu0 0.0
    %1413 = vmatpush1.msra.mxu0 0.0
    %1414 = vmatprep.subr.mxu0 0.0
    %1415 = vmatpush1.msra.mxu0 0.0
    %1416 = vmatprep.subr.mxu0 0.0
    %1417 = vmatpush1.msra.mxu0 0.0
    %1418 = vmatprep.subr.mxu0 0.0
    %1419 = vmatpush1.msra.mxu0 0.0
    %1420 = vmatprep.subr.mxu0 0.0
    %1421 = vmatpush1.msra.mxu0 0.0
    %1422 = vmatprep.subr.mxu0 0.0
    %1423 = vmatpush1.msra.mxu0 0.0
    %1424 = vmatprep.subr.mxu0 0.0
    %1425 = vmatpush1.msra.mxu0 0.0
    %1426 = vmatprep.subr.mxu0 0.0
    %1427 = vmatpush1.msra.mxu0 0.0
    %1428 = vmatprep.subr.mxu0 0.0
    %1429 = vmatpush1.msra.mxu0 0.0
    %1430 = vmatprep.subr.mxu0 0.0
    %1431 = vmatpush1.msra.mxu0 0.0
    %1432 = vmatprep.subr.mxu0 0.0
    %1433 = vmatpush1.msra.mxu0 0.0
    %1434 = vmatprep.subr.mxu0 0.0
    %1435 = vmatpush1.msra.mxu0 0.0
    %1436 = vmatprep.subr.mxu0 0.0
    %1437 = vmatpush1.msra.mxu0 0.0
    %1438 = vmatprep.subr.mxu0 0.0
    %1439 = vmatpush1.msra.mxu0 0.0
    %1440 = vmatprep.subr.mxu0 0.0
    %1441 = vmatpush1.msra.mxu0 0.0
    %1442 = vmatprep.mubr.f32.mxu0 0.0
    %v1443 = vand.u32 %v1190, 4294901760
    %1444 = vmatmul.mubr.f32.gmra.mrb[0].mxu0 %v1443
    %v1445 = vpop.f32.mrb[0].mxu0
    %v1446 = vadd.f32 %v1295, %v1445
    %v1447 = vpop.f32.mrb[0].mxu0
    %1448 = vdwg.mxu0
    %1449 = vmatprep.subr.mxu0 0.0
    %v1450 = vand.u32 %v1191, 4294901760
    %v1451 = vsub.f32 %v1191, %v1450
    %1452 = vmatpush1.msra.mxu0 %v1451
    %1453 = vmatprep.subr.mxu0 0.0
    %v1454 = vand.u32 %v1192, 4294901760
    %v1455 = vsub.f32 %v1192, %v1454
    %1456 = vmatpush1.msra.mxu0 %v1455
    %1457 = vmatprep.subr.mxu0 0.0
    %v1458 = vand.u32 %v1193, 4294901760
    %v1459 = vsub.f32 %v1193, %v1458
    %1460 = vmatpush1.msra.mxu0 %v1459
    %1461 = vmatprep.subr.mxu0 0.0
    %v1462 = vand.u32 %v1194, 4294901760
    %v1463 = vsub.f32 %v1194, %v1462
    %1464 = vmatpush1.msra.mxu0 %v1463
    %1465 = vmatprep.subr.mxu0 0.0
    %v1466 = vand.u32 %v1195, 4294901760
    %v1467 = vsub.f32 %v1195, %v1466
    %1468 = vmatpush1.msra.mxu0 %v1467
    %1469 = vmatprep.subr.mxu0 0.0
    %v1470 = vand.u32 %v1196, 4294901760
    %v1471 = vsub.f32 %v1196, %v1470
    %1472 = vmatpush1.msra.mxu0 %v1471
    %1473 = vmatprep.subr.mxu0 0.0
    %v1474 = vand.u32 %v1197, 4294901760
    %v1475 = vsub.f32 %v1197, %v1474
    %1476 = vmatpush1.msra.mxu0 %v1475
    %1477 = vmatprep.subr.mxu0 0.0
    %v1478 = vand.u32 %v1198, 4294901760
    %v1479 = vsub.f32 %v1198, %v1478
    %1480 = vmatpush1.msra.mxu0 %v1479
    %1481 = vmatprep.subr.mxu0 0.0
    %v1482 = vand.u32 %v1199, 4294901760
    %v1483 = vsub.f32 %v1199, %v1482
    %1484 = vmatpush1.msra.mxu0 %v1483
    %1485 = vmatprep.subr.mxu0 0.0
    %v1486 = vand.u32 %v1200, 4294901760
    %v1487 = vsub.f32 %v1200, %v1486
    %1488 = vmatpush1.msra.mxu0 %v1487
    %1489 = vmatprep.subr.mxu0 0.0
    %v1490 = vand.u32 %v1201, 4294901760
    %v1491 = vsub.f32 %v1201, %v1490
    %1492 = vmatpush1.msra.mxu0 %v1491
    %1493 = vmatprep.subr.mxu0 0.0
    %v1494 = vand.u32 %v1202, 4294901760
    %v1495 = vsub.f32 %v1202, %v1494
    %1496 = vmatpush1.msra.mxu0 %v1495
    %1497 = vmatprep.subr.mxu0 0.0
    %v1498 = vand.u32 %v1203, 4294901760
    %v1499 = vsub.f32 %v1203, %v1498
    %1500 = vmatpush1.msra.mxu0 %v1499
    %1501 = vmatprep.subr.mxu0 0.0
    %v1502 = vand.u32 %v1204, 4294901760
    %v1503 = vsub.f32 %v1204, %v1502
    %1504 = vmatpush1.msra.mxu0 %v1503
    %1505 = vmatprep.subr.mxu0 0.0
    %v1506 = vand.u32 %v1205, 4294901760
    %v1507 = vsub.f32 %v1205, %v1506
    %1508 = vmatpush1.msra.mxu0 %v1507
    %1509 = vmatprep.subr.mxu0 0.0
    %v1510 = vand.u32 %v1206, 4294901760
    %v1511 = vsub.f32 %v1206, %v1510
    %1512 = vmatpush1.msra.mxu0 %v1511
    %1513 = vmatprep.subr.mxu0 0.0
    %1514 = vmatpush1.msra.mxu0 0.0
    %1515 = vmatprep.subr.mxu0 0.0
    %1516 = vmatpush1.msra.mxu0 0.0
    %1517 = vmatprep.subr.mxu0 0.0
    %1518 = vmatpush1.msra.mxu0 0.0
    %1519 = vmatprep.subr.mxu0 0.0
    %1520 = vmatpush1.msra.mxu0 0.0
    %1521 = vmatprep.subr.mxu0 0.0
    %1522 = vmatpush1.msra.mxu0 0.0
    %1523 = vmatprep.subr.mxu0 0.0
    %1524 = vmatpush1.msra.mxu0 0.0
    %1525 = vmatprep.subr.mxu0 0.0
    %1526 = vmatpush1.msra.mxu0 0.0
    %1527 = vmatprep.subr.mxu0 0.0
    %1528 = vmatpush1.msra.mxu0 0.0
    %1529 = vmatprep.subr.mxu0 0.0
    %1530 = vmatpush1.msra.mxu0 0.0
    %1531 = vmatprep.subr.mxu0 0.0
    %1532 = vmatpush1.msra.mxu0 0.0
    %1533 = vmatprep.subr.mxu0 0.0
    %1534 = vmatpush1.msra.mxu0 0.0
    %1535 = vmatprep.subr.mxu0 0.0
    %1536 = vmatpush1.msra.mxu0 0.0
    %1537 = vmatprep.subr.mxu0 0.0
    %1538 = vmatpush1.msra.mxu0 0.0
    %1539 = vmatprep.subr.mxu0 0.0
    %1540 = vmatpush1.msra.mxu0 0.0
    %1541 = vmatprep.subr.mxu0 0.0
    %1542 = vmatpush1.msra.mxu0 0.0
    %1543 = vmatprep.subr.mxu0 0.0
    %1544 = vmatpush1.msra.mxu0 0.0
    %1545 = vmatprep.mubr.f32.mxu0 0.0
    %v1546 = vand.u32 %v1190, 4294901760
    %v1547 = vsub.f32 %v1190, %v1546
    %1548 = vmatmul.mubr.f32.gmra.mrb[0].mxu0 %v1547
    %v1549 = vpop.f32.mrb[0].mxu0
    %v1550 = vadd.f32 %v1446, %v1549
    %v1551 = vpop.f32.mrb[0].mxu0
    %1552 = vdwg.mxu0
    %1553 = vmatprep.subr.mxu0 0.0
    %v1554 = vand.u32 %v1191, 4294901760
    %1555 = vmatpush1.msra.mxu0 %v1554
    %1556 = vmatprep.subr.mxu0 0.0
    %v1557 = vand.u32 %v1192, 4294901760
    %1558 = vmatpush1.msra.mxu0 %v1557
    %1559 = vmatprep.subr.mxu0 0.0
    %v1560 = vand.u32 %v1193, 4294901760
    %1561 = vmatpush1.msra.mxu0 %v1560
    %1562 = vmatprep.subr.mxu0 0.0
    %v1563 = vand.u32 %v1194, 4294901760
    %1564 = vmatpush1.msra.mxu0 %v1563
    %1565 = vmatprep.subr.mxu0 0.0
    %v1566 = vand.u32 %v1195, 4294901760
    %1567 = vmatpush1.msra.mxu0 %v1566
    %1568 = vmatprep.subr.mxu0 0.0
    %v1569 = vand.u32 %v1196, 4294901760
    %1570 = vmatpush1.msra.mxu0 %v1569
    %1571 = vmatprep.subr.mxu0 0.0
    %v1572 = vand.u32 %v1197, 4294901760
    %1573 = vmatpush1.msra.mxu0 %v1572
    %1574 = vmatprep.subr.mxu0 0.0
    %v1575 = vand.u32 %v1198, 4294901760
    %1576 = vmatpush1.msra.mxu0 %v1575
    %1577 = vmatprep.subr.mxu0 0.0
    %v1578 = vand.u32 %v1199, 4294901760
    %1579 = vmatpush1.msra.mxu0 %v1578
    %1580 = vmatprep.subr.mxu0 0.0
    %v1581 = vand.u32 %v1200, 4294901760
    %1582 = vmatpush1.msra.mxu0 %v1581
    %1583 = vmatprep.subr.mxu0 0.0
    %v1584 = vand.u32 %v1201, 4294901760
    %1585 = vmatpush1.msra.mxu0 %v1584
    %1586 = vmatprep.subr.mxu0 0.0
    %v1587 = vand.u32 %v1202, 4294901760
    %1588 = vmatpush1.msra.mxu0 %v1587
    %1589 = vmatprep.subr.mxu0 0.0
    %v1590 = vand.u32 %v1203, 4294901760
    %1591 = vmatpush1.msra.mxu0 %v1590
    %1592 = vmatprep.subr.mxu0 0.0
    %v1593 = vand.u32 %v1204, 4294901760
    %1594 = vmatpush1.msra.mxu0 %v1593
    %1595 = vmatprep.subr.mxu0 0.0
    %v1596 = vand.u32 %v1205, 4294901760
    %1597 = vmatpush1.msra.mxu0 %v1596
    %1598 = vmatprep.subr.mxu0 0.0
    %v1599 = vand.u32 %v1206, 4294901760
    %1600 = vmatpush1.msra.mxu0 %v1599
    %1601 = vmatprep.subr.mxu0 0.0
    %1602 = vmatpush1.msra.mxu0 0.0
    %1603 = vmatprep.subr.mxu0 0.0
    %1604 = vmatpush1.msra.mxu0 0.0
    %1605 = vmatprep.subr.mxu0 0.0
    %1606 = vmatpush1.msra.mxu0 0.0
    %1607 = vmatprep.subr.mxu0 0.0
    %1608 = vmatpush1.msra.mxu0 0.0
    %1609 = vmatprep.subr.mxu0 0.0
    %1610 = vmatpush1.msra.mxu0 0.0
    %1611 = vmatprep.subr.mxu0 0.0
    %1612 = vmatpush1.msra.mxu0 0.0
    %1613 = vmatprep.subr.mxu0 0.0
    %1614 = vmatpush1.msra.mxu0 0.0
    %1615 = vmatprep.subr.mxu0 0.0
    %1616 = vmatpush1.msra.mxu0 0.0
    %1617 = vmatprep.subr.mxu0 0.0
    %1618 = vmatpush1.msra.mxu0 0.0
    %1619 = vmatprep.subr.mxu0 0.0
    %1620 = vmatpush1.msra.mxu0 0.0
    %1621 = vmatprep.subr.mxu0 0.0
    %1622 = vmatpush1.msra.mxu0 0.0
    %1623 = vmatprep.subr.mxu0 0.0
    %1624 = vmatpush1.msra.mxu0 0.0
    %1625 = vmatprep.subr.mxu0 0.0
    %1626 = vmatpush1.msra.mxu0 0.0
    %1627 = vmatprep.subr.mxu0 0.0
    %1628 = vmatpush1.msra.mxu0 0.0
    %1629 = vmatprep.subr.mxu0 0.0
    %1630 = vmatpush1.msra.mxu0 0.0
    %1631 = vmatprep.subr.mxu0 0.0
    %1632 = vmatpush1.msra.mxu0 0.0
    %1633 = vmatprep.mubr.f32.mxu0 0.0
    %v1634 = vand.u32 %v1190, 4294901760
    %v1635 = vsub.f32 %v1190, %v1634
    %v1636 = vand.u32 %v1635, 4294901760
    %1637 = vmatmul.mubr.f32.gmra.mrb[0].mxu0 %v1636
    %v1638 = vpop.f32.mrb[0].mxu0
    %v1639 = vadd.f32 %v1550, %v1638
    %v1640 = vpop.f32.mrb[0].mxu0
    %1641 = vdwg.mxu0
    %1642 = vmatprep.subr.mxu0 0.0
    %v1643 = vand.u32 %v1191, 4294901760
    %v1644 = vsub.f32 %v1191, %v1643
    %v1645 = vand.u32 %v1644, 4294901760
    %1646 = vmatpush1.msra.mxu0 %v1645
    %1647 = vmatprep.subr.mxu0 0.0
    %v1648 = vand.u32 %v1192, 4294901760
    %v1649 = vsub.f32 %v1192, %v1648
    %v1650 = vand.u32 %v1649, 4294901760
    %1651 = vmatpush1.msra.mxu0 %v1650
    %1652 = vmatprep.subr.mxu0 0.0
    %v1653 = vand.u32 %v1193, 4294901760
    %v1654 = vsub.f32 %v1193, %v1653
    %v1655 = vand.u32 %v1654, 4294901760
    %1656 = vmatpush1.msra.mxu0 %v1655
    %1657 = vmatprep.subr.mxu0 0.0
    %v1658 = vand.u32 %v1194, 4294901760
    %v1659 = vsub.f32 %v1194, %v1658
    %v1660 = vand.u32 %v1659, 4294901760
    %1661 = vmatpush1.msra.mxu0 %v1660
    %1662 = vmatprep.subr.mxu0 0.0
    %v1663 = vand.u32 %v1195, 4294901760
    %v1664 = vsub.f32 %v1195, %v1663
    %v1665 = vand.u32 %v1664, 4294901760
    %1666 = vmatpush1.msra.mxu0 %v1665
    %1667 = vmatprep.subr.mxu0 0.0
    %v1668 = vand.u32 %v1196, 4294901760
    %v1669 = vsub.f32 %v1196, %v1668
    %v1670 = vand.u32 %v1669, 4294901760
    %1671 = vmatpush1.msra.mxu0 %v1670
    %1672 = vmatprep.subr.mxu0 0.0
    %v1673 = vand.u32 %v1197, 4294901760
    %v1674 = vsub.f32 %v1197, %v1673
    %v1675 = vand.u32 %v1674, 4294901760
    %1676 = vmatpush1.msra.mxu0 %v1675
    %1677 = vmatprep.subr.mxu0 0.0
    %v1678 = vand.u32 %v1198, 4294901760
    %v1679 = vsub.f32 %v1198, %v1678
    %v1680 = vand.u32 %v1679, 4294901760
    %1681 = vmatpush1.msra.mxu0 %v1680
    %1682 = vmatprep.subr.mxu0 0.0
    %v1683 = vand.u32 %v1199, 4294901760
    %v1684 = vsub.f32 %v1199, %v1683
    %v1685 = vand.u32 %v1684, 4294901760
    %1686 = vmatpush1.msra.mxu0 %v1685
    %1687 = vmatprep.subr.mxu0 0.0
    %v1688 = vand.u32 %v1200, 4294901760
    %v1689 = vsub.f32 %v1200, %v1688
    %v1690 = vand.u32 %v1689, 4294901760
    %1691 = vmatpush1.msra.mxu0 %v1690
    %1692 = vmatprep.subr.mxu0 0.0
    %v1693 = vand.u32 %v1201, 4294901760
    %v1694 = vsub.f32 %v1201, %v1693
    %v1695 = vand.u32 %v1694, 4294901760
    %1696 = vmatpush1.msra.mxu0 %v1695
    %1697 = vmatprep.subr.mxu0 0.0
    %v1698 = vand.u32 %v1202, 4294901760
    %v1699 = vsub.f32 %v1202, %v1698
    %v1700 = vand.u32 %v1699, 4294901760
    %1701 = vmatpush1.msra.mxu0 %v1700
    %1702 = vmatprep.subr.mxu0 0.0
    %v1703 = vand.u32 %v1203, 4294901760
    %v1704 = vsub.f32 %v1203, %v1703
    %v1705 = vand.u32 %v1704, 4294901760
    %1706 = vmatpush1.msra.mxu0 %v1705
    %1707 = vmatprep.subr.mxu0 0.0
    %v1708 = vand.u32 %v1204, 4294901760
    %v1709 = vsub.f32 %v1204, %v1708
    %v1710 = vand.u32 %v1709, 4294901760
    %1711 = vmatpush1.msra.mxu0 %v1710
    %1712 = vmatprep.subr.mxu0 0.0
    %v1713 = vand.u32 %v1205, 4294901760
    %v1714 = vsub.f32 %v1205, %v1713
    %v1715 = vand.u32 %v1714, 4294901760
    %1716 = vmatpush1.msra.mxu0 %v1715
    %1717 = vmatprep.subr.mxu0 0.0
    %v1718 = vand.u32 %v1206, 4294901760
    %v1719 = vsub.f32 %v1206, %v1718
    %v1720 = vand.u32 %v1719, 4294901760
    %1721 = vmatpush1.msra.mxu0 %v1720
    %1722 = vmatprep.subr.mxu0 0.0
    %1723 = vmatpush1.msra.mxu0 0.0
    %1724 = vmatprep.subr.mxu0 0.0
    %1725 = vmatpush1.msra.mxu0 0.0
    %1726 = vmatprep.subr.mxu0 0.0
    %1727 = vmatpush1.msra.mxu0 0.0
    %1728 = vmatprep.subr.mxu0 0.0
    %1729 = vmatpush1.msra.mxu0 0.0
    %1730 = vmatprep.subr.mxu0 0.0
    %1731 = vmatpush1.msra.mxu0 0.0
    %1732 = vmatprep.subr.mxu0 0.0
    %1733 = vmatpush1.msra.mxu0 0.0
    %1734 = vmatprep.subr.mxu0 0.0
    %1735 = vmatpush1.msra.mxu0 0.0
    %1736 = vmatprep.subr.mxu0 0.0
    %1737 = vmatpush1.msra.mxu0 0.0
    %1738 = vmatprep.subr.mxu0 0.0
    %1739 = vmatpush1.msra.mxu0 0.0
    %1740 = vmatprep.subr.mxu0 0.0
    %1741 = vmatpush1.msra.mxu0 0.0
    %1742 = vmatprep.subr.mxu0 0.0
    %1743 = vmatpush1.msra.mxu0 0.0
    %1744 = vmatprep.subr.mxu0 0.0
    %1745 = vmatpush1.msra.mxu0 0.0
    %1746 = vmatprep.subr.mxu0 0.0
    %1747 = vmatpush1.msra.mxu0 0.0
    %1748 = vmatprep.subr.mxu0 0.0
    %1749 = vmatpush1.msra.mxu0 0.0
    %1750 = vmatprep.subr.mxu0 0.0
    %1751 = vmatpush1.msra.mxu0 0.0
    %1752 = vmatprep.subr.mxu0 0.0
    %1753 = vmatpush1.msra.mxu0 0.0
    %1754 = vmatprep.mubr.f32.mxu0 0.0
    %v1755 = vand.u32 %v1190, 4294901760
    %1756 = vmatmul.mubr.f32.gmra.mrb[0].mxu0 %v1755
    %v1757 = vpop.f32.mrb[0].mxu0
    %v1758 = vadd.f32 %v1639, %v1757
    %v1759 = vpop.f32.mrb[0].mxu0
    %1760 = vdwg.mxu0
    %1761 = vmatprep.subr.mxu0 0.0
    %v1762 = vand.u32 %v1191, 4294901760
    %1763 = vmatpush1.msra.mxu0 %v1762
    %1764 = vmatprep.subr.mxu0 0.0
    %v1765 = vand.u32 %v1192, 4294901760
    %1766 = vmatpush1.msra.mxu0 %v1765
    %1767 = vmatprep.subr.mxu0 0.0
    %v1768 = vand.u32 %v1193, 4294901760
    %1769 = vmatpush1.msra.mxu0 %v1768
    %1770 = vmatprep.subr.mxu0 0.0
    %v1771 = vand.u32 %v1194, 4294901760
    %1772 = vmatpush1.msra.mxu0 %v1771
    %1773 = vmatprep.subr.mxu0 0.0
    %v1774 = vand.u32 %v1195, 4294901760
    %1775 = vmatpush1.msra.mxu0 %v1774
    %1776 = vmatprep.subr.mxu0 0.0
    %v1777 = vand.u32 %v1196, 4294901760
    %1778 = vmatpush1.msra.mxu0 %v1777
    %1779 = vmatprep.subr.mxu0 0.0
    %v1780 = vand.u32 %v1197, 4294901760
    %1781 = vmatpush1.msra.mxu0 %v1780
    %1782 = vmatprep.subr.mxu0 0.0
    %v1783 = vand.u32 %v1198, 4294901760
    %1784 = vmatpush1.msra.mxu0 %v1783
    %1785 = vmatprep.subr.mxu0 0.0
    %v1786 = vand.u32 %v1199, 4294901760
    %1787 = vmatpush1.msra.mxu0 %v1786
    %1788 = vmatprep.subr.mxu0 0.0
    %v1789 = vand.u32 %v1200, 4294901760
    %1790 = vmatpush1.msra.mxu0 %v1789
    %1791 = vmatprep.subr.mxu0 0.0
    %v1792 = vand.u32 %v1201, 4294901760
    %1793 = vmatpush1.msra.mxu0 %v1792
    %1794 = vmatprep.subr.mxu0 0.0
    %v1795 = vand.u32 %v1202, 4294901760
    %1796 = vmatpush1.msra.mxu0 %v1795
    %1797 = vmatprep.subr.mxu0 0.0
    %v1798 = vand.u32 %v1203, 4294901760
    %1799 = vmatpush1.msra.mxu0 %v1798
    %1800 = vmatprep.subr.mxu0 0.0
    %v1801 = vand.u32 %v1204, 4294901760
    %1802 = vmatpush1.msra.mxu0 %v1801
    %1803 = vmatprep.subr.mxu0 0.0
    %v1804 = vand.u32 %v1205, 4294901760
    %1805 = vmatpush1.msra.mxu0 %v1804
    %1806 = vmatprep.subr.mxu0 0.0
    %v1807 = vand.u32 %v1206, 4294901760
    %1808 = vmatpush1.msra.mxu0 %v1807
    %1809 = vmatprep.subr.mxu0 0.0
    %1810 = vmatpush1.msra.mxu0 0.0
    %1811 = vmatprep.subr.mxu0 0.0
    %1812 = vmatpush1.msra.mxu0 0.0
    %1813 = vmatprep.subr.mxu0 0.0
    %1814 = vmatpush1.msra.mxu0 0.0
    %1815 = vmatprep.subr.mxu0 0.0
    %1816 = vmatpush1.msra.mxu0 0.0
    %1817 = vmatprep.subr.mxu0 0.0
    %1818 = vmatpush1.msra.mxu0 0.0
    %1819 = vmatprep.subr.mxu0 0.0
    %1820 = vmatpush1.msra.mxu0 0.0
    %1821 = vmatprep.subr.mxu0 0.0
    %1822 = vmatpush1.msra.mxu0 0.0
    %1823 = vmatprep.subr.mxu0 0.0
    %1824 = vmatpush1.msra.mxu0 0.0
    %1825 = vmatprep.subr.mxu0 0.0
    %1826 = vmatpush1.msra.mxu0 0.0
    %1827 = vmatprep.subr.mxu0 0.0
    %1828 = vmatpush1.msra.mxu0 0.0
    %1829 = vmatprep.subr.mxu0 0.0
    %1830 = vmatpush1.msra.mxu0 0.0
    %1831 = vmatprep.subr.mxu0 0.0
    %1832 = vmatpush1.msra.mxu0 0.0
    %1833 = vmatprep.subr.mxu0 0.0
    %1834 = vmatpush1.msra.mxu0 0.0
    %1835 = vmatprep.subr.mxu0 0.0
    %1836 = vmatpush1.msra.mxu0 0.0
    %1837 = vmatprep.subr.mxu0 0.0
    %1838 = vmatpush1.msra.mxu0 0.0
    %1839 = vmatprep.subr.mxu0 0.0
    %1840 = vmatpush1.msra.mxu0 0.0
    %1841 = vmatprep.mubr.f32.mxu0 0.0
    %v1842 = vand.u32 %v1190, 4294901760
    %1843 = vmatmul.mubr.f32.gmra.mrb[0].mxu0 %v1842
    %v1844 = vpop.f32.mrb[0].mxu0
    %v1845 = vadd.f32 %v1758, %v1844
    %v1846 = vpop.f32.mrb[0].mxu0
    %1847 = vdwg.mxu0
    %v1848 = vmul.f32 %v1845, %v1845
    %v1850 = vrot.slane %v1848, 7
    %v1852 = vsub.f32 %v1845, %v1850
    %v1853 = vadd.f32 %v1852, 1e-05
    %v1854 = vrsqrt.pop %v1853
    %v1856 = vrot.slane %v1166, 7
    %v1858 = vmul.f32 %v1854, %v1856
    %v1860 = vrot.slane %v1858, 1
    %v1862 = vmul.f32 %v1845, %v1860
    %v1863 = vsub.f32 %v1167, %v1862
    %v1864 = vlaneseq
    %v1865 = vshrl.u32 %v1864, 7
    %v1866 = vsub.s32 1, %v1865
    %v1867 = vrot.slane %v1858, %v1866
    %v1868 = vmul.f32 %v1152, %v1867
    %v1869 = vmul.f32 %v1155, %v1867
    %v1870 = vmul.f32 %v1160, %v1867
    %v1871 = vmul.f32 %v1163, %v1867
    %v1872 = vlaneseq
    %v1873 = vshrl.u32 %v1872, 7
    %v1874 = vsub.s32 0, %v1873
    %v1875 = vrot.slane %v1863, %v1874
    %v1876 = vadd.f32 %v1868, %v1875
    %v1877 = vadd.f32 %v1869, %v1875
    %v1878 = vadd.f32 %v1870, %v1875
    %v1879 = vadd.f32 %v1871, %v1875
    %s1880 = sld [smem:[#allocation4]]
    %vm1881 = vcmp.ge.f32.partialorder %v1876, 0.0
    %vm1882 = vcmp.ge.f32.partialorder %v1877, 0.0
    %vm1883 = vcmp.ge.f32.partialorder %v1878, 0.0
    %vm1884 = vcmp.ge.f32.partialorder %v1879, 0.0
    %v1885 = vstv %s1880
    %v1886 = vmul.f32 %v1885, %v1876
    %v1887 = vmul.f32 %v1885, %v1877
    %v1888 = vmul.f32 %v1885, %v1878
    %v1889 = vmul.f32 %v1885, %v1879
    %v1890 = vsel %vm1881, %v1876, %v1886
    %v1891 = vsel %vm1882, %v1877, %v1887
    %v1892 = vsel %vm1883, %v1878, %v1888
    %v1893 = vsel %vm1884, %v1879, %v1889
    %v1898 = vrot.slane %v1890, 7
    %v1899 = vrot.slane %v1891, 7
    %v1900 = vsel %vm638, %v1898, %v1899
    %v1901 = vrot.slane %v1892, 7
    %v1902 = vrot.slane %v1893, 7
    %v1903 = vsel %vm638, %v1901, %v1902
    %1904 = vrot.lane.b32.xlu0 %v1898, 8
    %v1905 = vpop.permute.xlu0 %1904
    %1906 = vrot.lane.b32.xlu0 %v1900, 8
    %v1907 = vpop.permute.xlu0 %1906
    %1908 = vrot.lane.b32.xlu0 %v1899, 8
    %v1909 = vpop.permute.xlu0 %1908
    %1910 = vrot.lane.b32.xlu0 %v1901, 8
    %v1911 = vpop.permute.xlu0 %1910
    %1912 = vrot.lane.b32.xlu0 %v1903, 8
    %v1913 = vpop.permute.xlu0 %1912
    %1914 = vrot.lane.b32.xlu0 %v1902, 8
    %v1915 = vpop.permute.xlu0 %1914
    %1922 = vst.msk [vmem:[#allocation3] sm:$0xfe] %vm663, %v1905
    %1923 = vst.msk [vmem:[#allocation3 + $0x8] sm:$0xfe] %vm665, %v1905
    %1924 = vst.msk [vmem:[#allocation3 + $0x10] sm:$0xff] %vm667, %v1907
    %1925 = vst.msk [vmem:[#allocation3 + $0x18] sm:$0xff] %vm669, %v1907
    %1926 = vst.msk [vmem:[#allocation3 + $0x20] sm:$0x1] %vm671, %v1909
    %1927 = vst.msk [vmem:[#allocation3 + $0x28] sm:$0x1] %vm673, %v1909
    %1928 = vst.msk [vmem:[#allocation3 + $0x30] sm:$0xfe] %vm663, %v1911
    %1929 = vst.msk [vmem:[#allocation3 + $0x38] sm:$0xfe] %vm665, %v1911
    %1930 = vst.msk [vmem:[#allocation3 + $0x40] sm:$0xff] %vm667, %v1913
    %1931 = vst.msk [vmem:[#allocation3 + $0x48] sm:$0xff] %vm669, %v1913
    %1932 = vst.msk [vmem:[#allocation3 + $0x50] sm:$0x1] %vm671, %v1915
    %1933 = vst.msk [vmem:[#allocation3 + $0x58] sm:$0x1] %vm673, %v1915
    %v1934 = vld [vmem:[#allocation3] sm:$0xff]
    %v1935 = vld [vmem:[#allocation3 + $0x8] sm:$0xff]
    %v1936 = vld [vmem:[#allocation3 + $0x10] sm:$0xff]
    %v1937 = vld [vmem:[#allocation3 + $0x18] sm:$0xff]
    %v1938 = vld [vmem:[#allocation3 + $0x30] sm:$0xff]
    %v1939 = vld [vmem:[#allocation3 + $0x38] sm:$0xff]
    %v1940 = vld [vmem:[#allocation3 + $0x40] sm:$0xff]
    %v1941 = vld [vmem:[#allocation3 + $0x48] sm:$0xff]
    %v1942 = vld [vmem:[#allocation3] sm:$0xfe]
    %v1943 = vld [vmem:[#allocation3 + $0x8] sm:$0xfe]
    %v1944 = vld [vmem:[#allocation3 + $0x20] sm:$0x1]
    %v1945 = vld [vmem:[#allocation3 + $0x28] sm:$0x1]
    %v1946 = vld [vmem:[#allocation3 + $0x30] sm:$0xfe]
    %v1947 = vld [vmem:[#allocation3 + $0x38] sm:$0xfe]
    %v1948 = vld [vmem:[#allocation3 + $0x50] sm:$0x1]
    %v1949 = vld [vmem:[#allocation3 + $0x58] sm:$0x1]
    %v1950 = vld [vmem:[#allocation3] sm:$0xfc]
    %v1951 = vld [vmem:[#allocation3 + $0x8] sm:$0xfc]
    %v1952 = vld [vmem:[#allocation3 + $0x20] sm:$0x3]
    %v1953 = vld [vmem:[#allocation3 + $0x28] sm:$0x3]
    %v1954 = vld [vmem:[#allocation3 + $0x30] sm:$0xfc]
    %v1955 = vld [vmem:[#allocation3 + $0x38] sm:$0xfc]
    %v1956 = vld [vmem:[#allocation3 + $0x50] sm:$0x3]
    %v1957 = vld [vmem:[#allocation3 + $0x58] sm:$0x3]
    %v1958 = vld [vmem:[%s5 + $0x4] sm:$0x1]
    %v1971 = vrot.slane %v1942, 1
    %v1972 = vrot.slane %v1936, 1
    %v1973 = vsel %vm718, %v1971, %v1972
    %v1974 = vrot.slane %v1943, 1
    %v1975 = vrot.slane %v1937, 1
    %v1976 = vsel %vm718, %v1974, %v1975
    %v1977 = vrot.slane %v1944, 1
    %v1978 = vsel %vm718, %v1972, %v1977
    %v1979 = vrot.slane %v1945, 1
    %v1980 = vsel %vm718, %v1975, %v1979
    %v1981 = vrot.slane %v1946, 1
    %v1982 = vrot.slane %v1940, 1
    %v1983 = vsel %vm718, %v1981, %v1982
    %v1984 = vrot.slane %v1947, 1
    %v1985 = vrot.slane %v1941, 1
    %v1986 = vsel %vm718, %v1984, %v1985
    %v1987 = vrot.slane %v1948, 1
    %v1988 = vsel %vm718, %v1982, %v1987
    %v1989 = vrot.slane %v1949, 1
    %v1990 = vsel %vm718, %v1985, %v1989
    %1991 = vrot.lane.b32.xlu0 %v1973, 16
    %v1992 = vpop.permute.xlu0 %1991
    %1993 = vrot.lane.b32.xlu0 %v1976, 16
    %v1994 = vpop.permute.xlu0 %1993
    %1995 = vrot.lane.b32.xlu0 %v1978, 16
    %v1996 = vpop.permute.xlu0 %1995
    %1997 = vrot.lane.b32.xlu0 %v1980, 16
    %v1998 = vpop.permute.xlu0 %1997
    %1999 = vrot.lane.b32.xlu0 %v1983, 16
    %v2000 = vpop.permute.xlu0 %1999
    %2001 = vrot.lane.b32.xlu0 %v1986, 16
    %v2002 = vpop.permute.xlu0 %2001
    %2003 = vrot.lane.b32.xlu0 %v1988, 16
    %v2004 = vpop.permute.xlu0 %2003
    %2005 = vrot.lane.b32.xlu0 %v1990, 16
    %v2006 = vpop.permute.xlu0 %2005
    %v2007 = vsel %vm67, %v1992, %v1994
    %v2008 = vsel %vm67, %v1996, %v1998
    %v2009 = vsel %vm67, %v2000, %v2002
    %v2010 = vsel %vm67, %v2004, %v2006
    %v2027 = vrot.slane %v1950, 2
    %v2028 = vrot.slane %v1936, 2
    %v2029 = vsel %vm775, %v2027, %v2028
    %v2030 = vrot.slane %v1951, 2
    %v2031 = vrot.slane %v1937, 2
    %v2032 = vsel %vm775, %v2030, %v2031
    %v2033 = vrot.slane %v1952, 2
    %v2034 = vsel %vm775, %v2028, %v2033
    %v2035 = vrot.slane %v1953, 2
    %v2036 = vsel %vm775, %v2031, %v2035
    %v2037 = vrot.slane %v1954, 2
    %v2038 = vrot.slane %v1940, 2
    %v2039 = vsel %vm775, %v2037, %v2038
    %v2040 = vrot.slane %v1955, 2
    %v2041 = vrot.slane %v1941, 2
    %v2042 = vsel %vm775, %v2040, %v2041
    %v2043 = vrot.slane %v1956, 2
    %v2044 = vsel %vm775, %v2038, %v2043
    %v2045 = vrot.slane %v1957, 2
    %v2046 = vsel %vm775, %v2041, %v2045
    %2047 = vrot.lane.b32.xlu0 %v2029, 32
    %v2048 = vpop.permute.xlu0 %2047
    %2049 = vrot.lane.b32.xlu0 %v2032, 32
    %v2050 = vpop.permute.xlu0 %2049
    %2051 = vrot.lane.b32.xlu0 %v2034, 32
    %v2052 = vpop.permute.xlu0 %2051
    %2053 = vrot.lane.b32.xlu0 %v2036, 32
    %v2054 = vpop.permute.xlu0 %2053
    %2055 = vrot.lane.b32.xlu0 %v2039, 32
    %v2056 = vpop.permute.xlu0 %2055
    %2057 = vrot.lane.b32.xlu0 %v2042, 32
    %v2058 = vpop.permute.xlu0 %2057
    %2059 = vrot.lane.b32.xlu0 %v2044, 32
    %v2060 = vpop.permute.xlu0 %2059
    %2061 = vrot.lane.b32.xlu0 %v2046, 32
    %v2062 = vpop.permute.xlu0 %2061
    %v2063 = vsel %vm812, %v2048, %v2050
    %v2064 = vsel %vm812, %v2052, %v2054
    %v2065 = vsel %vm812, %v2056, %v2058
    %v2066 = vsel %vm812, %v2060, %v2062
    %v2075 = vsel %vm67, %v1935, %v1992
    %v2076 = vsel %vm67, %v1937, %v1996
    %v2077 = vsel %vm67, %v1939, %v2000
    %v2078 = vsel %vm67, %v1941, %v2004
    %v2079 = vsel %vm812, %v2007, %v2048
    %v2080 = vsel %vm812, %v2008, %v2052
    %v2081 = vsel %vm812, %v2009, %v2056
    %v2082 = vsel %vm812, %v2010, %v2060
    %v2083 = vpack.c.bf16 %v1936, %v1934
    %v2084 = vpack.c.bf16 %v2076, %v2075
    %v2085 = vpack.c.bf16 %v2080, %v2079
    %v2086 = vpack.c.bf16 %v2064, %v2063
    %v2087 = vpack.c.bf16 %v1940, %v1938
    %v2088 = vpack.c.bf16 %v2078, %v2077
    %v2089 = vpack.c.bf16 %v2082, %v2081
    %v2090 = vpack.c.bf16 %v2066, %v2065
    %v2091 = vld [vmem:[%s3] sm:$0xf]
    %v2092 = vld [vmem:[%s3 + $0x4] sm:$0xf]
    %v2093 = vld [vmem:[%s3 + $0x8] sm:$0xf]
    %v2094 = vld [vmem:[%s3 + $0xc] sm:$0xf]
    %v2095 = vld [vmem:[%s3 + $0x10] sm:$0xf]
    %v2096 = vld [vmem:[%s3 + $0x14] sm:$0xf]
    %v2097 = vld [vmem:[%s3 + $0x18] sm:$0xf]
    %v2098 = vld [vmem:[%s3 + $0x1c] sm:$0xf]
    %v2099 = vld [vmem:[%s3 + $0x20] sm:$0xf]
    %v2100 = vld [vmem:[%s3 + $0x24] sm:$0xf]
    %v2101 = vld [vmem:[%s3 + $0x28] sm:$0xf]
    %v2102 = vld [vmem:[%s3 + $0x2c] sm:$0xf]
    %v2103 = vld [vmem:[%s3 + $0x30] sm:$0xf]
    %v2104 = vld [vmem:[%s3 + $0x34] sm:$0xf]
    %v2105 = vld [vmem:[%s3 + $0x38] sm:$0xf]
    %v2106 = vld [vmem:[%s3 + $0x3c] sm:$0xf]
    %v2107 = vld [vmem:[%s3 + $0x40] sm:$0xf]
    %v2108 = vld [vmem:[%s3 + $0x44] sm:$0xf]
    %v2109 = vld [vmem:[%s3 + $0x48] sm:$0xf]
    %v2110 = vld [vmem:[%s3 + $0x4c] sm:$0xf]
    %v2111 = vld [vmem:[%s3 + $0x50] sm:$0xf]
    %v2112 = vld [vmem:[%s3 + $0x54] sm:$0xf]
    %v2113 = vld [vmem:[%s3 + $0x58] sm:$0xf]
    %v2114 = vld [vmem:[%s3 + $0x5c] sm:$0xf]
    %v2115 = vld [vmem:[%s3 + $0x60] sm:$0xf]
    %v2116 = vld [vmem:[%s3 + $0x64] sm:$0xf]
    %v2117 = vld [vmem:[%s3 + $0x68] sm:$0xf]
    %v2118 = vld [vmem:[%s3 + $0x6c] sm:$0xf]
    %v2119 = vld [vmem:[%s3 + $0x70] sm:$0xf]
    %v2120 = vld [vmem:[%s3 + $0x74] sm:$0xf]
    %v2121 = vld [vmem:[%s3 + $0x78] sm:$0xf]
    %v2122 = vld [vmem:[%s3 + $0x7c] sm:$0xf]
    %v2123 = vld [vmem:[%s3 + $0x80] sm:$0xf]
    %v2124 = vld [vmem:[%s3 + $0x84] sm:$0xf]
    %v2125 = vld [vmem:[%s3 + $0x88] sm:$0xf]
    %v2126 = vld [vmem:[%s3 + $0x8c] sm:$0xf]
    %v2127 = vld [vmem:[%s3 + $0x90] sm:$0xf]
    %v2128 = vld [vmem:[%s3 + $0x94] sm:$0xf]
    %v2129 = vld [vmem:[%s3 + $0x98] sm:$0xf]
    %v2130 = vld [vmem:[%s3 + $0x9c] sm:$0xf]
    %v2131 = vld [vmem:[%s3 + $0xa0] sm:$0xf]
    %v2132 = vld [vmem:[%s3 + $0xa4] sm:$0xf]
    %v2133 = vld [vmem:[%s3 + $0xa8] sm:$0xf]
    %v2134 = vld [vmem:[%s3 + $0xac] sm:$0xf]
    %v2135 = vld [vmem:[%s3 + $0xb0] sm:$0xf]
    %v2136 = vld [vmem:[%s3 + $0xb4] sm:$0xf]
    %v2137 = vld [vmem:[%s3 + $0xb8] sm:$0xf]
    %v2138 = vld [vmem:[%s3 + $0xbc] sm:$0xf]
    %v2139 = vld [vmem:[%s3 + $0xc0] sm:$0xf]
    %v2140 = vld [vmem:[%s3 + $0xc4] sm:$0xf]
    %v2141 = vld [vmem:[%s3 + $0xc8] sm:$0xf]
    %v2142 = vld [vmem:[%s3 + $0xcc] sm:$0xf]
    %v2143 = vld [vmem:[%s3 + $0xd0] sm:$0xf]
    %v2144 = vld [vmem:[%s3 + $0xd4] sm:$0xf]
    %v2145 = vlaneseq
    %v2146 = vshrl.u32 %v2145, 7
    %v2147 = vsub.s32 0, %v2146
    %v2148 = vrot.slane %v1958, %v2147
    %v2203 = vunpack.c.l.b16 %v2091
    %v2204 = vunpack.c.l.b16 %v2092
    %v2205 = vunpack.c.l.b16 %v2093
    %v2206 = vunpack.c.l.b16 %v2094
    %v2207 = vunpack.c.l.b16 %v2095
    %v2208 = vunpack.c.l.b16 %v2096
    %v2209 = vunpack.c.l.b16 %v2097
    %v2210 = vunpack.c.l.b16 %v2098
    %v2211 = vunpack.c.l.b16 %v2099
    %v2212 = vunpack.c.l.b16 %v2100
    %v2213 = vunpack.c.l.b16 %v2101
    %v2214 = vunpack.c.l.b16 %v2102
    %v2215 = vunpack.c.l.b16 %v2103
    %v2216 = vunpack.c.l.b16 %v2104
    %v2217 = vunpack.c.l.b16 %v2105
    %v2218 = vunpack.c.l.b16 %v2106
    %v2219 = vunpack.c.l.b16 %v2107
    %v2220 = vunpack.c.l.b16 %v2108
    %v2221 = vunpack.c.l.b16 %v2109
    %v2222 = vunpack.c.l.b16 %v2110
    %v2223 = vunpack.c.l.b16 %v2111
    %v2224 = vunpack.c.l.b16 %v2112
    %v2225 = vunpack.c.l.b16 %v2113
    %v2226 = vunpack.c.l.b16 %v2114
    %v2227 = vunpack.c.l.b16 %v2115
    %v2228 = vunpack.c.l.b16 %v2116
    %v2229 = vunpack.c.l.b16 %v2117
    %v2230 = vunpack.c.l.b16 %v2118
    %v2231 = vunpack.c.l.b16 %v2119
    %v2232 = vunpack.c.l.b16 %v2120
    %v2233 = vunpack.c.l.b16 %v2121
    %v2234 = vunpack.c.l.b16 %v2122
    %v2235 = vunpack.c.l.b16 %v2123
    %v2236 = vunpack.c.l.b16 %v2124
    %v2237 = vunpack.c.l.b16 %v2125
    %v2238 = vunpack.c.l.b16 %v2126
    %v2239 = vunpack.c.l.b16 %v2127
    %v2240 = vunpack.c.l.b16 %v2128
    %v2241 = vunpack.c.l.b16 %v2129
    %v2242 = vunpack.c.l.b16 %v2130
    %v2243 = vunpack.c.l.b16 %v2131
    %v2244 = vunpack.c.l.b16 %v2132
    %v2245 = vunpack.c.l.b16 %v2133
    %v2246 = vunpack.c.l.b16 %v2134
    %v2247 = vunpack.c.l.b16 %v2135
    %v2248 = vunpack.c.l.b16 %v2136
    %v2249 = vunpack.c.l.b16 %v2137
    %v2250 = vunpack.c.l.b16 %v2138
    %v2251 = vunpack.c.l.b16 %v2139
    %v2252 = vunpack.c.l.b16 %v2140
    %v2253 = vunpack.c.l.b16 %v2141
    %v2254 = vunpack.c.l.b16 %v2142
    %v2255 = vunpack.c.l.b16 %v2143
    %v2256 = vunpack.c.l.b16 %v2144
    %v2257 = vpack.c.b16 %v2204, %v2203
    %v2258 = vpack.c.b16 %v2206, %v2205
    %v2259 = vpack.c.b16 %v2208, %v2207
    %v2260 = vpack.c.b16 %v2210, %v2209
    %v2261 = vpack.c.b16 %v2212, %v2211
    %v2262 = vpack.c.b16 %v2214, %v2213
    %v2263 = vpack.c.b16 %v2216, %v2215
    %v2264 = vpack.c.b16 %v2218, %v2217
    %v2265 = vpack.c.b16 %v2220, %v2219
    %v2266 = vpack.c.b16 %v2222, %v2221
    %v2267 = vpack.c.b16 %v2224, %v2223
    %v2268 = vpack.c.b16 %v2226, %v2225
    %v2269 = vpack.c.b16 %v2228, %v2227
    %v2270 = vpack.c.b16 %v2230, %v2229
    %v2271 = vpack.c.b16 %v2232, %v2231
    %v2272 = vpack.c.b16 %v2234, %v2233
    %v2273 = vpack.c.b16 %v2236, %v2235
    %v2274 = vpack.c.b16 %v2238, %v2237
    %v2275 = vpack.c.b16 %v2240, %v2239
    %v2276 = vpack.c.b16 %v2242, %v2241
    %v2277 = vpack.c.b16 %v2244, %v2243
    %v2278 = vpack.c.b16 %v2246, %v2245
    %v2279 = vpack.c.b16 %v2248, %v2247
    %v2280 = vpack.c.b16 %v2250, %v2249
    %v2281 = vpack.c.b16 %v2252, %v2251
    %v2282 = vpack.c.b16 %v2254, %v2253
    %v2283 = vpack.c.b16 %v2256, %v2255
    %v2312 = vsel %vm1061, %v2086, 0
    %v2315 = vsel %vm1061, %v2090, 0
    %2317 = vmatprep.subr.bf16.mxu0 0
    %2318 = vmatpush1.bf16.msra.mxu0 %v2257
    %2319 = vmatprep.subr.bf16.mxu0 0
    %2320 = vmatpush1.bf16.msra.mxu0 %v2258
    %2321 = vmatprep.subr.bf16.mxu0 0
    %2322 = vmatpush1.bf16.msra.mxu0 %v2259
    %2323 = vmatprep.subr.bf16.mxu0 0
    %2324 = vmatpush1.bf16.msra.mxu0 %v2260
    %2325 = vmatprep.subr.bf16.mxu0 0
    %2326 = vmatpush1.bf16.msra.mxu0 %v2261
    %2327 = vmatprep.subr.bf16.mxu0 0
    %2328 = vmatpush1.bf16.msra.mxu0 %v2262
    %2329 = vmatprep.subr.bf16.mxu0 0
    %2330 = vmatpush1.bf16.msra.mxu0 %v2263
    %2331 = vmatprep.subr.bf16.mxu0 0
    %2332 = vmatpush1.bf16.msra.mxu0 %v2264
    %2333 = vmatprep.subr.bf16.mxu0 0
    %2334 = vmatpush1.bf16.msra.mxu0 %v2265
    %2335 = vmatprep.subr.bf16.mxu0 0
    %2336 = vmatpush1.bf16.msra.mxu0 %v2266
    %2337 = vmatprep.subr.bf16.mxu0 0
    %2338 = vmatpush1.bf16.msra.mxu0 %v2267
    %2339 = vmatprep.subr.bf16.mxu0 0
    %2340 = vmatpush1.bf16.msra.mxu0 %v2268
    %2341 = vmatprep.subr.bf16.mxu0 0
    %2342 = vmatpush1.bf16.msra.mxu0 %v2269
    %2343 = vmatprep.subr.bf16.mxu0 0
    %2344 = vmatpush1.bf16.msra.mxu0 %v2270
    %2345 = vmatprep.subr.bf16.mxu0 0
    %2346 = vmatpush1.bf16.msra.mxu0 %v2271
    %2347 = vmatprep.subr.bf16.mxu0 0
    %2348 = vmatpush1.bf16.msra.mxu0 %v2272
    %2349 = vmatprep.mubr.bf16.mxu0 %v2084
    %2350 = vmatmul.mubr.bf16.gmra.mrb[0].mxu0 %v2083
    %v2351 = vpop.f32.mrb[0].mxu0
    %v2352 = vadd.f32 %v2148, %v2351
    %v2353 = vpop.f32.mrb[0].mxu0
    %v2354 = vpop.f32.mrb[0].mxu0
    %v2355 = vadd.f32 %v2148, %v2354
    %v2356 = vpop.f32.mrb[0].mxu0
    %2357 = vmatprep.mubr.bf16.mxu0 %v2088
    %2358 = vmatmul.mubr.bf16.gmra.mrb[0].mxu0 %v2087
    %v2359 = vpop.f32.mrb[0].mxu0
    %v2360 = vadd.f32 %v2148, %v2359
    %v2361 = vpop.f32.mrb[0].mxu0
    %v2362 = vpop.f32.mrb[0].mxu0
    %v2363 = vadd.f32 %v2148, %v2362
    %v2364 = vpop.f32.mrb[0].mxu0
    %2365 = vdwg.mxu0
    %2366 = vmatprep.subr.bf16.mxu0 0
    %2367 = vmatpush1.bf16.msra.mxu0 %v2273
    %2368 = vmatprep.subr.bf16.mxu0 0
    %2369 = vmatpush1.bf16.msra.mxu0 %v2274
    %2370 = vmatprep.subr.bf16.mxu0 0
    %2371 = vmatpush1.bf16.msra.mxu0 %v2275
    %2372 = vmatprep.subr.bf16.mxu0 0
    %2373 = vmatpush1.bf16.msra.mxu0 %v2276
    %2374 = vmatprep.subr.bf16.mxu0 0
    %2375 = vmatpush1.bf16.msra.mxu0 %v2277
    %2376 = vmatprep.subr.bf16.mxu0 0
    %2377 = vmatpush1.bf16.msra.mxu0 %v2278
    %2378 = vmatprep.subr.bf16.mxu0 0
    %2379 = vmatpush1.bf16.msra.mxu0 %v2279
    %2380 = vmatprep.subr.bf16.mxu0 0
    %2381 = vmatpush1.bf16.msra.mxu0 %v2280
    %2382 = vmatprep.subr.bf16.mxu0 0
    %2383 = vmatpush1.bf16.msra.mxu0 %v2281
    %2384 = vmatprep.subr.bf16.mxu0 0
    %2385 = vmatpush1.bf16.msra.mxu0 %v2282
    %2386 = vmatprep.subr.bf16.mxu0 0
    %2387 = vmatpush1.bf16.msra.mxu0 %v2283
    %2388 = vmatprep.subr.bf16.mxu0 0
    %2389 = vmatpush1.bf16.msra.mxu0 0
    %2390 = vmatprep.subr.bf16.mxu0 0
    %2391 = vmatpush1.bf16.msra.mxu0 0
    %2392 = vmatprep.subr.bf16.mxu0 0
    %2393 = vmatpush1.bf16.msra.mxu0 0
    %2394 = vmatprep.subr.bf16.mxu0 0
    %2395 = vmatpush1.bf16.msra.mxu0 0
    %2396 = vmatprep.subr.bf16.mxu0 0
    %2397 = vmatpush1.bf16.msra.mxu0 0
    %2398 = vmatprep.mubr.bf16.mxu0 %v2312
    %2399 = vmatmul.mubr.bf16.gmra.mrb[0].mxu0 %v2085
    %v2400 = vpop.f32.mrb[0].mxu0
    %v2401 = vadd.f32 %v2352, %v2400
    %v2402 = vpop.f32.mrb[0].mxu0
    %v2403 = vpop.f32.mrb[0].mxu0
    %v2404 = vadd.f32 %v2355, %v2403
    %v2405 = vpop.f32.mrb[0].mxu0
    %2406 = vmatprep.mubr.bf16.mxu0 %v2315
    %2407 = vmatmul.mubr.bf16.gmra.mrb[0].mxu0 %v2089
    %v2408 = vpop.f32.mrb[0].mxu0
    %v2409 = vadd.f32 %v2360, %v2408
    %v2410 = vpop.f32.mrb[0].mxu0
    %v2411 = vpop.f32.mrb[0].mxu0
    %v2412 = vadd.f32 %v2363, %v2411
    %v2413 = vpop.f32.mrb[0].mxu0
    %2414 = vdwg.mxu0
    %v2415 = vld [vmem:[%s5 + $0x5] sm:$0x1]
    %v2416 = vld [vmem:[%s5 + $0x6] sm:$0x1]
    %v2417 = vadd.f32 %v2401, %v2404
    %v2418 = vadd.f32 %v2417, %v2409
    %v2419 = vadd.f32 %v2418, %v2412
    %v2420 = vrot.slane %v2419, 4
    %v2421 = vadd.f32 %v2419, %v2420
    %v2422 = vrot.slane %v2421, 2
    %v2423 = vadd.f32 %v2421, %v2422
    %v2424 = vrot.slane %v2423, 1
    %v2425 = vadd.f32 %v2423, %v2424
    %v2426 = vmul.f32 %v2401, %v2401
    %v2427 = vmul.f32 %v2404, %v2404
    %v2428 = vmul.f32 %v2409, %v2409
    %v2429 = vmul.f32 %v2412, %v2412
    %v2430 = vadd.f32 %v2426, %v2427
    %v2431 = vadd.f32 %v2430, %v2428
    %v2432 = vadd.f32 %v2431, %v2429
    %v2433 = vrot.slane %v2432, 4
    %v2434 = vadd.f32 %v2432, %v2433
    %v2435 = vrot.slane %v2434, 2
    %v2436 = vadd.f32 %v2434, %v2435
    %v2437 = vrot.slane %v2436, 1
    %v2438 = vadd.f32 %v2436, %v2437
    %v2439 = vsel %vm638, %v2425, %v2438
    %v2440 = vld [vmem:[%s4] sm:$0xff]
    %v2441 = vld [vmem:[%s4 + $0x8] sm:$0xff]
    %v2442 = vld [vmem:[%s4 + $0x10] sm:$0xff]
    %v2443 = vld [vmem:[%s4 + $0x18] sm:$0xff]
    %v2444 = vld [vmem:[%s4 + $0x20] sm:$0xff]
    %v2445 = vld [vmem:[%s4 + $0x28] sm:$0xff]
    %v2446 = vld [vmem:[%s4 + $0x30] sm:$0xff]
    %v2447 = vld [vmem:[%s4 + $0x38] sm:$0xff]
    %v2448 = vld [vmem:[%s4 + $0x40] sm:$0xff]
    %v2449 = vld [vmem:[%s4 + $0x48] sm:$0xff]
    %v2450 = vld [vmem:[%s4 + $0x50] sm:$0xff]
    %v2451 = vld [vmem:[%s4 + $0x58] sm:$0xff]
    %v2452 = vld [vmem:[%s4 + $0x60] sm:$0xff]
    %v2453 = vld [vmem:[%s4 + $0x68] sm:$0xff]
    %v2454 = vld [vmem:[%s4 + $0x70] sm:$0xff]
    %v2455 = vld [vmem:[%s4 + $0x78] sm:$0xff]
    %2456 = vmatprep.subr.mxu0 0.0
    %v2457 = vand.u32 %v2440, 4294901760
    %2458 = vmatpush1.msra.mxu0 %v2457
    %2459 = vmatprep.subr.mxu0 0.0
    %v2460 = vand.u32 %v2441, 4294901760
    %2461 = vmatpush1.msra.mxu0 %v2460
    %2462 = vmatprep.subr.mxu0 0.0
    %v2463 = vand.u32 %v2442, 4294901760
    %2464 = vmatpush1.msra.mxu0 %v2463
    %2465 = vmatprep.subr.mxu0 0.0
    %v2466 = vand.u32 %v2443, 4294901760
    %2467 = vmatpush1.msra.mxu0 %v2466
    %2468 = vmatprep.subr.mxu0 0.0
    %v2469 = vand.u32 %v2444, 4294901760
    %2470 = vmatpush1.msra.mxu0 %v2469
    %2471 = vmatprep.subr.mxu0 0.0
    %v2472 = vand.u32 %v2445, 4294901760
    %2473 = vmatpush1.msra.mxu0 %v2472
    %2474 = vmatprep.subr.mxu0 0.0
    %v2475 = vand.u32 %v2446, 4294901760
    %2476 = vmatpush1.msra.mxu0 %v2475
    %2477 = vmatprep.subr.mxu0 0.0
    %v2478 = vand.u32 %v2447, 4294901760
    %2479 = vmatpush1.msra.mxu0 %v2478
    %2480 = vmatprep.subr.mxu0 0.0
    %v2481 = vand.u32 %v2448, 4294901760
    %2482 = vmatpush1.msra.mxu0 %v2481
    %2483 = vmatprep.subr.mxu0 0.0
    %v2484 = vand.u32 %v2449, 4294901760
    %2485 = vmatpush1.msra.mxu0 %v2484
    %2486 = vmatprep.subr.mxu0 0.0
    %v2487 = vand.u32 %v2450, 4294901760
    %2488 = vmatpush1.msra.mxu0 %v2487
    %2489 = vmatprep.subr.mxu0 0.0
    %v2490 = vand.u32 %v2451, 4294901760
    %2491 = vmatpush1.msra.mxu0 %v2490
    %2492 = vmatprep.subr.mxu0 0.0
    %v2493 = vand.u32 %v2452, 4294901760
    %2494 = vmatpush1.msra.mxu0 %v2493
    %2495 = vmatprep.subr.mxu0 0.0
    %v2496 = vand.u32 %v2453, 4294901760
    %2497 = vmatpush1.msra.mxu0 %v2496
    %2498 = vmatprep.subr.mxu0 0.0
    %v2499 = vand.u32 %v2454, 4294901760
    %2500 = vmatpush1.msra.mxu0 %v2499
    %2501 = vmatprep.subr.mxu0 0.0
    %v2502 = vand.u32 %v2455, 4294901760
    %2503 = vmatpush1.msra.mxu0 %v2502
    %2504 = vmatprep.subr.mxu0 0.0
    %2505 = vmatpush1.msra.mxu0 0.0
    %2506 = vmatprep.subr.mxu0 0.0
    %2507 = vmatpush1.msra.mxu0 0.0
    %2508 = vmatprep.subr.mxu0 0.0
    %2509 = vmatpush1.msra.mxu0 0.0
    %2510 = vmatprep.subr.mxu0 0.0
    %2511 = vmatpush1.msra.mxu0 0.0
    %2512 = vmatprep.subr.mxu0 0.0
    %2513 = vmatpush1.msra.mxu0 0.0
    %2514 = vmatprep.subr.mxu0 0.0
    %2515 = vmatpush1.msra.mxu0 0.0
    %2516 = vmatprep.subr.mxu0 0.0
    %2517 = vmatpush1.msra.mxu0 0.0
    %2518 = vmatprep.subr.mxu0 0.0
    %2519 = vmatpush1.msra.mxu0 0.0
    %2520 = vmatprep.subr.mxu0 0.0
    %2521 = vmatpush1.msra.mxu0 0.0
    %2522 = vmatprep.subr.mxu0 0.0
    %2523 = vmatpush1.msra.mxu0 0.0
    %2524 = vmatprep.subr.mxu0 0.0
    %2525 = vmatpush1.msra.mxu0 0.0
    %2526 = vmatprep.subr.mxu0 0.0
    %2527 = vmatpush1.msra.mxu0 0.0
    %2528 = vmatprep.subr.mxu0 0.0
    %2529 = vmatpush1.msra.mxu0 0.0
    %2530 = vmatprep.subr.mxu0 0.0
    %2531 = vmatpush1.msra.mxu0 0.0
    %2532 = vmatprep.subr.mxu0 0.0
    %2533 = vmatpush1.msra.mxu0 0.0
    %2534 = vmatprep.subr.mxu0 0.0
    %2535 = vmatpush1.msra.mxu0 0.0
    %2536 = vmatprep.mubr.f32.mxu0 0.0
    %v2537 = vand.u32 %v2439, 4294901760
    %v2538 = vsub.f32 %v2439, %v2537
    %v2539 = vand.u32 %v2538, 4294901760
    %v2540 = vsub.f32 %v2538, %v2539
    %v2541 = vand.u32 %v2540, 4294901760
    %2542 = vmatmul.mubr.f32.gmra.mrb[0].mxu0 %v2541
    %v2543 = vpop.f32.mrb[0].mxu0
    %v2544 = vadd.f32 0.0, %v2543
    %v2545 = vpop.f32.mrb[0].mxu0
    %2546 = vdwg.mxu0
    %2547 = vmatprep.subr.mxu0 0.0
    %v2548 = vand.u32 %v2440, 4294901760
    %v2549 = vsub.f32 %v2440, %v2548
    %v2550 = vand.u32 %v2549, 4294901760
    %v2551 = vsub.f32 %v2549, %v2550
    %v2552 = vand.u32 %v2551, 4294901760
    %2553 = vmatpush1.msra.mxu0 %v2552
    %2554 = vmatprep.subr.mxu0 0.0
    %v2555 = vand.u32 %v2441, 4294901760
    %v2556 = vsub.f32 %v2441, %v2555
    %v2557 = vand.u32 %v2556, 4294901760
    %v2558 = vsub.f32 %v2556, %v2557
    %v2559 = vand.u32 %v2558, 4294901760
    %2560 = vmatpush1.msra.mxu0 %v2559
    %2561 = vmatprep.subr.mxu0 0.0
    %v2562 = vand.u32 %v2442, 4294901760
    %v2563 = vsub.f32 %v2442, %v2562
    %v2564 = vand.u32 %v2563, 4294901760
    %v2565 = vsub.f32 %v2563, %v2564
    %v2566 = vand.u32 %v2565, 4294901760
    %2567 = vmatpush1.msra.mxu0 %v2566
    %2568 = vmatprep.subr.mxu0 0.0
    %v2569 = vand.u32 %v2443, 4294901760
    %v2570 = vsub.f32 %v2443, %v2569
    %v2571 = vand.u32 %v2570, 4294901760
    %v2572 = vsub.f32 %v2570, %v2571
    %v2573 = vand.u32 %v2572, 4294901760
    %2574 = vmatpush1.msra.mxu0 %v2573
    %2575 = vmatprep.subr.mxu0 0.0
    %v2576 = vand.u32 %v2444, 4294901760
    %v2577 = vsub.f32 %v2444, %v2576
    %v2578 = vand.u32 %v2577, 4294901760
    %v2579 = vsub.f32 %v2577, %v2578
    %v2580 = vand.u32 %v2579, 4294901760
    %2581 = vmatpush1.msra.mxu0 %v2580
    %2582 = vmatprep.subr.mxu0 0.0
    %v2583 = vand.u32 %v2445, 4294901760
    %v2584 = vsub.f32 %v2445, %v2583
    %v2585 = vand.u32 %v2584, 4294901760
    %v2586 = vsub.f32 %v2584, %v2585
    %v2587 = vand.u32 %v2586, 4294901760
    %2588 = vmatpush1.msra.mxu0 %v2587
    %2589 = vmatprep.subr.mxu0 0.0
    %v2590 = vand.u32 %v2446, 4294901760
    %v2591 = vsub.f32 %v2446, %v2590
    %v2592 = vand.u32 %v2591, 4294901760
    %v2593 = vsub.f32 %v2591, %v2592
    %v2594 = vand.u32 %v2593, 4294901760
    %2595 = vmatpush1.msra.mxu0 %v2594
    %2596 = vmatprep.subr.mxu0 0.0
    %v2597 = vand.u32 %v2447, 4294901760
    %v2598 = vsub.f32 %v2447, %v2597
    %v2599 = vand.u32 %v2598, 4294901760
    %v2600 = vsub.f32 %v2598, %v2599
    %v2601 = vand.u32 %v2600, 4294901760
    %2602 = vmatpush1.msra.mxu0 %v2601
    %2603 = vmatprep.subr.mxu0 0.0
    %v2604 = vand.u32 %v2448, 4294901760
    %v2605 = vsub.f32 %v2448, %v2604
    %v2606 = vand.u32 %v2605, 4294901760
    %v2607 = vsub.f32 %v2605, %v2606
    %v2608 = vand.u32 %v2607, 4294901760
    %2609 = vmatpush1.msra.mxu0 %v2608
    %2610 = vmatprep.subr.mxu0 0.0
    %v2611 = vand.u32 %v2449, 4294901760
    %v2612 = vsub.f32 %v2449, %v2611
    %v2613 = vand.u32 %v2612, 4294901760
    %v2614 = vsub.f32 %v2612, %v2613
    %v2615 = vand.u32 %v2614, 4294901760
    %2616 = vmatpush1.msra.mxu0 %v2615
    %2617 = vmatprep.subr.mxu0 0.0
    %v2618 = vand.u32 %v2450, 4294901760
    %v2619 = vsub.f32 %v2450, %v2618
    %v2620 = vand.u32 %v2619, 4294901760
    %v2621 = vsub.f32 %v2619, %v2620
    %v2622 = vand.u32 %v2621, 4294901760
    %2623 = vmatpush1.msra.mxu0 %v2622
    %2624 = vmatprep.subr.mxu0 0.0
    %v2625 = vand.u32 %v2451, 4294901760
    %v2626 = vsub.f32 %v2451, %v2625
    %v2627 = vand.u32 %v2626, 4294901760
    %v2628 = vsub.f32 %v2626, %v2627
    %v2629 = vand.u32 %v2628, 4294901760
    %2630 = vmatpush1.msra.mxu0 %v2629
    %2631 = vmatprep.subr.mxu0 0.0
    %v2632 = vand.u32 %v2452, 4294901760
    %v2633 = vsub.f32 %v2452, %v2632
    %v2634 = vand.u32 %v2633, 4294901760
    %v2635 = vsub.f32 %v2633, %v2634
    %v2636 = vand.u32 %v2635, 4294901760
    %2637 = vmatpush1.msra.mxu0 %v2636
    %2638 = vmatprep.subr.mxu0 0.0
    %v2639 = vand.u32 %v2453, 4294901760
    %v2640 = vsub.f32 %v2453, %v2639
    %v2641 = vand.u32 %v2640, 4294901760
    %v2642 = vsub.f32 %v2640, %v2641
    %v2643 = vand.u32 %v2642, 4294901760
    %2644 = vmatpush1.msra.mxu0 %v2643
    %2645 = vmatprep.subr.mxu0 0.0
    %v2646 = vand.u32 %v2454, 4294901760
    %v2647 = vsub.f32 %v2454, %v2646
    %v2648 = vand.u32 %v2647, 4294901760
    %v2649 = vsub.f32 %v2647, %v2648
    %v2650 = vand.u32 %v2649, 4294901760
    %2651 = vmatpush1.msra.mxu0 %v2650
    %2652 = vmatprep.subr.mxu0 0.0
    %v2653 = vand.u32 %v2455, 4294901760
    %v2654 = vsub.f32 %v2455, %v2653
    %v2655 = vand.u32 %v2654, 4294901760
    %v2656 = vsub.f32 %v2654, %v2655
    %v2657 = vand.u32 %v2656, 4294901760
    %2658 = vmatpush1.msra.mxu0 %v2657
    %2659 = vmatprep.subr.mxu0 0.0
    %2660 = vmatpush1.msra.mxu0 0.0
    %2661 = vmatprep.subr.mxu0 0.0
    %2662 = vmatpush1.msra.mxu0 0.0
    %2663 = vmatprep.subr.mxu0 0.0
    %2664 = vmatpush1.msra.mxu0 0.0
    %2665 = vmatprep.subr.mxu0 0.0
    %2666 = vmatpush1.msra.mxu0 0.0
    %2667 = vmatprep.subr.mxu0 0.0
    %2668 = vmatpush1.msra.mxu0 0.0
    %2669 = vmatprep.subr.mxu0 0.0
    %2670 = vmatpush1.msra.mxu0 0.0
    %2671 = vmatprep.subr.mxu0 0.0
    %2672 = vmatpush1.msra.mxu0 0.0
    %2673 = vmatprep.subr.mxu0 0.0
    %2674 = vmatpush1.msra.mxu0 0.0
    %2675 = vmatprep.subr.mxu0 0.0
    %2676 = vmatpush1.msra.mxu0 0.0
    %2677 = vmatprep.subr.mxu0 0.0
    %2678 = vmatpush1.msra.mxu0 0.0
    %2679 = vmatprep.subr.mxu0 0.0
    %2680 = vmatpush1.msra.mxu0 0.0
    %2681 = vmatprep.subr.mxu0 0.0
    %2682 = vmatpush1.msra.mxu0 0.0
    %2683 = vmatprep.subr.mxu0 0.0
    %2684 = vmatpush1.msra.mxu0 0.0
    %2685 = vmatprep.subr.mxu0 0.0
    %2686 = vmatpush1.msra.mxu0 0.0
    %2687 = vmatprep.subr.mxu0 0.0
    %2688 = vmatpush1.msra.mxu0 0.0
    %2689 = vmatprep.subr.mxu0 0.0
    %2690 = vmatpush1.msra.mxu0 0.0
    %2691 = vmatprep.mubr.f32.mxu0 0.0
    %v2692 = vand.u32 %v2439, 4294901760
    %2693 = vmatmul.mubr.f32.gmra.mrb[0].mxu0 %v2692
    %v2694 = vpop.f32.mrb[0].mxu0
    %v2695 = vadd.f32 %v2544, %v2694
    %v2696 = vpop.f32.mrb[0].mxu0
    %2697 = vdwg.mxu0
    %2698 = vmatprep.subr.mxu0 0.0
    %v2699 = vand.u32 %v2440, 4294901760
    %v2700 = vsub.f32 %v2440, %v2699
    %2701 = vmatpush1.msra.mxu0 %v2700
    %2702 = vmatprep.subr.mxu0 0.0
    %v2703 = vand.u32 %v2441, 4294901760
    %v2704 = vsub.f32 %v2441, %v2703
    %2705 = vmatpush1.msra.mxu0 %v2704
    %2706 = vmatprep.subr.mxu0 0.0
    %v2707 = vand.u32 %v2442, 4294901760
    %v2708 = vsub.f32 %v2442, %v2707
    %2709 = vmatpush1.msra.mxu0 %v2708
    %2710 = vmatprep.subr.mxu0 0.0
    %v2711 = vand.u32 %v2443, 4294901760
    %v2712 = vsub.f32 %v2443, %v2711
    %2713 = vmatpush1.msra.mxu0 %v2712
    %2714 = vmatprep.subr.mxu0 0.0
    %v2715 = vand.u32 %v2444, 4294901760
    %v2716 = vsub.f32 %v2444, %v2715
    %2717 = vmatpush1.msra.mxu0 %v2716
    %2718 = vmatprep.subr.mxu0 0.0
    %v2719 = vand.u32 %v2445, 4294901760
    %v2720 = vsub.f32 %v2445, %v2719
    %2721 = vmatpush1.msra.mxu0 %v2720
    %2722 = vmatprep.subr.mxu0 0.0
    %v2723 = vand.u32 %v2446, 4294901760
    %v2724 = vsub.f32 %v2446, %v2723
    %2725 = vmatpush1.msra.mxu0 %v2724
    %2726 = vmatprep.subr.mxu0 0.0
    %v2727 = vand.u32 %v2447, 4294901760
    %v2728 = vsub.f32 %v2447, %v2727
    %2729 = vmatpush1.msra.mxu0 %v2728
    %2730 = vmatprep.subr.mxu0 0.0
    %v2731 = vand.u32 %v2448, 4294901760
    %v2732 = vsub.f32 %v2448, %v2731
    %2733 = vmatpush1.msra.mxu0 %v2732
    %2734 = vmatprep.subr.mxu0 0.0
    %v2735 = vand.u32 %v2449, 4294901760
    %v2736 = vsub.f32 %v2449, %v2735
    %2737 = vmatpush1.msra.mxu0 %v2736
    %2738 = vmatprep.subr.mxu0 0.0
    %v2739 = vand.u32 %v2450, 4294901760
    %v2740 = vsub.f32 %v2450, %v2739
    %2741 = vmatpush1.msra.mxu0 %v2740
    %2742 = vmatprep.subr.mxu0 0.0
    %v2743 = vand.u32 %v2451, 4294901760
    %v2744 = vsub.f32 %v2451, %v2743
    %2745 = vmatpush1.msra.mxu0 %v2744
    %2746 = vmatprep.subr.mxu0 0.0
    %v2747 = vand.u32 %v2452, 4294901760
    %v2748 = vsub.f32 %v2452, %v2747
    %2749 = vmatpush1.msra.mxu0 %v2748
    %2750 = vmatprep.subr.mxu0 0.0
    %v2751 = vand.u32 %v2453, 4294901760
    %v2752 = vsub.f32 %v2453, %v2751
    %2753 = vmatpush1.msra.mxu0 %v2752
    %2754 = vmatprep.subr.mxu0 0.0
    %v2755 = vand.u32 %v2454, 4294901760
    %v2756 = vsub.f32 %v2454, %v2755
    %2757 = vmatpush1.msra.mxu0 %v2756
    %2758 = vmatprep.subr.mxu0 0.0
    %v2759 = vand.u32 %v2455, 4294901760
    %v2760 = vsub.f32 %v2455, %v2759
    %2761 = vmatpush1.msra.mxu0 %v2760
    %2762 = vmatprep.subr.mxu0 0.0
    %2763 = vmatpush1.msra.mxu0 0.0
    %2764 = vmatprep.subr.mxu0 0.0
    %2765 = vmatpush1.msra.mxu0 0.0
    %2766 = vmatprep.subr.mxu0 0.0
    %2767 = vmatpush1.msra.mxu0 0.0
    %2768 = vmatprep.subr.mxu0 0.0
    %2769 = vmatpush1.msra.mxu0 0.0
    %2770 = vmatprep.subr.mxu0 0.0
    %2771 = vmatpush1.msra.mxu0 0.0
    %2772 = vmatprep.subr.mxu0 0.0
    %2773 = vmatpush1.msra.mxu0 0.0
    %2774 = vmatprep.subr.mxu0 0.0
    %2775 = vmatpush1.msra.mxu0 0.0
    %2776 = vmatprep.subr.mxu0 0.0
    %2777 = vmatpush1.msra.mxu0 0.0
    %2778 = vmatprep.subr.mxu0 0.0
    %2779 = vmatpush1.msra.mxu0 0.0
    %2780 = vmatprep.subr.mxu0 0.0
    %2781 = vmatpush1.msra.mxu0 0.0
    %2782 = vmatprep.subr.mxu0 0.0
    %2783 = vmatpush1.msra.mxu0 0.0
    %2784 = vmatprep.subr.mxu0 0.0
    %2785 = vmatpush1.msra.mxu0 0.0
    %2786 = vmatprep.subr.mxu0 0.0
    %2787 = vmatpush1.msra.mxu0 0.0
    %2788 = vmatprep.subr.mxu0 0.0
    %2789 = vmatpush1.msra.mxu0 0.0
    %2790 = vmatprep.subr.mxu0 0.0
    %2791 = vmatpush1.msra.mxu0 0.0
    %2792 = vmatprep.subr.mxu0 0.0
    %2793 = vmatpush1.msra.mxu0 0.0
    %2794 = vmatprep.mubr.f32.mxu0 0.0
    %v2795 = vand.u32 %v2439, 4294901760
    %v2796 = vsub.f32 %v2439, %v2795
    %2797 = vmatmul.mubr.f32.gmra.mrb[0].mxu0 %v2796
    %v2798 = vpop.f32.mrb[0].mxu0
    %v2799 = vadd.f32 %v2695, %v2798
    %v2800 = vpop.f32.mrb[0].mxu0
    %2801 = vdwg.mxu0
    %2802 = vmatprep.subr.mxu0 0.0
    %v2803 = vand.u32 %v2440, 4294901760
    %2804 = vmatpush1.msra.mxu0 %v2803
    %2805 = vmatprep.subr.mxu0 0.0
    %v2806 = vand.u32 %v2441, 4294901760
    %2807 = vmatpush1.msra.mxu0 %v2806
    %2808 = vmatprep.subr.mxu0 0.0
    %v2809 = vand.u32 %v2442, 4294901760
    %2810 = vmatpush1.msra.mxu0 %v2809
    %2811 = vmatprep.subr.mxu0 0.0
    %v2812 = vand.u32 %v2443, 4294901760
    %2813 = vmatpush1.msra.mxu0 %v2812
    %2814 = vmatprep.subr.mxu0 0.0
    %v2815 = vand.u32 %v2444, 4294901760
    %2816 = vmatpush1.msra.mxu0 %v2815
    %2817 = vmatprep.subr.mxu0 0.0
    %v2818 = vand.u32 %v2445, 4294901760
    %2819 = vmatpush1.msra.mxu0 %v2818
    %2820 = vmatprep.subr.mxu0 0.0
    %v2821 = vand.u32 %v2446, 4294901760
    %2822 = vmatpush1.msra.mxu0 %v2821
    %2823 = vmatprep.subr.mxu0 0.0
    %v2824 = vand.u32 %v2447, 4294901760
    %2825 = vmatpush1.msra.mxu0 %v2824
    %2826 = vmatprep.subr.mxu0 0.0
    %v2827 = vand.u32 %v2448, 4294901760
    %2828 = vmatpush1.msra.mxu0 %v2827
    %2829 = vmatprep.subr.mxu0 0.0
    %v2830 = vand.u32 %v2449, 4294901760
    %2831 = vmatpush1.msra.mxu0 %v2830
    %2832 = vmatprep.subr.mxu0 0.0
    %v2833 = vand.u32 %v2450, 4294901760
    %2834 = vmatpush1.msra.mxu0 %v2833
    %2835 = vmatprep.subr.mxu0 0.0
    %v2836 = vand.u32 %v2451, 4294901760
    %2837 = vmatpush1.msra.mxu0 %v2836
    %2838 = vmatprep.subr.mxu0 0.0
    %v2839 = vand.u32 %v2452, 4294901760
    %2840 = vmatpush1.msra.mxu0 %v2839
    %2841 = vmatprep.subr.mxu0 0.0
    %v2842 = vand.u32 %v2453, 4294901760
    %2843 = vmatpush1.msra.mxu0 %v2842
    %2844 = vmatprep.subr.mxu0 0.0
    %v2845 = vand.u32 %v2454, 4294901760
    %2846 = vmatpush1.msra.mxu0 %v2845
    %2847 = vmatprep.subr.mxu0 0.0
    %v2848 = vand.u32 %v2455, 4294901760
    %2849 = vmatpush1.msra.mxu0 %v2848
    %2850 = vmatprep.subr.mxu0 0.0
    %2851 = vmatpush1.msra.mxu0 0.0
    %2852 = vmatprep.subr.mxu0 0.0
    %2853 = vmatpush1.msra.mxu0 0.0
    %2854 = vmatprep.subr.mxu0 0.0
    %2855 = vmatpush1.msra.mxu0 0.0
    %2856 = vmatprep.subr.mxu0 0.0
    %2857 = vmatpush1.msra.mxu0 0.0
    %2858 = vmatprep.subr.mxu0 0.0
    %2859 = vmatpush1.msra.mxu0 0.0
    %2860 = vmatprep.subr.mxu0 0.0
    %2861 = vmatpush1.msra.mxu0 0.0
    %2862 = vmatprep.subr.mxu0 0.0
    %2863 = vmatpush1.msra.mxu0 0.0
    %2864 = vmatprep.subr.mxu0 0.0
    %2865 = vmatpush1.msra.mxu0 0.0
    %2866 = vmatprep.subr.mxu0 0.0
    %2867 = vmatpush1.msra.mxu0 0.0
    %2868 = vmatprep.subr.mxu0 0.0
    %2869 = vmatpush1.msra.mxu0 0.0
    %2870 = vmatprep.subr.mxu0 0.0
    %2871 = vmatpush1.msra.mxu0 0.0
    %2872 = vmatprep.subr.mxu0 0.0
    %2873 = vmatpush1.msra.mxu0 0.0
    %2874 = vmatprep.subr.mxu0 0.0
    %2875 = vmatpush1.msra.mxu0 0.0
    %2876 = vmatprep.subr.mxu0 0.0
    %2877 = vmatpush1.msra.mxu0 0.0
    %2878 = vmatprep.subr.mxu0 0.0
    %2879 = vmatpush1.msra.mxu0 0.0
    %2880 = vmatprep.subr.mxu0 0.0
    %2881 = vmatpush1.msra.mxu0 0.0
    %2882 = vmatprep.mubr.f32.mxu0 0.0
    %v2883 = vand.u32 %v2439, 4294901760
    %v2884 = vsub.f32 %v2439, %v2883
    %v2885 = vand.u32 %v2884, 4294901760
    %2886 = vmatmul.mubr.f32.gmra.mrb[0].mxu0 %v2885
    %v2887 = vpop.f32.mrb[0].mxu0
    %v2888 = vadd.f32 %v2799, %v2887
    %v2889 = vpop.f32.mrb[0].mxu0
    %2890 = vdwg.mxu0
    %2891 = vmatprep.subr.mxu0 0.0
    %v2892 = vand.u32 %v2440, 4294901760
    %v2893 = vsub.f32 %v2440, %v2892
    %v2894 = vand.u32 %v2893, 4294901760
    %2895 = vmatpush1.msra.mxu0 %v2894
    %2896 = vmatprep.subr.mxu0 0.0
    %v2897 = vand.u32 %v2441, 4294901760
    %v2898 = vsub.f32 %v2441, %v2897
    %v2899 = vand.u32 %v2898, 4294901760
    %2900 = vmatpush1.msra.mxu0 %v2899
    %2901 = vmatprep.subr.mxu0 0.0
    %v2902 = vand.u32 %v2442, 4294901760
    %v2903 = vsub.f32 %v2442, %v2902
    %v2904 = vand.u32 %v2903, 4294901760
    %2905 = vmatpush1.msra.mxu0 %v2904
    %2906 = vmatprep.subr.mxu0 0.0
    %v2907 = vand.u32 %v2443, 4294901760
    %v2908 = vsub.f32 %v2443, %v2907
    %v2909 = vand.u32 %v2908, 4294901760
    %2910 = vmatpush1.msra.mxu0 %v2909
    %2911 = vmatprep.subr.mxu0 0.0
    %v2912 = vand.u32 %v2444, 4294901760
    %v2913 = vsub.f32 %v2444, %v2912
    %v2914 = vand.u32 %v2913, 4294901760
    %2915 = vmatpush1.msra.mxu0 %v2914
    %2916 = vmatprep.subr.mxu0 0.0
    %v2917 = vand.u32 %v2445, 4294901760
    %v2918 = vsub.f32 %v2445, %v2917
    %v2919 = vand.u32 %v2918, 4294901760
    %2920 = vmatpush1.msra.mxu0 %v2919
    %2921 = vmatprep.subr.mxu0 0.0
    %v2922 = vand.u32 %v2446, 4294901760
    %v2923 = vsub.f32 %v2446, %v2922
    %v2924 = vand.u32 %v2923, 4294901760
    %2925 = vmatpush1.msra.mxu0 %v2924
    %2926 = vmatprep.subr.mxu0 0.0
    %v2927 = vand.u32 %v2447, 4294901760
    %v2928 = vsub.f32 %v2447, %v2927
    %v2929 = vand.u32 %v2928, 4294901760
    %2930 = vmatpush1.msra.mxu0 %v2929
    %2931 = vmatprep.subr.mxu0 0.0
    %v2932 = vand.u32 %v2448, 4294901760
    %v2933 = vsub.f32 %v2448, %v2932
    %v2934 = vand.u32 %v2933, 4294901760
    %2935 = vmatpush1.msra.mxu0 %v2934
    %2936 = vmatprep.subr.mxu0 0.0
    %v2937 = vand.u32 %v2449, 4294901760
    %v2938 = vsub.f32 %v2449, %v2937
    %v2939 = vand.u32 %v2938, 4294901760
    %2940 = vmatpush1.msra.mxu0 %v2939
    %2941 = vmatprep.subr.mxu0 0.0
    %v2942 = vand.u32 %v2450, 4294901760
    %v2943 = vsub.f32 %v2450, %v2942
    %v2944 = vand.u32 %v2943, 4294901760
    %2945 = vmatpush1.msra.mxu0 %v2944
    %2946 = vmatprep.subr.mxu0 0.0
    %v2947 = vand.u32 %v2451, 4294901760
    %v2948 = vsub.f32 %v2451, %v2947
    %v2949 = vand.u32 %v2948, 4294901760
    %2950 = vmatpush1.msra.mxu0 %v2949
    %2951 = vmatprep.subr.mxu0 0.0
    %v2952 = vand.u32 %v2452, 4294901760
    %v2953 = vsub.f32 %v2452, %v2952
    %v2954 = vand.u32 %v2953, 4294901760
    %2955 = vmatpush1.msra.mxu0 %v2954
    %2956 = vmatprep.subr.mxu0 0.0
    %v2957 = vand.u32 %v2453, 4294901760
    %v2958 = vsub.f32 %v2453, %v2957
    %v2959 = vand.u32 %v2958, 4294901760
    %2960 = vmatpush1.msra.mxu0 %v2959
    %2961 = vmatprep.subr.mxu0 0.0
    %v2962 = vand.u32 %v2454, 4294901760
    %v2963 = vsub.f32 %v2454, %v2962
    %v2964 = vand.u32 %v2963, 4294901760
    %2965 = vmatpush1.msra.mxu0 %v2964
    %2966 = vmatprep.subr.mxu0 0.0
    %v2967 = vand.u32 %v2455, 4294901760
    %v2968 = vsub.f32 %v2455, %v2967
    %v2969 = vand.u32 %v2968, 4294901760
    %2970 = vmatpush1.msra.mxu0 %v2969
    %2971 = vmatprep.subr.mxu0 0.0
    %2972 = vmatpush1.msra.mxu0 0.0
    %2973 = vmatprep.subr.mxu0 0.0
    %2974 = vmatpush1.msra.mxu0 0.0
    %2975 = vmatprep.subr.mxu0 0.0
    %2976 = vmatpush1.msra.mxu0 0.0
    %2977 = vmatprep.subr.mxu0 0.0
    %2978 = vmatpush1.msra.mxu0 0.0
    %2979 = vmatprep.subr.mxu0 0.0
    %2980 = vmatpush1.msra.mxu0 0.0
    %2981 = vmatprep.subr.mxu0 0.0
    %2982 = vmatpush1.msra.mxu0 0.0
    %2983 = vmatprep.subr.mxu0 0.0
    %2984 = vmatpush1.msra.mxu0 0.0
    %2985 = vmatprep.subr.mxu0 0.0
    %2986 = vmatpush1.msra.mxu0 0.0
    %2987 = vmatprep.subr.mxu0 0.0
    %2988 = vmatpush1.msra.mxu0 0.0
    %2989 = vmatprep.subr.mxu0 0.0
    %2990 = vmatpush1.msra.mxu0 0.0
    %2991 = vmatprep.subr.mxu0 0.0
    %2992 = vmatpush1.msra.mxu0 0.0
    %2993 = vmatprep.subr.mxu0 0.0
    %2994 = vmatpush1.msra.mxu0 0.0
    %2995 = vmatprep.subr.mxu0 0.0
    %2996 = vmatpush1.msra.mxu0 0.0
    %2997 = vmatprep.subr.mxu0 0.0
    %2998 = vmatpush1.msra.mxu0 0.0
    %2999 = vmatprep.subr.mxu0 0.0
    %3000 = vmatpush1.msra.mxu0 0.0
    %3001 = vmatprep.subr.mxu0 0.0
    %3002 = vmatpush1.msra.mxu0 0.0
    %3003 = vmatprep.mubr.f32.mxu0 0.0
    %v3004 = vand.u32 %v2439, 4294901760
    %3005 = vmatmul.mubr.f32.gmra.mrb[0].mxu0 %v3004
    %v3006 = vpop.f32.mrb[0].mxu0
    %v3007 = vadd.f32 %v2888, %v3006
    %v3008 = vpop.f32.mrb[0].mxu0
    %3009 = vdwg.mxu0
    %3010 = vmatprep.subr.mxu0 0.0
    %v3011 = vand.u32 %v2440, 4294901760
    %3012 = vmatpush1.msra.mxu0 %v3011
    %3013 = vmatprep.subr.mxu0 0.0
    %v3014 = vand.u32 %v2441, 4294901760
    %3015 = vmatpush1.msra.mxu0 %v3014
    %3016 = vmatprep.subr.mxu0 0.0
    %v3017 = vand.u32 %v2442, 4294901760
    %3018 = vmatpush1.msra.mxu0 %v3017
    %3019 = vmatprep.subr.mxu0 0.0
    %v3020 = vand.u32 %v2443, 4294901760
    %3021 = vmatpush1.msra.mxu0 %v3020
    %3022 = vmatprep.subr.mxu0 0.0
    %v3023 = vand.u32 %v2444, 4294901760
    %3024 = vmatpush1.msra.mxu0 %v3023
    %3025 = vmatprep.subr.mxu0 0.0
    %v3026 = vand.u32 %v2445, 4294901760
    %3027 = vmatpush1.msra.mxu0 %v3026
    %3028 = vmatprep.subr.mxu0 0.0
    %v3029 = vand.u32 %v2446, 4294901760
    %3030 = vmatpush1.msra.mxu0 %v3029
    %3031 = vmatprep.subr.mxu0 0.0
    %v3032 = vand.u32 %v2447, 4294901760
    %3033 = vmatpush1.msra.mxu0 %v3032
    %3034 = vmatprep.subr.mxu0 0.0
    %v3035 = vand.u32 %v2448, 4294901760
    %3036 = vmatpush1.msra.mxu0 %v3035
    %3037 = vmatprep.subr.mxu0 0.0
    %v3038 = vand.u32 %v2449, 4294901760
    %3039 = vmatpush1.msra.mxu0 %v3038
    %3040 = vmatprep.subr.mxu0 0.0
    %v3041 = vand.u32 %v2450, 4294901760
    %3042 = vmatpush1.msra.mxu0 %v3041
    %3043 = vmatprep.subr.mxu0 0.0
    %v3044 = vand.u32 %v2451, 4294901760
    %3045 = vmatpush1.msra.mxu0 %v3044
    %3046 = vmatprep.subr.mxu0 0.0
    %v3047 = vand.u32 %v2452, 4294901760
    %3048 = vmatpush1.msra.mxu0 %v3047
    %3049 = vmatprep.subr.mxu0 0.0
    %v3050 = vand.u32 %v2453, 4294901760
    %3051 = vmatpush1.msra.mxu0 %v3050
    %3052 = vmatprep.subr.mxu0 0.0
    %v3053 = vand.u32 %v2454, 4294901760
    %3054 = vmatpush1.msra.mxu0 %v3053
    %3055 = vmatprep.subr.mxu0 0.0
    %v3056 = vand.u32 %v2455, 4294901760
    %3057 = vmatpush1.msra.mxu0 %v3056
    %3058 = vmatprep.subr.mxu0 0.0
    %3059 = vmatpush1.msra.mxu0 0.0
    %3060 = vmatprep.subr.mxu0 0.0
    %3061 = vmatpush1.msra.mxu0 0.0
    %3062 = vmatprep.subr.mxu0 0.0
    %3063 = vmatpush1.msra.mxu0 0.0
    %3064 = vmatprep.subr.mxu0 0.0
    %3065 = vmatpush1.msra.mxu0 0.0
    %3066 = vmatprep.subr.mxu0 0.0
    %3067 = vmatpush1.msra.mxu0 0.0
    %3068 = vmatprep.subr.mxu0 0.0
    %3069 = vmatpush1.msra.mxu0 0.0
    %3070 = vmatprep.subr.mxu0 0.0
    %3071 = vmatpush1.msra.mxu0 0.0
    %3072 = vmatprep.subr.mxu0 0.0
    %3073 = vmatpush1.msra.mxu0 0.0
    %3074 = vmatprep.subr.mxu0 0.0
    %3075 = vmatpush1.msra.mxu0 0.0
    %3076 = vmatprep.subr.mxu0 0.0
    %3077 = vmatpush1.msra.mxu0 0.0
    %3078 = vmatprep.subr.mxu0 0.0
    %3079 = vmatpush1.msra.mxu0 0.0
    %3080 = vmatprep.subr.mxu0 0.0
    %3081 = vmatpush1.msra.mxu0 0.0
    %3082 = vmatprep.subr.mxu0 0.0
    %3083 = vmatpush1.msra.mxu0 0.0
    %3084 = vmatprep.subr.mxu0 0.0
    %3085 = vmatpush1.msra.mxu0 0.0
    %3086 = vmatprep.subr.mxu0 0.0
    %3087 = vmatpush1.msra.mxu0 0.0
    %3088 = vmatprep.subr.mxu0 0.0
    %3089 = vmatpush1.msra.mxu0 0.0
    %3090 = vmatprep.mubr.f32.mxu0 0.0
    %v3091 = vand.u32 %v2439, 4294901760
    %3092 = vmatmul.mubr.f32.gmra.mrb[0].mxu0 %v3091
    %v3093 = vpop.f32.mrb[0].mxu0
    %v3094 = vadd.f32 %v3007, %v3093
    %v3095 = vpop.f32.mrb[0].mxu0
    %3096 = vdwg.mxu0
    %v3097 = vmul.f32 %v3094, %v3094
    %v3099 = vrot.slane %v3097, 7
    %v3101 = vsub.f32 %v3094, %v3099
    %v3102 = vadd.f32 %v3101, 1e-05
    %v3103 = vrsqrt.pop %v3102
    %v3105 = vrot.slane %v2415, 7
    %v3107 = vmul.f32 %v3103, %v3105
    %v3109 = vrot.slane %v3107, 1
    %v3111 = vmul.f32 %v3094, %v3109
    %v3112 = vsub.f32 %v2416, %v3111
    %v3113 = vlaneseq
    %v3114 = vshrl.u32 %v3113, 7
    %v3115 = vsub.s32 1, %v3114
    %v3116 = vrot.slane %v3107, %v3115
    %v3117 = vmul.f32 %v2401, %v3116
    %v3118 = vmul.f32 %v2404, %v3116
    %v3119 = vmul.f32 %v2409, %v3116
    %v3120 = vmul.f32 %v2412, %v3116
    %v3121 = vlaneseq
    %v3122 = vshrl.u32 %v3121, 7
    %v3123 = vsub.s32 0, %v3122
    %v3124 = vrot.slane %v3112, %v3123
    %v3125 = vadd.f32 %v3117, %v3124
    %v3126 = vadd.f32 %v3118, %v3124
    %v3127 = vadd.f32 %v3119, %v3124
    %v3128 = vadd.f32 %v3120, %v3124
    %v3129 = vadd.f32 %v3125, %v620
    %v3130 = vadd.f32 %v3126, %v623
    %v3131 = vadd.f32 %v3127, %v628
    %v3132 = vadd.f32 %v3128, %v631
    %s3133 = sld [smem:[#allocation4 + $0x1]]
    %vm3134 = vcmp.ge.f32.partialorder %v3129, 0.0
    %vm3135 = vcmp.ge.f32.partialorder %v3130, 0.0
    %vm3136 = vcmp.ge.f32.partialorder %v3131, 0.0
    %vm3137 = vcmp.ge.f32.partialorder %v3132, 0.0
    %v3138 = vstv %s3133
    %v3139 = vmul.f32 %v3138, %v3129
    %v3140 = vmul.f32 %v3138, %v3130
    %v3141 = vmul.f32 %v3138, %v3131
    %v3142 = vmul.f32 %v3138, %v3132
    %v3143 = vsel %vm3134, %v3129, %v3139
    %v3144 = vsel %vm3135, %v3130, %v3140
    %v3145 = vsel %vm3136, %v3131, %v3141
    %v3146 = vsel %vm3137, %v3132, %v3142
    %3147 = vst [vmem:[%s7] sm:$0xff] %v3143
    %3148 = vst [vmem:[%s7 + $0x8] sm:$0xff] %v3144
    %3149 = vst [vmem:[%s7 + $0x10] sm:$0xff] %v3145
    %3150 = vst [vmem:[%s7 + $0x18] sm:$0xff] %v3146
    // Predicated region
    $region34: #{res_conv_block.1} parent=1 // pred_check
      _
    $region35: #{res_conv_block.1} parent=1 // pred_check_branch
      %3152 = sbr.rel (0) target = $region37
    $region36: #{res_conv_block.1} parent=1 // pred_region
      _
    $region37: #{res_conv_block.1} parent=1 // pred_fallthru
      _
    // Predicated region
    $region38: #{res_conv_block.1} parent=1 // pred_check
      _
    $region39: #{res_conv_block.1} parent=1 // pred_check_branch
      %3154 = sbr.rel (0) target = $region41
    $region40: #{res_conv_block.1} parent=1 // pred_region
      _
    $region41: #{res_conv_block.1} parent=1 // pred_fallthru
      _
    %3155 = vsyncpa [#allocation5], 1

</llo_original>
